<compile_context>
chip_gen: v7x
topology: tpu7x:2x2x1
jax: 0.10.0
libtpu: 0.0.40
codegen_flags: <defaults>
</compile_context>

<pallas_src>
import functools

import jax
import jax.numpy as jnp
from jax import lax
from jax.experimental import pallas as pl
from jax.experimental.pallas import tpu as pltpu


def _round_up(x, m):
    return (x + m - 1) // m * m


# ----------------------------------------------------------------------------
# Fused CharLSTM forward kernel.
# Ref order:  x, h0, c0, [wihT_l, whhT_l, b_l]*L, fc_wT, fc_b   (inputs)
#             out, hT, cT                                       (outputs)
#             gx_scratch, y0_scratch, y1_scratch                (scratch)
# Gate order matches nn.LSTM: [i, f, g, o].
# ----------------------------------------------------------------------------
def char_lstm_kernel(*refs, num_layers, seq_len, batch_blk, hidden_p, din_p, out_p):
    T, Bb, Hp = seq_len, batch_blk, hidden_p
    rows = T * Bb
    n_in = 3 + 3 * num_layers + 2

    x_ref, h0_ref, c0_ref = refs[0:3]
    layer_refs = refs[3:3 + 3 * num_layers]
    fcw_ref = refs[3 + 3 * num_layers]
    fcb_ref = refs[3 + 3 * num_layers + 1]
    out_ref, hT_ref, cT_ref = refs[n_in:n_in + 3]
    gx_ref, y0_ref, y1_ref = refs[n_in + 3:n_in + 6]
    ybufs = (y0_ref, y1_ref)

    # Layer-0 input, flattened to (T*Bb, Dp0) rows for one big MXU matmul.
    layer_in = x_ref[...].reshape(rows, din_p).astype(jnp.bfloat16)

    for l in range(num_layers):
        wih = layer_refs[3 * l][...]        # (d_in_p, 4Hp) bf16, VMEM resident
        whh = layer_refs[3 * l + 1][...]    # (Hp, 4Hp)     bf16, loop invariant
        b = layer_refs[3 * l + 2][...]      # (1, 4Hp)      f32  (= b_ih + b_hh)

        # (1) Hoisted, non-recurrent input projection for ALL timesteps at once.
        gx2d = jnp.dot(layer_in, wih, preferred_element_type=jnp.float32) + b
        gx_ref[...] = gx2d.reshape(T, Bb, 4 * Hp)

        ybuf = ybufs[l % 2]                 # ping-pong inter-layer activation buffer

        def step(t, carry, whh=whh, ybuf=ybuf):
            h_prev, c_prev = carry          # f32 (Bb, Hp)
            gates = gx_ref[t] + jnp.dot(h_prev.astype(jnp.bfloat16), whh,
                                        preferred_element_type=jnp.float32)
            i_g = jax.nn.sigmoid(gates[:, 0 * Hp:1 * Hp])   # 128-lane aligned slices
            f_g = jax.nn.sigmoid(gates[:, 1 * Hp:2 * Hp])
            g_g = jnp.tanh(gates[:, 2 * Hp:3 * Hp])
            o_g = jax.nn.sigmoid(gates[:, 3 * Hp:4 * Hp])
            c_new = f_g * c_prev + i_g * g_g
            h_new = o_g * jnp.tanh(c_new)
            ybuf[t] = h_new
            return (h_new, c_new)

        carry0 = (h0_ref[l], c0_ref[l])
        if T <= 32:
            # Short, static trip count: unroll at trace time (LLO can overlap the
            # gx load / y store of step t with the gate math of step t-1).
            carry = carry0
            for t in range(T):
                carry = step(t, carry)
            h_last, c_last = carry
        else:
            h_last, c_last = lax.fori_loop(0, T, step, carry0)

        # (2) Final states written exactly once, off the serial critical path.
        hT_ref[l] = h_last
        cT_ref[l] = c_last

        # Next layer's input: the full y of this layer (never leaves VMEM).
        layer_in = ybuf[...].reshape(rows, Hp).astype(jnp.bfloat16)

    # (3) Linear head over all T*Bb rows at once (one MXU matmul).
    out2d = jnp.dot(layer_in, fcw_ref[...],
                    preferred_element_type=jnp.float32) + fcb_ref[...]
    out_ref[...] = out2d.reshape(T, Bb, out_p).astype(out_ref.dtype)


def _char_lstm_pallas(x_t, h0_p, c0_p, lstm_params, fc_wT, fc_b,
                      *, T, Bp, Bb, Hp, Dp0, Op, L):
    kernel = functools.partial(char_lstm_kernel, num_layers=L, seq_len=T,
                               batch_blk=Bb, hidden_p=Hp, din_p=Dp0, out_p=Op)

    in_specs = [
        pl.BlockSpec((T, Bb, Dp0), lambda b: (0, b, 0)),     # x (time-major, padded)
        pl.BlockSpec((L, Bb, Hp), lambda b: (0, b, 0)),      # h0
        pl.BlockSpec((L, Bb, Hp), lambda b: (0, b, 0)),      # c0
    ]
    flat_weights = []
    for lp in lstm_params:
        d_in_p = lp["wihT"].shape[0]
        in_specs += [
            pl.BlockSpec((d_in_p, 4 * Hp), lambda b: (0, 0)),  # W_ih^T (resident)
            pl.BlockSpec((Hp, 4 * Hp), lambda b: (0, 0)),      # W_hh^T (resident)
            pl.BlockSpec((1, 4 * Hp), lambda b: (0, 0)),       # fused bias
        ]
        flat_weights += [lp["wihT"], lp["whhT"], lp["b"]]
    in_specs += [
        pl.BlockSpec((Hp, Op), lambda b: (0, 0)),            # fc weight^T
        pl.BlockSpec((1, Op), lambda b: (0, 0)),              # fc bias
    ]
    out_specs = [
        pl.BlockSpec((T, Bb, Op), lambda b: (0, b, 0)),       # head output
        pl.BlockSpec((L, Bb, Hp), lambda b: (0, b, 0)),       # h_T
        pl.BlockSpec((L, Bb, Hp), lambda b: (0, b, 0)),       # c_T
    ]
    out_shape = (
        jax.ShapeDtypeStruct((T, Bp, Op), jnp.float32),
        jax.ShapeDtypeStruct((L, Bp, Hp), jnp.float32),
        jax.ShapeDtypeStruct((L, Bp, Hp), jnp.float32),
    )
    return pl.pallas_call(
        kernel,
        out_shape=out_shape,
        grid_spec=pltpu.PrefetchScalarGridSpec(
            num_scalar_prefetch=0,
            grid=(Bp // Bb,),
            in_specs=in_specs,
            out_specs=out_specs,
            scratch_shapes=[
                pltpu.VMEM((T, Bb, 4 * Hp), jnp.float32),     # Gx (all timesteps)
                pltpu.VMEM((T, Bb, Hp), jnp.float32),         # y ping
                pltpu.VMEM((T, Bb, Hp), jnp.float32),         # y pong
            ]),
        compiler_params=pltpu.CompilerParams(
            dimension_semantics=("parallel",),                # batch-parallel (v7x)
            vmem_limit_bytes=64 * 1024 * 1024),
    )(x_t, h0_p, c0_p, *flat_weights, fc_wT, fc_b)


# ----------------------------------------------------------------------------
# Full forward pass (matches CharLSTM.forward, eval mode).
# ----------------------------------------------------------------------------
def char_lstm_forward(x, hidden, params):
    """x: (B, T, input_dim); hidden = (h0, c0) each (num_layers, B, hidden_dim)."""
    h0_all, c0_all = hidden
    B, T, D_in = x.shape
    H = params["hidden_dim"]
    L = len(params["lstm"])
    Hp, Dp0, Op = params["Hp"], params["Dp0"], params["Op"]

    Bp = _round_up(B, 8)
    Bb = 128 if (Bp > 128 and Bp % 128 == 0) else Bp          # megacore batch blocks

    # Time-major + zero-pad batch (sublanes) and feature (lanes) dims.
    x_t = jnp.transpose(x, (1, 0, 2))                          # (T, B, D_in)
    x_t = jnp.pad(x_t, ((0, 0), (0, Bp - B), (0, Dp0 - D_in)))
    h0_p = jnp.pad(h0_all, ((0, 0), (0, Bp - B), (0, Hp - H)))
    c0_p = jnp.pad(c0_all, ((0, 0), (0, Bp - B), (0, Hp - H)))

    out_p, hT_p, cT_p = _char_lstm_pallas(
        x_t, h0_p, c0_p, params["lstm"], params["fc_wT"], params["fc_b"],
        T=T, Bp=Bp, Bb=Bb, Hp=Hp, Dp0=Dp0, Op=Op, L=L)

    out = jnp.transpose(out_p[:, :B, :D_in], (1, 0, 2))        # (B, T, input_dim)
    hN = hT_p[:, :B, :H]                                       # (L, B, H)
    cN = cT_p[:, :B, :H]
    # TODO(synk): inter-layer dropout (p=drop_prob) is training-mode only in
    # nn.LSTM; eval-mode forward semantics (no dropout) are reproduced here.
    return out, (hN, cN)


# ----------------------------------------------------------------------------
# Deterministic PyTorch-style init (U(-1/sqrt(H), 1/sqrt(H))), packed into the
# padded / transposed / bf16 kernel layout.  Per-gate zero padding keeps the
# math exact (padded h/c stay 0 through the recurrence).
# ----------------------------------------------------------------------------
def init_params(key, input_dim, hidden_dim, num_layers):
    H = hidden_dim
    Hp = _round_up(H, 128)
    Dp0 = _round_up(input_dim, 128)
    Op = _round_up(input_dim, 128)
    k = 1.0 / jnp.sqrt(jnp.float32(H))

    def pack_gate_weight(w, d_in, d_in_p):
        # (4H, d_in) -> per-gate pad -> (4*Hp, d_in_p) -> transpose -> (d_in_p, 4*Hp)
        w4 = w.reshape(4, H, d_in)
        w4 = jnp.pad(w4, ((0, 0), (0, Hp - H), (0, d_in_p - d_in)))
        return jnp.transpose(w4.reshape(4 * Hp, d_in_p)).astype(jnp.bfloat16)

    params = {"lstm": [], "hidden_dim": H, "input_dim": input_dim,
              "Hp": Hp, "Dp0": Dp0, "Op": Op}
    for l in range(num_layers):
        d_in = input_dim if l == 0 else H
        d_in_p = Dp0 if l == 0 else Hp
        key, k1, k2, k3, k4 = jax.random.split(key, 5)
        w_ih = jax.random.uniform(k1, (4 * H, d_in), jnp.float32, -k, k)
        w_hh = jax.random.uniform(k2, (4 * H, H), jnp.float32, -k, k)
        b_ih = jax.random.uniform(k3, (4 * H,), jnp.float32, -k, k)
        b_hh = jax.random.uniform(k4, (4 * H,), jnp.float32, -k, k)
        b = jnp.pad((b_ih + b_hh).reshape(4, H), ((0, 0), (0, Hp - H)))
        params["lstm"].append({
            "wihT": pack_gate_weight(w_ih, d_in, d_in_p),     # (d_in_p, 4Hp) bf16
            "whhT": pack_gate_weight(w_hh, H, Hp),            # (Hp, 4Hp)     bf16
            "b": b.reshape(1, 4 * Hp).astype(jnp.float32),    # fused b_ih + b_hh
        })
    key, k5, k6 = jax.random.split(key, 3)
    fc_w = jax.random.uniform(k5, (input_dim, H), jnp.float32, -k, k)
    fc_b = jax.random.uniform(k6, (input_dim,), jnp.float32, -k, k)
    fc_w_p = jnp.pad(fc_w, ((0, Op - input_dim), (0, Hp - H)))        # (Op, Hp)
    params["fc_wT"] = jnp.transpose(fc_w_p).astype(jnp.bfloat16)      # (Hp, Op)
    params["fc_b"] = jnp.pad(fc_b, (0, Op - input_dim)).reshape(1, Op).astype(jnp.float32)
    return params


if __name__ == "__main__":
    input_dim, hidden_dim, num_layers, drop_prob = 8, 32, 2, 0.1
    B, T = 2, 8

    key = jax.random.PRNGKey(0)
    key, kx = jax.random.split(key)
    x = jax.random.normal(kx, (B, T, input_dim), jnp.float32)

    # init_hidden(batch_size)
    h0 = jnp.zeros((num_layers, B, hidden_dim), jnp.float32)
    c0 = jnp.zeros((num_layers, B, hidden_dim), jnp.float32)

    params = init_params(key, input_dim, hidden_dim, num_layers)

    out, (hN, cN) = char_lstm_forward(x, (h0, c0), params)
    jax.block_until_ready((out, hN, cN))

    assert out.shape == (B, T, input_dim)
    assert hN.shape == (num_layers, B, hidden_dim)
    assert cN.shape == (num_layers, B, hidden_dim)
    print("KERNEL_OK")
</pallas_src>

<mosaic_0001>
module attributes {stable_mosaic.version = 11 : i64} {
  func.func @char_lstm_kernel(%arg0: i32, %arg1: memref<8x8x128xf32, #tpu.memory_space<vmem>>, %arg2: memref<2x8x128xf32, #tpu.memory_space<vmem>>, %arg3: memref<2x8x128xf32, #tpu.memory_space<vmem>>, %arg4: memref<128x512xbf16, #tpu.memory_space<vmem>>, %arg5: memref<128x512xbf16, #tpu.memory_space<vmem>>, %arg6: memref<1x512xf32, #tpu.memory_space<vmem>>, %arg7: memref<128x512xbf16, #tpu.memory_space<vmem>>, %arg8: memref<128x512xbf16, #tpu.memory_space<vmem>>, %arg9: memref<1x512xf32, #tpu.memory_space<vmem>>, %arg10: memref<128x128xbf16, #tpu.memory_space<vmem>>, %arg11: memref<1x128xf32, #tpu.memory_space<vmem>>, %arg12: memref<8x8x128xf32, #tpu.memory_space<vmem>>, %arg13: memref<2x8x128xf32, #tpu.memory_space<vmem>>, %arg14: memref<2x8x128xf32, #tpu.memory_space<vmem>>, %arg15: memref<8x8x512xf32, #tpu.memory_space<vmem>>, %arg16: memref<8x8x128xf32, #tpu.memory_space<vmem>>, %arg17: memref<8x8x128xf32, #tpu.memory_space<vmem>>) attributes {dimension_semantics = [#tpu.dimension_semantics<parallel>], iteration_bounds = array<i64: 1>, scalar_prefetch = 0 : i64, scratch_operands = 3 : i64, tpu.core_type = #tpu.core_type<tc>, window_params = [{transform_indices = @transform_0, window_bounds = array<i64: 8, 8, 128>}, {transform_indices = @transform_1, window_bounds = array<i64: 2, 8, 128>}, {transform_indices = @transform_2, window_bounds = array<i64: 2, 8, 128>}, {pipeline_mode = #tpu.pipeline_mode<synchronous>, transform_indices = @transform_3, window_bounds = array<i64: 128, 512>}, {pipeline_mode = #tpu.pipeline_mode<synchronous>, transform_indices = @transform_4, window_bounds = array<i64: 128, 512>}, {pipeline_mode = #tpu.pipeline_mode<synchronous>, transform_indices = @transform_5, window_bounds = array<i64: 1, 512>}, {pipeline_mode = #tpu.pipeline_mode<synchronous>, transform_indices = @transform_6, window_bounds = array<i64: 128, 512>}, {pipeline_mode = #tpu.pipeline_mode<synchronous>, transform_indices = @transform_7, window_bounds = array<i64: 128, 512>}, {pipeline_mode = #tpu.pipeline_mode<synchronous>, transform_indices = @transform_8, window_bounds = array<i64: 1, 512>}, {pipeline_mode = #tpu.pipeline_mode<synchronous>, transform_indices = @transform_9, window_bounds = array<i64: 128, 128>}, {pipeline_mode = #tpu.pipeline_mode<synchronous>, transform_indices = @transform_10, window_bounds = array<i64: 1, 128>}, {transform_indices = @transform_11, window_bounds = array<i64: 8, 8, 128>}, {transform_indices = @transform_12, window_bounds = array<i64: 2, 8, 128>}, {transform_indices = @transform_13, window_bounds = array<i64: 2, 8, 128>}]} {
    %c0 = arith.constant 0 : index
    %c0_0 = arith.constant 0 : index
    %c0_1 = arith.constant 0 : index
    %0 = vector.load %arg1[%c0, %c0_0, %c0_1] : memref<8x8x128xf32, #tpu.memory_space<vmem>>, vector<8x8x128xf32>
    %1 = vector.shape_cast %0 : vector<8x8x128xf32> to vector<64x128xf32>
    %2 = arith.truncf %1 : vector<64x128xf32> to vector<64x128xbf16>
    %c0_2 = arith.constant 0 : index
    %c0_3 = arith.constant 0 : index
    %3 = vector.load %arg4[%c0_2, %c0_3] : memref<128x512xbf16, #tpu.memory_space<vmem>>, vector<128x512xbf16>
    %c0_4 = arith.constant 0 : index
    %c0_5 = arith.constant 0 : index
    %4 = vector.load %arg5[%c0_4, %c0_5] : memref<128x512xbf16, #tpu.memory_space<vmem>>, vector<128x512xbf16>
    %c0_6 = arith.constant 0 : index
    %c0_7 = arith.constant 0 : index
    %5 = vector.load %arg6[%c0_6, %c0_7] : memref<1x512xf32, #tpu.memory_space<vmem>>, vector<1x512xf32>
    %cst = arith.constant dense<0.000000e+00> : vector<64x512xf32>
    %6 = tpu.matmul %2, %3, %cst {dimension_numbers = #tpu.dot_dimension_numbers<[1], [0], [0], [1], [0, 0, 1, 1], [], []>} : vector<64x128xbf16>, vector<128x512xbf16>, vector<64x512xf32> -> vector<64x512xf32>
    %7 = vector.broadcast %5 : vector<1x512xf32> to vector<64x512xf32>
    %8 = arith.addf %6, %7 : vector<64x512xf32>
    %9 = vector.shape_cast %8 : vector<64x512xf32> to vector<8x8x512xf32>
    %c0_8 = arith.constant 0 : index
    %c0_9 = arith.constant 0 : index
    %c0_10 = arith.constant 0 : index
    %10 = vector.load %arg15[%c0_8, %c0_9, %c0_10] : memref<8x8x512xf32, #tpu.memory_space<vmem>>, vector<8x8x512xf32>
    tpu.vector_store %arg15[%c0_8, %c0_9, %c0_10], %9 {strides = array<i32>} : memref<8x8x512xf32, #tpu.memory_space<vmem>>, vector<8x8x512xf32>,
    %c0_11 = arith.constant 0 : index
    %c0_12 = arith.constant 0 : index
    %c0_13 = arith.constant 0 : index
    %11 = vector.load %arg2[%c0_11, %c0_12, %c0_13] : memref<2x8x128xf32, #tpu.memory_space<vmem>>, vector<1x8x128xf32>
    %12 = vector.shape_cast %11 : vector<1x8x128xf32> to vector<8x128xf32>
    %c0_14 = arith.constant 0 : index
    %c0_15 = arith.constant 0 : index
    %c0_16 = arith.constant 0 : index
    %13 = vector.load %arg3[%c0_14, %c0_15, %c0_16] : memref<2x8x128xf32, #tpu.memory_space<vmem>>, vector<1x8x128xf32>
    %14 = vector.shape_cast %13 : vector<1x8x128xf32> to vector<8x128xf32>
    %c0_17 = arith.constant 0 : index
    %c0_18 = arith.constant 0 : index
    %c0_19 = arith.constant 0 : index
    %15 = vector.load %arg15[%c0_17, %c0_18, %c0_19] : memref<8x8x512xf32, #tpu.memory_space<vmem>>, vector<1x8x512xf32>
    %16 = vector.shape_cast %15 : vector<1x8x512xf32> to vector<8x512xf32>
    %17 = arith.truncf %12 : vector<8x128xf32> to vector<8x128xbf16>
    %cst_20 = arith.constant dense<0.000000e+00> : vector<8x512xf32>
    %18 = tpu.matmul %17, %4, %cst_20 {dimension_numbers = #tpu.dot_dimension_numbers<[1], [0], [0], [1], [0, 0, 1, 1], [], []>} : vector<8x128xbf16>, vector<128x512xbf16>, vector<8x512xf32> -> vector<8x512xf32>
    %19 = arith.addf %16, %18 : vector<8x512xf32>
    %20 = vector.extract_strided_slice %19 {offsets = [0, 0], sizes = [8, 128], strides = [1, 1]} : vector<8x512xf32> to vector<8x128xf32>
    %21 = arith.negf %20 : vector<8x128xf32>
    %22 = math.exp %21 : vector<8x128xf32>
    %cst_21 = arith.constant 1.000000e+00 : f32
    %23 = vector.broadcast %cst_21 : f32 to vector<8x128xf32>
    %24 = arith.addf %23, %22 : vector<8x128xf32>
    %25 = arith.divf %23, %24 : vector<8x128xf32>
    %26 = vector.extract_strided_slice %19 {offsets = [0, 128], sizes = [8, 128], strides = [1, 1]} : vector<8x512xf32> to vector<8x128xf32>
    %27 = arith.negf %26 : vector<8x128xf32>
    %28 = math.exp %27 : vector<8x128xf32>
    %cst_22 = arith.constant 1.000000e+00 : f32
    %29 = vector.broadcast %cst_22 : f32 to vector<8x128xf32>
    %30 = arith.addf %29, %28 : vector<8x128xf32>
    %31 = arith.divf %29, %30 : vector<8x128xf32>
    %32 = vector.extract_strided_slice %19 {offsets = [0, 256], sizes = [8, 128], strides = [1, 1]} : vector<8x512xf32> to vector<8x128xf32>
    %33 = math.tanh %32 : vector<8x128xf32>
    %34 = vector.extract_strided_slice %19 {offsets = [0, 384], sizes = [8, 128], strides = [1, 1]} : vector<8x512xf32> to vector<8x128xf32>
    %35 = arith.negf %34 : vector<8x128xf32>
    %36 = math.exp %35 : vector<8x128xf32>
    %cst_23 = arith.constant 1.000000e+00 : f32
    %37 = vector.broadcast %cst_23 : f32 to vector<8x128xf32>
    %38 = arith.addf %37, %36 : vector<8x128xf32>
    %39 = arith.divf %37, %38 : vector<8x128xf32>
    %40 = arith.mulf %31, %14 : vector<8x128xf32>
    %41 = arith.mulf %25, %33 : vector<8x128xf32>
    %42 = arith.addf %40, %41 : vector<8x128xf32>
    %43 = math.tanh %42 : vector<8x128xf32>
    %44 = arith.mulf %39, %43 : vector<8x128xf32>
    %c0_24 = arith.constant 0 : index
    %c0_25 = arith.constant 0 : index
    %c0_26 = arith.constant 0 : index
    %45 = vector.load %arg16[%c0_24, %c0_25, %c0_26] : memref<8x8x128xf32, #tpu.memory_space<vmem>>, vector<1x8x128xf32>
    %46 = vector.shape_cast %45 : vector<1x8x128xf32> to vector<8x128xf32>
    %47 = vector.shape_cast %44 : vector<8x128xf32> to vector<1x8x128xf32>
    tpu.vector_store %arg16[%c0_24, %c0_25, %c0_26], %47 {strides = array<i32>} : memref<8x8x128xf32, #tpu.memory_space<vmem>>, vector<1x8x128xf32>,
    %c1 = arith.constant 1 : index
    %c0_27 = arith.constant 0 : index
    %c0_28 = arith.constant 0 : index
    %48 = vector.load %arg15[%c1, %c0_27, %c0_28] : memref<8x8x512xf32, #tpu.memory_space<vmem>>, vector<1x8x512xf32>
    %49 = vector.shape_cast %48 : vector<1x8x512xf32> to vector<8x512xf32>
    %50 = arith.truncf %44 : vector<8x128xf32> to vector<8x128xbf16>
    %cst_29 = arith.constant dense<0.000000e+00> : vector<8x512xf32>
    %51 = tpu.matmul %50, %4, %cst_29 {dimension_numbers = #tpu.dot_dimension_numbers<[1], [0], [0], [1], [0, 0, 1, 1], [], []>} : vector<8x128xbf16>, vector<128x512xbf16>, vector<8x512xf32> -> vector<8x512xf32>
    %52 = arith.addf %49, %51 : vector<8x512xf32>
    %53 = vector.extract_strided_slice %52 {offsets = [0, 0], sizes = [8, 128], strides = [1, 1]} : vector<8x512xf32> to vector<8x128xf32>
    %54 = arith.negf %53 : vector<8x128xf32>
    %55 = math.exp %54 : vector<8x128xf32>
    %cst_30 = arith.constant 1.000000e+00 : f32
    %56 = vector.broadcast %cst_30 : f32 to vector<8x128xf32>
    %57 = arith.addf %56, %55 : vector<8x128xf32>
    %58 = arith.divf %56, %57 : vector<8x128xf32>
    %59 = vector.extract_strided_slice %52 {offsets = [0, 128], sizes = [8, 128], strides = [1, 1]} : vector<8x512xf32> to vector<8x128xf32>
    %60 = arith.negf %59 : vector<8x128xf32>
    %61 = math.exp %60 : vector<8x128xf32>
    %cst_31 = arith.constant 1.000000e+00 : f32
    %62 = vector.broadcast %cst_31 : f32 to vector<8x128xf32>
    %63 = arith.addf %62, %61 : vector<8x128xf32>
    %64 = arith.divf %62, %63 : vector<8x128xf32>
    %65 = vector.extract_strided_slice %52 {offsets = [0, 256], sizes = [8, 128], strides = [1, 1]} : vector<8x512xf32> to vector<8x128xf32>
    %66 = math.tanh %65 : vector<8x128xf32>
    %67 = vector.extract_strided_slice %52 {offsets = [0, 384], sizes = [8, 128], strides = [1, 1]} : vector<8x512xf32> to vector<8x128xf32>
    %68 = arith.negf %67 : vector<8x128xf32>
    %69 = math.exp %68 : vector<8x128xf32>
    %cst_32 = arith.constant 1.000000e+00 : f32
    %70 = vector.broadcast %cst_32 : f32 to vector<8x128xf32>
    %71 = arith.addf %70, %69 : vector<8x128xf32>
    %72 = arith.divf %70, %71 : vector<8x128xf32>
    %73 = arith.mulf %64, %42 : vector<8x128xf32>
    %74 = arith.mulf %58, %66 : vector<8x128xf32>
    %75 = arith.addf %73, %74 : vector<8x128xf32>
    %76 = math.tanh %75 : vector<8x128xf32>
    %77 = arith.mulf %72, %76 : vector<8x128xf32>
    %c1_33 = arith.constant 1 : index
    %c0_34 = arith.constant 0 : index
    %c0_35 = arith.constant 0 : index
    %78 = vector.load %arg16[%c1_33, %c0_34, %c0_35] : memref<8x8x128xf32, #tpu.memory_space<vmem>>, vector<1x8x128xf32>
    %79 = vector.shape_cast %78 : vector<1x8x128xf32> to vector<8x128xf32>
    %80 = vector.shape_cast %77 : vector<8x128xf32> to vector<1x8x128xf32>
    tpu.vector_store %arg16[%c1_33, %c0_34, %c0_35], %80 {strides = array<i32>} : memref<8x8x128xf32, #tpu.memory_space<vmem>>, vector<1x8x128xf32>,
    %c2 = arith.constant 2 : index
    %c0_36 = arith.constant 0 : index
    %c0_37 = arith.constant 0 : index
    %81 = vector.load %arg15[%c2, %c0_36, %c0_37] : memref<8x8x512xf32, #tpu.memory_space<vmem>>, vector<1x8x512xf32>
    %82 = vector.shape_cast %81 : vector<1x8x512xf32> to vector<8x512xf32>
    %83 = arith.truncf %77 : vector<8x128xf32> to vector<8x128xbf16>
    %cst_38 = arith.constant dense<0.000000e+00> : vector<8x512xf32>
    %84 = tpu.matmul %83, %4, %cst_38 {dimension_numbers = #tpu.dot_dimension_numbers<[1], [0], [0], [1], [0, 0, 1, 1], [], []>} : vector<8x128xbf16>, vector<128x512xbf16>, vector<8x512xf32> -> vector<8x512xf32>
    %85 = arith.addf %82, %84 : vector<8x512xf32>
    %86 = vector.extract_strided_slice %85 {offsets = [0, 0], sizes = [8, 128], strides = [1, 1]} : vector<8x512xf32> to vector<8x128xf32>
    %87 = arith.negf %86 : vector<8x128xf32>
    %88 = math.exp %87 : vector<8x128xf32>
    %cst_39 = arith.constant 1.000000e+00 : f32
    %89 = vector.broadcast %cst_39 : f32 to vector<8x128xf32>
    %90 = arith.addf %89, %88 : vector<8x128xf32>
    %91 = arith.divf %89, %90 : vector<8x128xf32>
    %92 = vector.extract_strided_slice %85 {offsets = [0, 128], sizes = [8, 128], strides = [1, 1]} : vector<8x512xf32> to vector<8x128xf32>
    %93 = arith.negf %92 : vector<8x128xf32>
    %94 = math.exp %93 : vector<8x128xf32>
    %cst_40 = arith.constant 1.000000e+00 : f32
    %95 = vector.broadcast %cst_40 : f32 to vector<8x128xf32>
    %96 = arith.addf %95, %94 : vector<8x128xf32>
    %97 = arith.divf %95, %96 : vector<8x128xf32>
    %98 = vector.extract_strided_slice %85 {offsets = [0, 256], sizes = [8, 128], strides = [1, 1]} : vector<8x512xf32> to vector<8x128xf32>
    %99 = math.tanh %98 : vector<8x128xf32>
    %100 = vector.extract_strided_slice %85 {offsets = [0, 384], sizes = [8, 128], strides = [1, 1]} : vector<8x512xf32> to vector<8x128xf32>
    %101 = arith.negf %100 : vector<8x128xf32>
    %102 = math.exp %101 : vector<8x128xf32>
    %cst_41 = arith.constant 1.000000e+00 : f32
    %103 = vector.broadcast %cst_41 : f32 to vector<8x128xf32>
    %104 = arith.addf %103, %102 : vector<8x128xf32>
    %105 = arith.divf %103, %104 : vector<8x128xf32>
    %106 = arith.mulf %97, %75 : vector<8x128xf32>
    %107 = arith.mulf %91, %99 : vector<8x128xf32>
    %108 = arith.addf %106, %107 : vector<8x128xf32>
    %109 = math.tanh %108 : vector<8x128xf32>
    %110 = arith.mulf %105, %109 : vector<8x128xf32>
    %c2_42 = arith.constant 2 : index
    %c0_43 = arith.constant 0 : index
    %c0_44 = arith.constant 0 : index
    %111 = vector.load %arg16[%c2_42, %c0_43, %c0_44] : memref<8x8x128xf32, #tpu.memory_space<vmem>>, vector<1x8x128xf32>
    %112 = vector.shape_cast %111 : vector<1x8x128xf32> to vector<8x128xf32>
    %113 = vector.shape_cast %110 : vector<8x128xf32> to vector<1x8x128xf32>
    tpu.vector_store %arg16[%c2_42, %c0_43, %c0_44], %113 {strides = array<i32>} : memref<8x8x128xf32, #tpu.memory_space<vmem>>, vector<1x8x128xf32>,
    %c3 = arith.constant 3 : index
    %c0_45 = arith.constant 0 : index
    %c0_46 = arith.constant 0 : index
    %114 = vector.load %arg15[%c3, %c0_45, %c0_46] : memref<8x8x512xf32, #tpu.memory_space<vmem>>, vector<1x8x512xf32>
    %115 = vector.shape_cast %114 : vector<1x8x512xf32> to vector<8x512xf32>
    %116 = arith.truncf %110 : vector<8x128xf32> to vector<8x128xbf16>
    %cst_47 = arith.constant dense<0.000000e+00> : vector<8x512xf32>
    %117 = tpu.matmul %116, %4, %cst_47 {dimension_numbers = #tpu.dot_dimension_numbers<[1], [0], [0], [1], [0, 0, 1, 1], [], []>} : vector<8x128xbf16>, vector<128x512xbf16>, vector<8x512xf32> -> vector<8x512xf32>
    %118 = arith.addf %115, %117 : vector<8x512xf32>
    %119 = vector.extract_strided_slice %118 {offsets = [0, 0], sizes = [8, 128], strides = [1, 1]} : vector<8x512xf32> to vector<8x128xf32>
    %120 = arith.negf %119 : vector<8x128xf32>
    %121 = math.exp %120 : vector<8x128xf32>
    %cst_48 = arith.constant 1.000000e+00 : f32
    %122 = vector.broadcast %cst_48 : f32 to vector<8x128xf32>
    %123 = arith.addf %122, %121 : vector<8x128xf32>
    %124 = arith.divf %122, %123 : vector<8x128xf32>
    %125 = vector.extract_strided_slice %118 {offsets = [0, 128], sizes = [8, 128], strides = [1, 1]} : vector<8x512xf32> to vector<8x128xf32>
    %126 = arith.negf %125 : vector<8x128xf32>
    %127 = math.exp %126 : vector<8x128xf32>
    %cst_49 = arith.constant 1.000000e+00 : f32
    %128 = vector.broadcast %cst_49 : f32 to vector<8x128xf32>
    %129 = arith.addf %128, %127 : vector<8x128xf32>
    %130 = arith.divf %128, %129 : vector<8x128xf32>
    %131 = vector.extract_strided_slice %118 {offsets = [0, 256], sizes = [8, 128], strides = [1, 1]} : vector<8x512xf32> to vector<8x128xf32>
    %132 = math.tanh %131 : vector<8x128xf32>
    %133 = vector.extract_strided_slice %118 {offsets = [0, 384], sizes = [8, 128], strides = [1, 1]} : vector<8x512xf32> to vector<8x128xf32>
    %134 = arith.negf %133 : vector<8x128xf32>
    %135 = math.exp %134 : vector<8x128xf32>
    %cst_50 = arith.constant 1.000000e+00 : f32
    %136 = vector.broadcast %cst_50 : f32 to vector<8x128xf32>
    %137 = arith.addf %136, %135 : vector<8x128xf32>
    %138 = arith.divf %136, %137 : vector<8x128xf32>
    %139 = arith.mulf %130, %108 : vector<8x128xf32>
    %140 = arith.mulf %124, %132 : vector<8x128xf32>
    %141 = arith.addf %139, %140 : vector<8x128xf32>
    %142 = math.tanh %141 : vector<8x128xf32>
    %143 = arith.mulf %138, %142 : vector<8x128xf32>
    %c3_51 = arith.constant 3 : index
    %c0_52 = arith.constant 0 : index
    %c0_53 = arith.constant 0 : index
    %144 = vector.load %arg16[%c3_51, %c0_52, %c0_53] : memref<8x8x128xf32, #tpu.memory_space<vmem>>, vector<1x8x128xf32>
    %145 = vector.shape_cast %144 : vector<1x8x128xf32> to vector<8x128xf32>
    %146 = vector.shape_cast %143 : vector<8x128xf32> to vector<1x8x128xf32>
    tpu.vector_store %arg16[%c3_51, %c0_52, %c0_53], %146 {strides = array<i32>} : memref<8x8x128xf32, #tpu.memory_space<vmem>>, vector<1x8x128xf32>,
    %c4 = arith.constant 4 : index
    %c0_54 = arith.constant 0 : index
    %c0_55 = arith.constant 0 : index
    %147 = vector.load %arg15[%c4, %c0_54, %c0_55] : memref<8x8x512xf32, #tpu.memory_space<vmem>>, vector<1x8x512xf32>
    %148 = vector.shape_cast %147 : vector<1x8x512xf32> to vector<8x512xf32>
    %149 = arith.truncf %143 : vector<8x128xf32> to vector<8x128xbf16>
    %cst_56 = arith.constant dense<0.000000e+00> : vector<8x512xf32>
    %150 = tpu.matmul %149, %4, %cst_56 {dimension_numbers = #tpu.dot_dimension_numbers<[1], [0], [0], [1], [0, 0, 1, 1], [], []>} : vector<8x128xbf16>, vector<128x512xbf16>, vector<8x512xf32> -> vector<8x512xf32>
    %151 = arith.addf %148, %150 : vector<8x512xf32>
    %152 = vector.extract_strided_slice %151 {offsets = [0, 0], sizes = [8, 128], strides = [1, 1]} : vector<8x512xf32> to vector<8x128xf32>
    %153 = arith.negf %152 : vector<8x128xf32>
    %154 = math.exp %153 : vector<8x128xf32>
    %cst_57 = arith.constant 1.000000e+00 : f32
    %155 = vector.broadcast %cst_57 : f32 to vector<8x128xf32>
    %156 = arith.addf %155, %154 : vector<8x128xf32>
    %157 = arith.divf %155, %156 : vector<8x128xf32>
    %158 = vector.extract_strided_slice %151 {offsets = [0, 128], sizes = [8, 128], strides = [1, 1]} : vector<8x512xf32> to vector<8x128xf32>
    %159 = arith.negf %158 : vector<8x128xf32>
    %160 = math.exp %159 : vector<8x128xf32>
    %cst_58 = arith.constant 1.000000e+00 : f32
    %161 = vector.broadcast %cst_58 : f32 to vector<8x128xf32>
    %162 = arith.addf %161, %160 : vector<8x128xf32>
    %163 = arith.divf %161, %162 : vector<8x128xf32>
    %164 = vector.extract_strided_slice %151 {offsets = [0, 256], sizes = [8, 128], strides = [1, 1]} : vector<8x512xf32> to vector<8x128xf32>
    %165 = math.tanh %164 : vector<8x128xf32>
    %166 = vector.extract_strided_slice %151 {offsets = [0, 384], sizes = [8, 128], strides = [1, 1]} : vector<8x512xf32> to vector<8x128xf32>
    %167 = arith.negf %166 : vector<8x128xf32>
    %168 = math.exp %167 : vector<8x128xf32>
    %cst_59 = arith.constant 1.000000e+00 : f32
    %169 = vector.broadcast %cst_59 : f32 to vector<8x128xf32>
    %170 = arith.addf %169, %168 : vector<8x128xf32>
    %171 = arith.divf %169, %170 : vector<8x128xf32>
    %172 = arith.mulf %163, %141 : vector<8x128xf32>
    %173 = arith.mulf %157, %165 : vector<8x128xf32>
    %174 = arith.addf %172, %173 : vector<8x128xf32>
    %175 = math.tanh %174 : vector<8x128xf32>
    %176 = arith.mulf %171, %175 : vector<8x128xf32>
    %c4_60 = arith.constant 4 : index
    %c0_61 = arith.constant 0 : index
    %c0_62 = arith.constant 0 : index
    %177 = vector.load %arg16[%c4_60, %c0_61, %c0_62] : memref<8x8x128xf32, #tpu.memory_space<vmem>>, vector<1x8x128xf32>
    %178 = vector.shape_cast %177 : vector<1x8x128xf32> to vector<8x128xf32>
    %179 = vector.shape_cast %176 : vector<8x128xf32> to vector<1x8x128xf32>
    tpu.vector_store %arg16[%c4_60, %c0_61, %c0_62], %179 {strides = array<i32>} : memref<8x8x128xf32, #tpu.memory_space<vmem>>, vector<1x8x128xf32>,
    %c5 = arith.constant 5 : index
    %c0_63 = arith.constant 0 : index
    %c0_64 = arith.constant 0 : index
    %180 = vector.load %arg15[%c5, %c0_63, %c0_64] : memref<8x8x512xf32, #tpu.memory_space<vmem>>, vector<1x8x512xf32>
    %181 = vector.shape_cast %180 : vector<1x8x512xf32> to vector<8x512xf32>
    %182 = arith.truncf %176 : vector<8x128xf32> to vector<8x128xbf16>
    %cst_65 = arith.constant dense<0.000000e+00> : vector<8x512xf32>
    %183 = tpu.matmul %182, %4, %cst_65 {dimension_numbers = #tpu.dot_dimension_numbers<[1], [0], [0], [1], [0, 0, 1, 1], [], []>} : vector<8x128xbf16>, vector<128x512xbf16>, vector<8x512xf32> -> vector<8x512xf32>
    %184 = arith.addf %181, %183 : vector<8x512xf32>
    %185 = vector.extract_strided_slice %184 {offsets = [0, 0], sizes = [8, 128], strides = [1, 1]} : vector<8x512xf32> to vector<8x128xf32>
    %186 = arith.negf %185 : vector<8x128xf32>
    %187 = math.exp %186 : vector<8x128xf32>
    %cst_66 = arith.constant 1.000000e+00 : f32
    %188 = vector.broadcast %cst_66 : f32 to vector<8x128xf32>
    %189 = arith.addf %188, %187 : vector<8x128xf32>
    %190 = arith.divf %188, %189 : vector<8x128xf32>
    %191 = vector.extract_strided_slice %184 {offsets = [0, 128], sizes = [8, 128], strides = [1, 1]} : vector<8x512xf32> to vector<8x128xf32>
    %192 = arith.negf %191 : vector<8x128xf32>
    %193 = math.exp %192 : vector<8x128xf32>
    %cst_67 = arith.constant 1.000000e+00 : f32
    %194 = vector.broadcast %cst_67 : f32 to vector<8x128xf32>
    %195 = arith.addf %194, %193 : vector<8x128xf32>
    %196 = arith.divf %194, %195 : vector<8x128xf32>
    %197 = vector.extract_strided_slice %184 {offsets = [0, 256], sizes = [8, 128], strides = [1, 1]} : vector<8x512xf32> to vector<8x128xf32>
    %198 = math.tanh %197 : vector<8x128xf32>
    %199 = vector.extract_strided_slice %184 {offsets = [0, 384], sizes = [8, 128], strides = [1, 1]} : vector<8x512xf32> to vector<8x128xf32>
    %200 = arith.negf %199 : vector<8x128xf32>
    %201 = math.exp %200 : vector<8x128xf32>
    %cst_68 = arith.constant 1.000000e+00 : f32
    %202 = vector.broadcast %cst_68 : f32 to vector<8x128xf32>
    %203 = arith.addf %202, %201 : vector<8x128xf32>
    %204 = arith.divf %202, %203 : vector<8x128xf32>
    %205 = arith.mulf %196, %174 : vector<8x128xf32>
    %206 = arith.mulf %190, %198 : vector<8x128xf32>
    %207 = arith.addf %205, %206 : vector<8x128xf32>
    %208 = math.tanh %207 : vector<8x128xf32>
    %209 = arith.mulf %204, %208 : vector<8x128xf32>
    %c5_69 = arith.constant 5 : index
    %c0_70 = arith.constant 0 : index
    %c0_71 = arith.constant 0 : index
    %210 = vector.load %arg16[%c5_69, %c0_70, %c0_71] : memref<8x8x128xf32, #tpu.memory_space<vmem>>, vector<1x8x128xf32>
    %211 = vector.shape_cast %210 : vector<1x8x128xf32> to vector<8x128xf32>
    %212 = vector.shape_cast %209 : vector<8x128xf32> to vector<1x8x128xf32>
    tpu.vector_store %arg16[%c5_69, %c0_70, %c0_71], %212 {strides = array<i32>} : memref<8x8x128xf32, #tpu.memory_space<vmem>>, vector<1x8x128xf32>,
    %c6 = arith.constant 6 : index
    %c0_72 = arith.constant 0 : index
    %c0_73 = arith.constant 0 : index
    %213 = vector.load %arg15[%c6, %c0_72, %c0_73] : memref<8x8x512xf32, #tpu.memory_space<vmem>>, vector<1x8x512xf32>
    %214 = vector.shape_cast %213 : vector<1x8x512xf32> to vector<8x512xf32>
    %215 = arith.truncf %209 : vector<8x128xf32> to vector<8x128xbf16>
    %cst_74 = arith.constant dense<0.000000e+00> : vector<8x512xf32>
    %216 = tpu.matmul %215, %4, %cst_74 {dimension_numbers = #tpu.dot_dimension_numbers<[1], [0], [0], [1], [0, 0, 1, 1], [], []>} : vector<8x128xbf16>, vector<128x512xbf16>, vector<8x512xf32> -> vector<8x512xf32>
    %217 = arith.addf %214, %216 : vector<8x512xf32>
    %218 = vector.extract_strided_slice %217 {offsets = [0, 0], sizes = [8, 128], strides = [1, 1]} : vector<8x512xf32> to vector<8x128xf32>
    %219 = arith.negf %218 : vector<8x128xf32>
    %220 = math.exp %219 : vector<8x128xf32>
    %cst_75 = arith.constant 1.000000e+00 : f32
    %221 = vector.broadcast %cst_75 : f32 to vector<8x128xf32>
    %222 = arith.addf %221, %220 : vector<8x128xf32>
    %223 = arith.divf %221, %222 : vector<8x128xf32>
    %224 = vector.extract_strided_slice %217 {offsets = [0, 128], sizes = [8, 128], strides = [1, 1]} : vector<8x512xf32> to vector<8x128xf32>
    %225 = arith.negf %224 : vector<8x128xf32>
    %226 = math.exp %225 : vector<8x128xf32>
    %cst_76 = arith.constant 1.000000e+00 : f32
    %227 = vector.broadcast %cst_76 : f32 to vector<8x128xf32>
    %228 = arith.addf %227, %226 : vector<8x128xf32>
    %229 = arith.divf %227, %228 : vector<8x128xf32>
    %230 = vector.extract_strided_slice %217 {offsets = [0, 256], sizes = [8, 128], strides = [1, 1]} : vector<8x512xf32> to vector<8x128xf32>
    %231 = math.tanh %230 : vector<8x128xf32>
    %232 = vector.extract_strided_slice %217 {offsets = [0, 384], sizes = [8, 128], strides = [1, 1]} : vector<8x512xf32> to vector<8x128xf32>
    %233 = arith.negf %232 : vector<8x128xf32>
    %234 = math.exp %233 : vector<8x128xf32>
    %cst_77 = arith.constant 1.000000e+00 : f32
    %235 = vector.broadcast %cst_77 : f32 to vector<8x128xf32>
    %236 = arith.addf %235, %234 : vector<8x128xf32>
    %237 = arith.divf %235, %236 : vector<8x128xf32>
    %238 = arith.mulf %229, %207 : vector<8x128xf32>
    %239 = arith.mulf %223, %231 : vector<8x128xf32>
    %240 = arith.addf %238, %239 : vector<8x128xf32>
    %241 = math.tanh %240 : vector<8x128xf32>
    %242 = arith.mulf %237, %241 : vector<8x128xf32>
    %c6_78 = arith.constant 6 : index
    %c0_79 = arith.constant 0 : index
    %c0_80 = arith.constant 0 : index
    %243 = vector.load %arg16[%c6_78, %c0_79, %c0_80] : memref<8x8x128xf32, #tpu.memory_space<vmem>>, vector<1x8x128xf32>
    %244 = vector.shape_cast %243 : vector<1x8x128xf32> to vector<8x128xf32>
    %245 = vector.shape_cast %242 : vector<8x128xf32> to vector<1x8x128xf32>
    tpu.vector_store %arg16[%c6_78, %c0_79, %c0_80], %245 {strides = array<i32>} : memref<8x8x128xf32, #tpu.memory_space<vmem>>, vector<1x8x128xf32>,
    %c7 = arith.constant 7 : index
    %c0_81 = arith.constant 0 : index
    %c0_82 = arith.constant 0 : index
    %246 = vector.load %arg15[%c7, %c0_81, %c0_82] : memref<8x8x512xf32, #tpu.memory_space<vmem>>, vector<1x8x512xf32>
    %247 = vector.shape_cast %246 : vector<1x8x512xf32> to vector<8x512xf32>
    %248 = arith.truncf %242 : vector<8x128xf32> to vector<8x128xbf16>
    %cst_83 = arith.constant dense<0.000000e+00> : vector<8x512xf32>
    %249 = tpu.matmul %248, %4, %cst_83 {dimension_numbers = #tpu.dot_dimension_numbers<[1], [0], [0], [1], [0, 0, 1, 1], [], []>} : vector<8x128xbf16>, vector<128x512xbf16>, vector<8x512xf32> -> vector<8x512xf32>
    %250 = arith.addf %247, %249 : vector<8x512xf32>
    %251 = vector.extract_strided_slice %250 {offsets = [0, 0], sizes = [8, 128], strides = [1, 1]} : vector<8x512xf32> to vector<8x128xf32>
    %252 = arith.negf %251 : vector<8x128xf32>
    %253 = math.exp %252 : vector<8x128xf32>
    %cst_84 = arith.constant 1.000000e+00 : f32
    %254 = vector.broadcast %cst_84 : f32 to vector<8x128xf32>
    %255 = arith.addf %254, %253 : vector<8x128xf32>
    %256 = arith.divf %254, %255 : vector<8x128xf32>
    %257 = vector.extract_strided_slice %250 {offsets = [0, 128], sizes = [8, 128], strides = [1, 1]} : vector<8x512xf32> to vector<8x128xf32>
    %258 = arith.negf %257 : vector<8x128xf32>
    %259 = math.exp %258 : vector<8x128xf32>
    %cst_85 = arith.constant 1.000000e+00 : f32
    %260 = vector.broadcast %cst_85 : f32 to vector<8x128xf32>
    %261 = arith.addf %260, %259 : vector<8x128xf32>
    %262 = arith.divf %260, %261 : vector<8x128xf32>
    %263 = vector.extract_strided_slice %250 {offsets = [0, 256], sizes = [8, 128], strides = [1, 1]} : vector<8x512xf32> to vector<8x128xf32>
    %264 = math.tanh %263 : vector<8x128xf32>
    %265 = vector.extract_strided_slice %250 {offsets = [0, 384], sizes = [8, 128], strides = [1, 1]} : vector<8x512xf32> to vector<8x128xf32>
    %266 = arith.negf %265 : vector<8x128xf32>
    %267 = math.exp %266 : vector<8x128xf32>
    %cst_86 = arith.constant 1.000000e+00 : f32
    %268 = vector.broadcast %cst_86 : f32 to vector<8x128xf32>
    %269 = arith.addf %268, %267 : vector<8x128xf32>
    %270 = arith.divf %268, %269 : vector<8x128xf32>
    %271 = arith.mulf %262, %240 : vector<8x128xf32>
    %272 = arith.mulf %256, %264 : vector<8x128xf32>
    %273 = arith.addf %271, %272 : vector<8x128xf32>
    %274 = math.tanh %273 : vector<8x128xf32>
    %275 = arith.mulf %270, %274 : vector<8x128xf32>
    %c7_87 = arith.constant 7 : index
    %c0_88 = arith.constant 0 : index
    %c0_89 = arith.constant 0 : index
    %276 = vector.load %arg16[%c7_87, %c0_88, %c0_89] : memref<8x8x128xf32, #tpu.memory_space<vmem>>, vector<1x8x128xf32>
    %277 = vector.shape_cast %276 : vector<1x8x128xf32> to vector<8x128xf32>
    %278 = vector.shape_cast %275 : vector<8x128xf32> to vector<1x8x128xf32>
    tpu.vector_store %arg16[%c7_87, %c0_88, %c0_89], %278 {strides = array<i32>} : memref<8x8x128xf32, #tpu.memory_space<vmem>>, vector<1x8x128xf32>,
    %c0_90 = arith.constant 0 : index
    %c0_91 = arith.constant 0 : index
    %c0_92 = arith.constant 0 : index
    %279 = vector.load %arg13[%c0_90, %c0_91, %c0_92] : memref<2x8x128xf32, #tpu.memory_space<vmem>>, vector<1x8x128xf32>
    %280 = vector.shape_cast %279 : vector<1x8x128xf32> to vector<8x128xf32>
    %281 = vector.shape_cast %275 : vector<8x128xf32> to vector<1x8x128xf32>
    tpu.vector_store %arg13[%c0_90, %c0_91, %c0_92], %281 {strides = array<i32>} : memref<2x8x128xf32, #tpu.memory_space<vmem>>, vector<1x8x128xf32>,
    %c0_93 = arith.constant 0 : index
    %c0_94 = arith.constant 0 : index
    %c0_95 = arith.constant 0 : index
    %282 = vector.load %arg14[%c0_93, %c0_94, %c0_95] : memref<2x8x128xf32, #tpu.memory_space<vmem>>, vector<1x8x128xf32>
    %283 = vector.shape_cast %282 : vector<1x8x128xf32> to vector<8x128xf32>
    %284 = vector.shape_cast %273 : vector<8x128xf32> to vector<1x8x128xf32>
    tpu.vector_store %arg14[%c0_93, %c0_94, %c0_95], %284 {strides = array<i32>} : memref<2x8x128xf32, #tpu.memory_space<vmem>>, vector<1x8x128xf32>,
    %c0_96 = arith.constant 0 : index
    %c0_97 = arith.constant 0 : index
    %c0_98 = arith.constant 0 : index
    %285 = vector.load %arg16[%c0_96, %c0_97, %c0_98] : memref<8x8x128xf32, #tpu.memory_space<vmem>>, vector<8x8x128xf32>
    %286 = vector.shape_cast %285 : vector<8x8x128xf32> to vector<64x128xf32>
    %287 = arith.truncf %286 : vector<64x128xf32> to vector<64x128xbf16>
    %c0_99 = arith.constant 0 : index
    %c0_100 = arith.constant 0 : index
    %288 = vector.load %arg7[%c0_99, %c0_100] : memref<128x512xbf16, #tpu.memory_space<vmem>>, vector<128x512xbf16>
    %c0_101 = arith.constant 0 : index
    %c0_102 = arith.constant 0 : index
    %289 = vector.load %arg8[%c0_101, %c0_102] : memref<128x512xbf16, #tpu.memory_space<vmem>>, vector<128x512xbf16>
    %c0_103 = arith.constant 0 : index
    %c0_104 = arith.constant 0 : index
    %290 = vector.load %arg9[%c0_103, %c0_104] : memref<1x512xf32, #tpu.memory_space<vmem>>, vector<1x512xf32>
    %cst_105 = arith.constant dense<0.000000e+00> : vector<64x512xf32>
    %291 = tpu.matmul %287, %288, %cst_105 {dimension_numbers = #tpu.dot_dimension_numbers<[1], [0], [0], [1], [0, 0, 1, 1], [], []>} : vector<64x128xbf16>, vector<128x512xbf16>, vector<64x512xf32> -> vector<64x512xf32>
    %292 = vector.broadcast %290 : vector<1x512xf32> to vector<64x512xf32>
    %293 = arith.addf %291, %292 : vector<64x512xf32>
    %294 = vector.shape_cast %293 : vector<64x512xf32> to vector<8x8x512xf32>
    %c0_106 = arith.constant 0 : index
    %c0_107 = arith.constant 0 : index
    %c0_108 = arith.constant 0 : index
    %295 = vector.load %arg15[%c0_106, %c0_107, %c0_108] : memref<8x8x512xf32, #tpu.memory_space<vmem>>, vector<8x8x512xf32>
    tpu.vector_store %arg15[%c0_106, %c0_107, %c0_108], %294 {strides = array<i32>} : memref<8x8x512xf32, #tpu.memory_space<vmem>>, vector<8x8x512xf32>,
    %c1_109 = arith.constant 1 : index
    %c0_110 = arith.constant 0 : index
    %c0_111 = arith.constant 0 : index
    %296 = vector.load %arg2[%c1_109, %c0_110, %c0_111] : memref<2x8x128xf32, #tpu.memory_space<vmem>>, vector<1x8x128xf32>
    %297 = vector.shape_cast %296 : vector<1x8x128xf32> to vector<8x128xf32>
    %c1_112 = arith.constant 1 : index
    %c0_113 = arith.constant 0 : index
    %c0_114 = arith.constant 0 : index
    %298 = vector.load %arg3[%c1_112, %c0_113, %c0_114] : memref<2x8x128xf32, #tpu.memory_space<vmem>>, vector<1x8x128xf32>
    %299 = vector.shape_cast %298 : vector<1x8x128xf32> to vector<8x128xf32>
    %c0_115 = arith.constant 0 : index
    %c0_116 = arith.constant 0 : index
    %c0_117 = arith.constant 0 : index
    %300 = vector.load %arg15[%c0_115, %c0_116, %c0_117] : memref<8x8x512xf32, #tpu.memory_space<vmem>>, vector<1x8x512xf32>
    %301 = vector.shape_cast %300 : vector<1x8x512xf32> to vector<8x512xf32>
    %302 = arith.truncf %297 : vector<8x128xf32> to vector<8x128xbf16>
    %cst_118 = arith.constant dense<0.000000e+00> : vector<8x512xf32>
    %303 = tpu.matmul %302, %289, %cst_118 {dimension_numbers = #tpu.dot_dimension_numbers<[1], [0], [0], [1], [0, 0, 1, 1], [], []>} : vector<8x128xbf16>, vector<128x512xbf16>, vector<8x512xf32> -> vector<8x512xf32>
    %304 = arith.addf %301, %303 : vector<8x512xf32>
    %305 = vector.extract_strided_slice %304 {offsets = [0, 0], sizes = [8, 128], strides = [1, 1]} : vector<8x512xf32> to vector<8x128xf32>
    %306 = arith.negf %305 : vector<8x128xf32>
    %307 = math.exp %306 : vector<8x128xf32>
    %cst_119 = arith.constant 1.000000e+00 : f32
    %308 = vector.broadcast %cst_119 : f32 to vector<8x128xf32>
    %309 = arith.addf %308, %307 : vector<8x128xf32>
    %310 = arith.divf %308, %309 : vector<8x128xf32>
    %311 = vector.extract_strided_slice %304 {offsets = [0, 128], sizes = [8, 128], strides = [1, 1]} : vector<8x512xf32> to vector<8x128xf32>
    %312 = arith.negf %311 : vector<8x128xf32>
    %313 = math.exp %312 : vector<8x128xf32>
    %cst_120 = arith.constant 1.000000e+00 : f32
    %314 = vector.broadcast %cst_120 : f32 to vector<8x128xf32>
    %315 = arith.addf %314, %313 : vector<8x128xf32>
    %316 = arith.divf %314, %315 : vector<8x128xf32>
    %317 = vector.extract_strided_slice %304 {offsets = [0, 256], sizes = [8, 128], strides = [1, 1]} : vector<8x512xf32> to vector<8x128xf32>
    %318 = math.tanh %317 : vector<8x128xf32>
    %319 = vector.extract_strided_slice %304 {offsets = [0, 384], sizes = [8, 128], strides = [1, 1]} : vector<8x512xf32> to vector<8x128xf32>
    %320 = arith.negf %319 : vector<8x128xf32>
    %321 = math.exp %320 : vector<8x128xf32>
    %cst_121 = arith.constant 1.000000e+00 : f32
    %322 = vector.broadcast %cst_121 : f32 to vector<8x128xf32>
    %323 = arith.addf %322, %321 : vector<8x128xf32>
    %324 = arith.divf %322, %323 : vector<8x128xf32>
    %325 = arith.mulf %316, %299 : vector<8x128xf32>
    %326 = arith.mulf %310, %318 : vector<8x128xf32>
    %327 = arith.addf %325, %326 : vector<8x128xf32>
    %328 = math.tanh %327 : vector<8x128xf32>
    %329 = arith.mulf %324, %328 : vector<8x128xf32>
    %c0_122 = arith.constant 0 : index
    %c0_123 = arith.constant 0 : index
    %c0_124 = arith.constant 0 : index
    %330 = vector.load %arg17[%c0_122, %c0_123, %c0_124] : memref<8x8x128xf32, #tpu.memory_space<vmem>>, vector<1x8x128xf32>
    %331 = vector.shape_cast %330 : vector<1x8x128xf32> to vector<8x128xf32>
    %332 = vector.shape_cast %329 : vector<8x128xf32> to vector<1x8x128xf32>
    tpu.vector_store %arg17[%c0_122, %c0_123, %c0_124], %332 {strides = array<i32>} : memref<8x8x128xf32, #tpu.memory_space<vmem>>, vector<1x8x128xf32>,
    %c1_125 = arith.constant 1 : index
    %c0_126 = arith.constant 0 : index
    %c0_127 = arith.constant 0 : index
    %333 = vector.load %arg15[%c1_125, %c0_126, %c0_127] : memref<8x8x512xf32, #tpu.memory_space<vmem>>, vector<1x8x512xf32>
    %334 = vector.shape_cast %333 : vector<1x8x512xf32> to vector<8x512xf32>
    %335 = arith.truncf %329 : vector<8x128xf32> to vector<8x128xbf16>
    %cst_128 = arith.constant dense<0.000000e+00> : vector<8x512xf32>
    %336 = tpu.matmul %335, %289, %cst_128 {dimension_numbers = #tpu.dot_dimension_numbers<[1], [0], [0], [1], [0, 0, 1, 1], [], []>} : vector<8x128xbf16>, vector<128x512xbf16>, vector<8x512xf32> -> vector<8x512xf32>
    %337 = arith.addf %334, %336 : vector<8x512xf32>
    %338 = vector.extract_strided_slice %337 {offsets = [0, 0], sizes = [8, 128], strides = [1, 1]} : vector<8x512xf32> to vector<8x128xf32>
    %339 = arith.negf %338 : vector<8x128xf32>
    %340 = math.exp %339 : vector<8x128xf32>
    %cst_129 = arith.constant 1.000000e+00 : f32
    %341 = vector.broadcast %cst_129 : f32 to vector<8x128xf32>
    %342 = arith.addf %341, %340 : vector<8x128xf32>
    %343 = arith.divf %341, %342 : vector<8x128xf32>
    %344 = vector.extract_strided_slice %337 {offsets = [0, 128], sizes = [8, 128], strides = [1, 1]} : vector<8x512xf32> to vector<8x128xf32>
    %345 = arith.negf %344 : vector<8x128xf32>
    %346 = math.exp %345 : vector<8x128xf32>
    %cst_130 = arith.constant 1.000000e+00 : f32
    %347 = vector.broadcast %cst_130 : f32 to vector<8x128xf32>
    %348 = arith.addf %347, %346 : vector<8x128xf32>
    %349 = arith.divf %347, %348 : vector<8x128xf32>
    %350 = vector.extract_strided_slice %337 {offsets = [0, 256], sizes = [8, 128], strides = [1, 1]} : vector<8x512xf32> to vector<8x128xf32>
    %351 = math.tanh %350 : vector<8x128xf32>
    %352 = vector.extract_strided_slice %337 {offsets = [0, 384], sizes = [8, 128], strides = [1, 1]} : vector<8x512xf32> to vector<8x128xf32>
    %353 = arith.negf %352 : vector<8x128xf32>
    %354 = math.exp %353 : vector<8x128xf32>
    %cst_131 = arith.constant 1.000000e+00 : f32
    %355 = vector.broadcast %cst_131 : f32 to vector<8x128xf32>
    %356 = arith.addf %355, %354 : vector<8x128xf32>
    %357 = arith.divf %355, %356 : vector<8x128xf32>
    %358 = arith.mulf %349, %327 : vector<8x128xf32>
    %359 = arith.mulf %343, %351 : vector<8x128xf32>
    %360 = arith.addf %358, %359 : vector<8x128xf32>
    %361 = math.tanh %360 : vector<8x128xf32>
    %362 = arith.mulf %357, %361 : vector<8x128xf32>
    %c1_132 = arith.constant 1 : index
    %c0_133 = arith.constant 0 : index
    %c0_134 = arith.constant 0 : index
    %363 = vector.load %arg17[%c1_132, %c0_133, %c0_134] : memref<8x8x128xf32, #tpu.memory_space<vmem>>, vector<1x8x128xf32>
    %364 = vector.shape_cast %363 : vector<1x8x128xf32> to vector<8x128xf32>
    %365 = vector.shape_cast %362 : vector<8x128xf32> to vector<1x8x128xf32>
    tpu.vector_store %arg17[%c1_132, %c0_133, %c0_134], %365 {strides = array<i32>} : memref<8x8x128xf32, #tpu.memory_space<vmem>>, vector<1x8x128xf32>,
    %c2_135 = arith.constant 2 : index
    %c0_136 = arith.constant 0 : index
    %c0_137 = arith.constant 0 : index
    %366 = vector.load %arg15[%c2_135, %c0_136, %c0_137] : memref<8x8x512xf32, #tpu.memory_space<vmem>>, vector<1x8x512xf32>
    %367 = vector.shape_cast %366 : vector<1x8x512xf32> to vector<8x512xf32>
    %368 = arith.truncf %362 : vector<8x128xf32> to vector<8x128xbf16>
    %cst_138 = arith.constant dense<0.000000e+00> : vector<8x512xf32>
    %369 = tpu.matmul %368, %289, %cst_138 {dimension_numbers = #tpu.dot_dimension_numbers<[1], [0], [0], [1], [0, 0, 1, 1], [], []>} : vector<8x128xbf16>, vector<128x512xbf16>, vector<8x512xf32> -> vector<8x512xf32>
    %370 = arith.addf %367, %369 : vector<8x512xf32>
    %371 = vector.extract_strided_slice %370 {offsets = [0, 0], sizes = [8, 128], strides = [1, 1]} : vector<8x512xf32> to vector<8x128xf32>
    %372 = arith.negf %371 : vector<8x128xf32>
    %373 = math.exp %372 : vector<8x128xf32>
    %cst_139 = arith.constant 1.000000e+00 : f32
    %374 = vector.broadcast %cst_139 : f32 to vector<8x128xf32>
    %375 = arith.addf %374, %373 : vector<8x128xf32>
    %376 = arith.divf %374, %375 : vector<8x128xf32>
    %377 = vector.extract_strided_slice %370 {offsets = [0, 128], sizes = [8, 128], strides = [1, 1]} : vector<8x512xf32> to vector<8x128xf32>
    %378 = arith.negf %377 : vector<8x128xf32>
    %379 = math.exp %378 : vector<8x128xf32>
    %cst_140 = arith.constant 1.000000e+00 : f32
    %380 = vector.broadcast %cst_140 : f32 to vector<8x128xf32>
    %381 = arith.addf %380, %379 : vector<8x128xf32>
    %382 = arith.divf %380, %381 : vector<8x128xf32>
    %383 = vector.extract_strided_slice %370 {offsets = [0, 256], sizes = [8, 128], strides = [1, 1]} : vector<8x512xf32> to vector<8x128xf32>
    %384 = math.tanh %383 : vector<8x128xf32>
    %385 = vector.extract_strided_slice %370 {offsets = [0, 384], sizes = [8, 128], strides = [1, 1]} : vector<8x512xf32> to vector<8x128xf32>
    %386 = arith.negf %385 : vector<8x128xf32>
    %387 = math.exp %386 : vector<8x128xf32>
    %cst_141 = arith.constant 1.000000e+00 : f32
    %388 = vector.broadcast %cst_141 : f32 to vector<8x128xf32>
    %389 = arith.addf %388, %387 : vector<8x128xf32>
    %390 = arith.divf %388, %389 : vector<8x128xf32>
    %391 = arith.mulf %382, %360 : vector<8x128xf32>
    %392 = arith.mulf %376, %384 : vector<8x128xf32>
    %393 = arith.addf %391, %392 : vector<8x128xf32>
    %394 = math.tanh %393 : vector<8x128xf32>
    %395 = arith.mulf %390, %394 : vector<8x128xf32>
    %c2_142 = arith.constant 2 : index
    %c0_143 = arith.constant 0 : index
    %c0_144 = arith.constant 0 : index
    %396 = vector.load %arg17[%c2_142, %c0_143, %c0_144] : memref<8x8x128xf32, #tpu.memory_space<vmem>>, vector<1x8x128xf32>
    %397 = vector.shape_cast %396 : vector<1x8x128xf32> to vector<8x128xf32>
    %398 = vector.shape_cast %395 : vector<8x128xf32> to vector<1x8x128xf32>
    tpu.vector_store %arg17[%c2_142, %c0_143, %c0_144], %398 {strides = array<i32>} : memref<8x8x128xf32, #tpu.memory_space<vmem>>, vector<1x8x128xf32>,
    %c3_145 = arith.constant 3 : index
    %c0_146 = arith.constant 0 : index
    %c0_147 = arith.constant 0 : index
    %399 = vector.load %arg15[%c3_145, %c0_146, %c0_147] : memref<8x8x512xf32, #tpu.memory_space<vmem>>, vector<1x8x512xf32>
    %400 = vector.shape_cast %399 : vector<1x8x512xf32> to vector<8x512xf32>
    %401 = arith.truncf %395 : vector<8x128xf32> to vector<8x128xbf16>
    %cst_148 = arith.constant dense<0.000000e+00> : vector<8x512xf32>
    %402 = tpu.matmul %401, %289, %cst_148 {dimension_numbers = #tpu.dot_dimension_numbers<[1], [0], [0], [1], [0, 0, 1, 1], [], []>} : vector<8x128xbf16>, vector<128x512xbf16>, vector<8x512xf32> -> vector<8x512xf32>
    %403 = arith.addf %400, %402 : vector<8x512xf32>
    %404 = vector.extract_strided_slice %403 {offsets = [0, 0], sizes = [8, 128], strides = [1, 1]} : vector<8x512xf32> to vector<8x128xf32>
    %405 = arith.negf %404 : vector<8x128xf32>
    %406 = math.exp %405 : vector<8x128xf32>
    %cst_149 = arith.constant 1.000000e+00 : f32
    %407 = vector.broadcast %cst_149 : f32 to vector<8x128xf32>
    %408 = arith.addf %407, %406 : vector<8x128xf32>
    %409 = arith.divf %407, %408 : vector<8x128xf32>
    %410 = vector.extract_strided_slice %403 {offsets = [0, 128], sizes = [8, 128], strides = [1, 1]} : vector<8x512xf32> to vector<8x128xf32>
    %411 = arith.negf %410 : vector<8x128xf32>
    %412 = math.exp %411 : vector<8x128xf32>
    %cst_150 = arith.constant 1.000000e+00 : f32
    %413 = vector.broadcast %cst_150 : f32 to vector<8x128xf32>
    %414 = arith.addf %413, %412 : vector<8x128xf32>
    %415 = arith.divf %413, %414 : vector<8x128xf32>
    %416 = vector.extract_strided_slice %403 {offsets = [0, 256], sizes = [8, 128], strides = [1, 1]} : vector<8x512xf32> to vector<8x128xf32>
    %417 = math.tanh %416 : vector<8x128xf32>
    %418 = vector.extract_strided_slice %403 {offsets = [0, 384], sizes = [8, 128], strides = [1, 1]} : vector<8x512xf32> to vector<8x128xf32>
    %419 = arith.negf %418 : vector<8x128xf32>
    %420 = math.exp %419 : vector<8x128xf32>
    %cst_151 = arith.constant 1.000000e+00 : f32
    %421 = vector.broadcast %cst_151 : f32 to vector<8x128xf32>
    %422 = arith.addf %421, %420 : vector<8x128xf32>
    %423 = arith.divf %421, %422 : vector<8x128xf32>
    %424 = arith.mulf %415, %393 : vector<8x128xf32>
    %425 = arith.mulf %409, %417 : vector<8x128xf32>
    %426 = arith.addf %424, %425 : vector<8x128xf32>
    %427 = math.tanh %426 : vector<8x128xf32>
    %428 = arith.mulf %423, %427 : vector<8x128xf32>
    %c3_152 = arith.constant 3 : index
    %c0_153 = arith.constant 0 : index
    %c0_154 = arith.constant 0 : index
    %429 = vector.load %arg17[%c3_152, %c0_153, %c0_154] : memref<8x8x128xf32, #tpu.memory_space<vmem>>, vector<1x8x128xf32>
    %430 = vector.shape_cast %429 : vector<1x8x128xf32> to vector<8x128xf32>
    %431 = vector.shape_cast %428 : vector<8x128xf32> to vector<1x8x128xf32>
    tpu.vector_store %arg17[%c3_152, %c0_153, %c0_154], %431 {strides = array<i32>} : memref<8x8x128xf32, #tpu.memory_space<vmem>>, vector<1x8x128xf32>,
    %c4_155 = arith.constant 4 : index
    %c0_156 = arith.constant 0 : index
    %c0_157 = arith.constant 0 : index
    %432 = vector.load %arg15[%c4_155, %c0_156, %c0_157] : memref<8x8x512xf32, #tpu.memory_space<vmem>>, vector<1x8x512xf32>
    %433 = vector.shape_cast %432 : vector<1x8x512xf32> to vector<8x512xf32>
    %434 = arith.truncf %428 : vector<8x128xf32> to vector<8x128xbf16>
    %cst_158 = arith.constant dense<0.000000e+00> : vector<8x512xf32>
    %435 = tpu.matmul %434, %289, %cst_158 {dimension_numbers = #tpu.dot_dimension_numbers<[1], [0], [0], [1], [0, 0, 1, 1], [], []>} : vector<8x128xbf16>, vector<128x512xbf16>, vector<8x512xf32> -> vector<8x512xf32>
    %436 = arith.addf %433, %435 : vector<8x512xf32>
    %437 = vector.extract_strided_slice %436 {offsets = [0, 0], sizes = [8, 128], strides = [1, 1]} : vector<8x512xf32> to vector<8x128xf32>
    %438 = arith.negf %437 : vector<8x128xf32>
    %439 = math.exp %438 : vector<8x128xf32>
    %cst_159 = arith.constant 1.000000e+00 : f32
    %440 = vector.broadcast %cst_159 : f32 to vector<8x128xf32>
    %441 = arith.addf %440, %439 : vector<8x128xf32>
    %442 = arith.divf %440, %441 : vector<8x128xf32>
    %443 = vector.extract_strided_slice %436 {offsets = [0, 128], sizes = [8, 128], strides = [1, 1]} : vector<8x512xf32> to vector<8x128xf32>
    %444 = arith.negf %443 : vector<8x128xf32>
    %445 = math.exp %444 : vector<8x128xf32>
    %cst_160 = arith.constant 1.000000e+00 : f32
    %446 = vector.broadcast %cst_160 : f32 to vector<8x128xf32>
    %447 = arith.addf %446, %445 : vector<8x128xf32>
    %448 = arith.divf %446, %447 : vector<8x128xf32>
    %449 = vector.extract_strided_slice %436 {offsets = [0, 256], sizes = [8, 128], strides = [1, 1]} : vector<8x512xf32> to vector<8x128xf32>
    %450 = math.tanh %449 : vector<8x128xf32>
    %451 = vector.extract_strided_slice %436 {offsets = [0, 384], sizes = [8, 128], strides = [1, 1]} : vector<8x512xf32> to vector<8x128xf32>
    %452 = arith.negf %451 : vector<8x128xf32>
    %453 = math.exp %452 : vector<8x128xf32>
    %cst_161 = arith.constant 1.000000e+00 : f32
    %454 = vector.broadcast %cst_161 : f32 to vector<8x128xf32>
    %455 = arith.addf %454, %453 : vector<8x128xf32>
    %456 = arith.divf %454, %455 : vector<8x128xf32>
    %457 = arith.mulf %448, %426 : vector<8x128xf32>
    %458 = arith.mulf %442, %450 : vector<8x128xf32>
    %459 = arith.addf %457, %458 : vector<8x128xf32>
    %460 = math.tanh %459 : vector<8x128xf32>
    %461 = arith.mulf %456, %460 : vector<8x128xf32>
    %c4_162 = arith.constant 4 : index
    %c0_163 = arith.constant 0 : index
    %c0_164 = arith.constant 0 : index
    %462 = vector.load %arg17[%c4_162, %c0_163, %c0_164] : memref<8x8x128xf32, #tpu.memory_space<vmem>>, vector<1x8x128xf32>
    %463 = vector.shape_cast %462 : vector<1x8x128xf32> to vector<8x128xf32>
    %464 = vector.shape_cast %461 : vector<8x128xf32> to vector<1x8x128xf32>
    tpu.vector_store %arg17[%c4_162, %c0_163, %c0_164], %464 {strides = array<i32>} : memref<8x8x128xf32, #tpu.memory_space<vmem>>, vector<1x8x128xf32>,
    %c5_165 = arith.constant 5 : index
    %c0_166 = arith.constant 0 : index
    %c0_167 = arith.constant 0 : index
    %465 = vector.load %arg15[%c5_165, %c0_166, %c0_167] : memref<8x8x512xf32, #tpu.memory_space<vmem>>, vector<1x8x512xf32>
    %466 = vector.shape_cast %465 : vector<1x8x512xf32> to vector<8x512xf32>
    %467 = arith.truncf %461 : vector<8x128xf32> to vector<8x128xbf16>
    %cst_168 = arith.constant dense<0.000000e+00> : vector<8x512xf32>
    %468 = tpu.matmul %467, %289, %cst_168 {dimension_numbers = #tpu.dot_dimension_numbers<[1], [0], [0], [1], [0, 0, 1, 1], [], []>} : vector<8x128xbf16>, vector<128x512xbf16>, vector<8x512xf32> -> vector<8x512xf32>
    %469 = arith.addf %466, %468 : vector<8x512xf32>
    %470 = vector.extract_strided_slice %469 {offsets = [0, 0], sizes = [8, 128], strides = [1, 1]} : vector<8x512xf32> to vector<8x128xf32>
    %471 = arith.negf %470 : vector<8x128xf32>
    %472 = math.exp %471 : vector<8x128xf32>
    %cst_169 = arith.constant 1.000000e+00 : f32
    %473 = vector.broadcast %cst_169 : f32 to vector<8x128xf32>
    %474 = arith.addf %473, %472 : vector<8x128xf32>
    %475 = arith.divf %473, %474 : vector<8x128xf32>
    %476 = vector.extract_strided_slice %469 {offsets = [0, 128], sizes = [8, 128], strides = [1, 1]} : vector<8x512xf32> to vector<8x128xf32>
    %477 = arith.negf %476 : vector<8x128xf32>
    %478 = math.exp %477 : vector<8x128xf32>
    %cst_170 = arith.constant 1.000000e+00 : f32
    %479 = vector.broadcast %cst_170 : f32 to vector<8x128xf32>
    %480 = arith.addf %479, %478 : vector<8x128xf32>
    %481 = arith.divf %479, %480 : vector<8x128xf32>
    %482 = vector.extract_strided_slice %469 {offsets = [0, 256], sizes = [8, 128], strides = [1, 1]} : vector<8x512xf32> to vector<8x128xf32>
    %483 = math.tanh %482 : vector<8x128xf32>
    %484 = vector.extract_strided_slice %469 {offsets = [0, 384], sizes = [8, 128], strides = [1, 1]} : vector<8x512xf32> to vector<8x128xf32>
    %485 = arith.negf %484 : vector<8x128xf32>
    %486 = math.exp %485 : vector<8x128xf32>
    %cst_171 = arith.constant 1.000000e+00 : f32
    %487 = vector.broadcast %cst_171 : f32 to vector<8x128xf32>
    %488 = arith.addf %487, %486 : vector<8x128xf32>
    %489 = arith.divf %487, %488 : vector<8x128xf32>
    %490 = arith.mulf %481, %459 : vector<8x128xf32>
    %491 = arith.mulf %475, %483 : vector<8x128xf32>
    %492 = arith.addf %490, %491 : vector<8x128xf32>
    %493 = math.tanh %492 : vector<8x128xf32>
    %494 = arith.mulf %489, %493 : vector<8x128xf32>
    %c5_172 = arith.constant 5 : index
    %c0_173 = arith.constant 0 : index
    %c0_174 = arith.constant 0 : index
    %495 = vector.load %arg17[%c5_172, %c0_173, %c0_174] : memref<8x8x128xf32, #tpu.memory_space<vmem>>, vector<1x8x128xf32>
    %496 = vector.shape_cast %495 : vector<1x8x128xf32> to vector<8x128xf32>
    %497 = vector.shape_cast %494 : vector<8x128xf32> to vector<1x8x128xf32>
    tpu.vector_store %arg17[%c5_172, %c0_173, %c0_174], %497 {strides = array<i32>} : memref<8x8x128xf32, #tpu.memory_space<vmem>>, vector<1x8x128xf32>,
    %c6_175 = arith.constant 6 : index
    %c0_176 = arith.constant 0 : index
    %c0_177 = arith.constant 0 : index
    %498 = vector.load %arg15[%c6_175, %c0_176, %c0_177] : memref<8x8x512xf32, #tpu.memory_space<vmem>>, vector<1x8x512xf32>
    %499 = vector.shape_cast %498 : vector<1x8x512xf32> to vector<8x512xf32>
    %500 = arith.truncf %494 : vector<8x128xf32> to vector<8x128xbf16>
    %cst_178 = arith.constant dense<0.000000e+00> : vector<8x512xf32>
    %501 = tpu.matmul %500, %289, %cst_178 {dimension_numbers = #tpu.dot_dimension_numbers<[1], [0], [0], [1], [0, 0, 1, 1], [], []>} : vector<8x128xbf16>, vector<128x512xbf16>, vector<8x512xf32> -> vector<8x512xf32>
    %502 = arith.addf %499, %501 : vector<8x512xf32>
    %503 = vector.extract_strided_slice %502 {offsets = [0, 0], sizes = [8, 128], strides = [1, 1]} : vector<8x512xf32> to vector<8x128xf32>
    %504 = arith.negf %503 : vector<8x128xf32>
    %505 = math.exp %504 : vector<8x128xf32>
    %cst_179 = arith.constant 1.000000e+00 : f32
    %506 = vector.broadcast %cst_179 : f32 to vector<8x128xf32>
    %507 = arith.addf %506, %505 : vector<8x128xf32>
    %508 = arith.divf %506, %507 : vector<8x128xf32>
    %509 = vector.extract_strided_slice %502 {offsets = [0, 128], sizes = [8, 128], strides = [1, 1]} : vector<8x512xf32> to vector<8x128xf32>
    %510 = arith.negf %509 : vector<8x128xf32>
    %511 = math.exp %510 : vector<8x128xf32>
    %cst_180 = arith.constant 1.000000e+00 : f32
    %512 = vector.broadcast %cst_180 : f32 to vector<8x128xf32>
    %513 = arith.addf %512, %511 : vector<8x128xf32>
    %514 = arith.divf %512, %513 : vector<8x128xf32>
    %515 = vector.extract_strided_slice %502 {offsets = [0, 256], sizes = [8, 128], strides = [1, 1]} : vector<8x512xf32> to vector<8x128xf32>
    %516 = math.tanh %515 : vector<8x128xf32>
    %517 = vector.extract_strided_slice %502 {offsets = [0, 384], sizes = [8, 128], strides = [1, 1]} : vector<8x512xf32> to vector<8x128xf32>
    %518 = arith.negf %517 : vector<8x128xf32>
    %519 = math.exp %518 : vector<8x128xf32>
    %cst_181 = arith.constant 1.000000e+00 : f32
    %520 = vector.broadcast %cst_181 : f32 to vector<8x128xf32>
    %521 = arith.addf %520, %519 : vector<8x128xf32>
    %522 = arith.divf %520, %521 : vector<8x128xf32>
    %523 = arith.mulf %514, %492 : vector<8x128xf32>
    %524 = arith.mulf %508, %516 : vector<8x128xf32>
    %525 = arith.addf %523, %524 : vector<8x128xf32>
    %526 = math.tanh %525 : vector<8x128xf32>
    %527 = arith.mulf %522, %526 : vector<8x128xf32>
    %c6_182 = arith.constant 6 : index
    %c0_183 = arith.constant 0 : index
    %c0_184 = arith.constant 0 : index
    %528 = vector.load %arg17[%c6_182, %c0_183, %c0_184] : memref<8x8x128xf32, #tpu.memory_space<vmem>>, vector<1x8x128xf32>
    %529 = vector.shape_cast %528 : vector<1x8x128xf32> to vector<8x128xf32>
    %530 = vector.shape_cast %527 : vector<8x128xf32> to vector<1x8x128xf32>
    tpu.vector_store %arg17[%c6_182, %c0_183, %c0_184], %530 {strides = array<i32>} : memref<8x8x128xf32, #tpu.memory_space<vmem>>, vector<1x8x128xf32>,
    %c7_185 = arith.constant 7 : index
    %c0_186 = arith.constant 0 : index
    %c0_187 = arith.constant 0 : index
    %531 = vector.load %arg15[%c7_185, %c0_186, %c0_187] : memref<8x8x512xf32, #tpu.memory_space<vmem>>, vector<1x8x512xf32>
    %532 = vector.shape_cast %531 : vector<1x8x512xf32> to vector<8x512xf32>
    %533 = arith.truncf %527 : vector<8x128xf32> to vector<8x128xbf16>
    %cst_188 = arith.constant dense<0.000000e+00> : vector<8x512xf32>
    %534 = tpu.matmul %533, %289, %cst_188 {dimension_numbers = #tpu.dot_dimension_numbers<[1], [0], [0], [1], [0, 0, 1, 1], [], []>} : vector<8x128xbf16>, vector<128x512xbf16>, vector<8x512xf32> -> vector<8x512xf32>
    %535 = arith.addf %532, %534 : vector<8x512xf32>
    %536 = vector.extract_strided_slice %535 {offsets = [0, 0], sizes = [8, 128], strides = [1, 1]} : vector<8x512xf32> to vector<8x128xf32>
    %537 = arith.negf %536 : vector<8x128xf32>
    %538 = math.exp %537 : vector<8x128xf32>
    %cst_189 = arith.constant 1.000000e+00 : f32
    %539 = vector.broadcast %cst_189 : f32 to vector<8x128xf32>
    %540 = arith.addf %539, %538 : vector<8x128xf32>
    %541 = arith.divf %539, %540 : vector<8x128xf32>
    %542 = vector.extract_strided_slice %535 {offsets = [0, 128], sizes = [8, 128], strides = [1, 1]} : vector<8x512xf32> to vector<8x128xf32>
    %543 = arith.negf %542 : vector<8x128xf32>
    %544 = math.exp %543 : vector<8x128xf32>
    %cst_190 = arith.constant 1.000000e+00 : f32
    %545 = vector.broadcast %cst_190 : f32 to vector<8x128xf32>
    %546 = arith.addf %545, %544 : vector<8x128xf32>
    %547 = arith.divf %545, %546 : vector<8x128xf32>
    %548 = vector.extract_strided_slice %535 {offsets = [0, 256], sizes = [8, 128], strides = [1, 1]} : vector<8x512xf32> to vector<8x128xf32>
    %549 = math.tanh %548 : vector<8x128xf32>
    %550 = vector.extract_strided_slice %535 {offsets = [0, 384], sizes = [8, 128], strides = [1, 1]} : vector<8x512xf32> to vector<8x128xf32>
    %551 = arith.negf %550 : vector<8x128xf32>
    %552 = math.exp %551 : vector<8x128xf32>
    %cst_191 = arith.constant 1.000000e+00 : f32
    %553 = vector.broadcast %cst_191 : f32 to vector<8x128xf32>
    %554 = arith.addf %553, %552 : vector<8x128xf32>
    %555 = arith.divf %553, %554 : vector<8x128xf32>
    %556 = arith.mulf %547, %525 : vector<8x128xf32>
    %557 = arith.mulf %541, %549 : vector<8x128xf32>
    %558 = arith.addf %556, %557 : vector<8x128xf32>
    %559 = math.tanh %558 : vector<8x128xf32>
    %560 = arith.mulf %555, %559 : vector<8x128xf32>
    %c7_192 = arith.constant 7 : index
    %c0_193 = arith.constant 0 : index
    %c0_194 = arith.constant 0 : index
    %561 = vector.load %arg17[%c7_192, %c0_193, %c0_194] : memref<8x8x128xf32, #tpu.memory_space<vmem>>, vector<1x8x128xf32>
    %562 = vector.shape_cast %561 : vector<1x8x128xf32> to vector<8x128xf32>
    %563 = vector.shape_cast %560 : vector<8x128xf32> to vector<1x8x128xf32>
    tpu.vector_store %arg17[%c7_192, %c0_193, %c0_194], %563 {strides = array<i32>} : memref<8x8x128xf32, #tpu.memory_space<vmem>>, vector<1x8x128xf32>,
    %c1_195 = arith.constant 1 : index
    %c0_196 = arith.constant 0 : index
    %c0_197 = arith.constant 0 : index
    %564 = vector.load %arg13[%c1_195, %c0_196, %c0_197] : memref<2x8x128xf32, #tpu.memory_space<vmem>>, vector<1x8x128xf32>
    %565 = vector.shape_cast %564 : vector<1x8x128xf32> to vector<8x128xf32>
    %566 = vector.shape_cast %560 : vector<8x128xf32> to vector<1x8x128xf32>
    tpu.vector_store %arg13[%c1_195, %c0_196, %c0_197], %566 {strides = array<i32>} : memref<2x8x128xf32, #tpu.memory_space<vmem>>, vector<1x8x128xf32>,
    %c1_198 = arith.constant 1 : index
    %c0_199 = arith.constant 0 : index
    %c0_200 = arith.constant 0 : index
    %567 = vector.load %arg14[%c1_198, %c0_199, %c0_200] : memref<2x8x128xf32, #tpu.memory_space<vmem>>, vector<1x8x128xf32>
    %568 = vector.shape_cast %567 : vector<1x8x128xf32> to vector<8x128xf32>
    %569 = vector.shape_cast %558 : vector<8x128xf32> to vector<1x8x128xf32>
    tpu.vector_store %arg14[%c1_198, %c0_199, %c0_200], %569 {strides = array<i32>} : memref<2x8x128xf32, #tpu.memory_space<vmem>>, vector<1x8x128xf32>,
    %c0_201 = arith.constant 0 : index
    %c0_202 = arith.constant 0 : index
    %c0_203 = arith.constant 0 : index
    %570 = vector.load %arg17[%c0_201, %c0_202, %c0_203] : memref<8x8x128xf32, #tpu.memory_space<vmem>>, vector<8x8x128xf32>
    %571 = vector.shape_cast %570 : vector<8x8x128xf32> to vector<64x128xf32>
    %572 = arith.truncf %571 : vector<64x128xf32> to vector<64x128xbf16>
    %c0_204 = arith.constant 0 : index
    %c0_205 = arith.constant 0 : index
    %573 = vector.load %arg10[%c0_204, %c0_205] : memref<128x128xbf16, #tpu.memory_space<vmem>>, vector<128x128xbf16>
    %cst_206 = arith.constant dense<0.000000e+00> : vector<64x128xf32>
    %574 = tpu.matmul %572, %573, %cst_206 {dimension_numbers = #tpu.dot_dimension_numbers<[1], [0], [0], [1], [0, 0, 1, 1], [], []>} : vector<64x128xbf16>, vector<128x128xbf16>, vector<64x128xf32> -> vector<64x128xf32>
    %c0_207 = arith.constant 0 : index
    %c0_208 = arith.constant 0 : index
    %575 = vector.load %arg11[%c0_207, %c0_208] : memref<1x128xf32, #tpu.memory_space<vmem>>, vector<1x128xf32>
    %576 = vector.broadcast %575 : vector<1x128xf32> to vector<64x128xf32>
    %577 = arith.addf %574, %576 : vector<64x128xf32>
    %578 = vector.shape_cast %577 : vector<64x128xf32> to vector<8x8x128xf32>
    %c0_209 = arith.constant 0 : index
    %c0_210 = arith.constant 0 : index
    %c0_211 = arith.constant 0 : index
    %579 = vector.load %arg12[%c0_209, %c0_210, %c0_211] : memref<8x8x128xf32, #tpu.memory_space<vmem>>, vector<8x8x128xf32>
    tpu.vector_store %arg12[%c0_209, %c0_210, %c0_211], %578 {strides = array<i32>} : memref<8x8x128xf32, #tpu.memory_space<vmem>>, vector<8x8x128xf32>,
    return
  }
  func.func @transform_0(%arg0: i32) -> (i32, i32, i32) {
    %c0_i32 = arith.constant 0 : i32
    %c0_i32_0 = arith.constant 0 : i32
    %c0_i32_1 = arith.constant 0 : i32
    return %c0_i32, %arg0, %c0_i32_0 : i32, i32, i32
  }
  func.func @transform_1(%arg0: i32) -> (i32, i32, i32) {
    %c0_i32 = arith.constant 0 : i32
    %c0_i32_0 = arith.constant 0 : i32
    %c0_i32_1 = arith.constant 0 : i32
    return %c0_i32, %arg0, %c0_i32_0 : i32, i32, i32
  }
  func.func @transform_2(%arg0: i32) -> (i32, i32, i32) {
    %c0_i32 = arith.constant 0 : i32
    %c0_i32_0 = arith.constant 0 : i32
    %c0_i32_1 = arith.constant 0 : i32
    return %c0_i32, %arg0, %c0_i32_0 : i32, i32, i32
  }
  func.func @transform_3(%arg0: i32) -> (i32, i32) {
    %c0_i32 = arith.constant 0 : i32
    %c0_i32_0 = arith.constant 0 : i32
    %c0_i32_1 = arith.constant 0 : i32
    return %c0_i32, %c0_i32_0 : i32, i32
  }
  func.func @transform_4(%arg0: i32) -> (i32, i32) {
    %c0_i32 = arith.constant 0 : i32
    %c0_i32_0 = arith.constant 0 : i32
    %c0_i32_1 = arith.constant 0 : i32
    return %c0_i32, %c0_i32_0 : i32, i32
  }
  func.func @transform_5(%arg0: i32) -> (i32, i32) {
    %c0_i32 = arith.constant 0 : i32
    %c0_i32_0 = arith.constant 0 : i32
    %c0_i32_1 = arith.constant 0 : i32
    return %c0_i32, %c0_i32_0 : i32, i32
  }
  func.func @transform_6(%arg0: i32) -> (i32, i32) {
    %c0_i32 = arith.constant 0 : i32
    %c0_i32_0 = arith.constant 0 : i32
    %c0_i32_1 = arith.constant 0 : i32
    return %c0_i32, %c0_i32_0 : i32, i32
  }
  func.func @transform_7(%arg0: i32) -> (i32, i32) {
    %c0_i32 = arith.constant 0 : i32
    %c0_i32_0 = arith.constant 0 : i32
    %c0_i32_1 = arith.constant 0 : i32
    return %c0_i32, %c0_i32_0 : i32, i32
  }
  func.func @transform_8(%arg0: i32) -> (i32, i32) {
    %c0_i32 = arith.constant 0 : i32
    %c0_i32_0 = arith.constant 0 : i32
    %c0_i32_1 = arith.constant 0 : i32
    return %c0_i32, %c0_i32_0 : i32, i32
  }
  func.func @transform_9(%arg0: i32) -> (i32, i32) {
    %c0_i32 = arith.constant 0 : i32
    %c0_i32_0 = arith.constant 0 : i32
    %c0_i32_1 = arith.constant 0 : i32
    return %c0_i32, %c0_i32_0 : i32, i32
  }
  func.func @transform_10(%arg0: i32) -> (i32, i32) {
    %c0_i32 = arith.constant 0 : i32
    %c0_i32_0 = arith.constant 0 : i32
    %c0_i32_1 = arith.constant 0 : i32
    return %c0_i32, %c0_i32_0 : i32, i32
  }
  func.func @transform_11(%arg0: i32) -> (i32, i32, i32) {
    %c0_i32 = arith.constant 0 : i32
    %c0_i32_0 = arith.constant 0 : i32
    %c0_i32_1 = arith.constant 0 : i32
    return %c0_i32, %arg0, %c0_i32_0 : i32, i32, i32
  }
  func.func @transform_12(%arg0: i32) -> (i32, i32, i32) {
    %c0_i32 = arith.constant 0 : i32
    %c0_i32_0 = arith.constant 0 : i32
    %c0_i32_1 = arith.constant 0 : i32
    return %c0_i32, %arg0, %c0_i32_0 : i32, i32, i32
  }
  func.func @transform_13(%arg0: i32) -> (i32, i32, i32) {
    %c0_i32 = arith.constant 0 : i32
    %c0_i32_0 = arith.constant 0 : i32
    %c0_i32_1 = arith.constant 0 : i32
    return %c0_i32, %arg0, %c0_i32_0 : i32, i32, i32
  }
}

</mosaic_0001>

<llo_original>
// kernel: tpu_custom_call.1
$region0: #{tpu_custom_call.1}
  #allocation0 [shape = 'u32[]', space=smem, size = 0x4, offset = 0x4, fixed_abs, tag = 'smem constant byte address 0x4 - core index']
  #allocation1 [shape = 'u32[144,128]{1,0:T(1,128)}', space=vmem, size = 0x12000, scoped, tag = 'internal scratch']
  #allocation2 [shape = 'f32[8,8,512]{2,1,0:T(8,128)}', space=vmem, size = 0x20000, scoped, tag = 'scratch operand']
  #allocation3 [shape = 'f32[8,8,128]{2,1,0:T(8,128)}', space=vmem, size = 0x8000, scoped, tag = 'scratch operand']
  #allocation4 [shape = 'f32[8,8,128]{2,1,0:T(8,128)}', space=vmem, size = 0x8000, scoped, tag = 'scratch operand']
  %s0 = inlined_call_operand.hbm [shape: f32[8,8,128], index: 0, kind: input, shape index: {}]
  %s1 = inlined_call_operand.hbm [shape: f32[2,8,128], index: 1, kind: input, shape index: {}]
  %s2 = inlined_call_operand.hbm [shape: f32[2,8,128], index: 2, kind: input, shape index: {}]
  %s3 = inlined_call_operand.hbm [shape: bf16[128,512], index: 3, kind: input, shape index: {}]
  %s4 = inlined_call_operand.hbm [shape: bf16[128,512], index: 4, kind: input, shape index: {}]
  %s5 = inlined_call_operand.hbm [shape: f32[1,512], index: 5, kind: input, shape index: {}]
  %s6 = inlined_call_operand.hbm [shape: bf16[128,512], index: 6, kind: input, shape index: {}]
  %s7 = inlined_call_operand.hbm [shape: bf16[128,512], index: 7, kind: input, shape index: {}]
  %s8 = inlined_call_operand.hbm [shape: f32[1,512], index: 8, kind: input, shape index: {}]
  %s9 = inlined_call_operand.hbm [shape: bf16[128,128], index: 9, kind: input, shape index: {}]
  %s10 = inlined_call_operand.hbm [shape: f32[1,128], index: 10, kind: input, shape index: {}]
  %s11 = inlined_call_operand.hbm [shape: f32[8,8,128], index: 11, kind: output, shape index: {0}]
  %s12 = inlined_call_operand.hbm [shape: f32[2,8,128], index: 12, kind: output, shape index: {1}]
  %s13 = inlined_call_operand.hbm [shape: f32[2,8,128], index: 13, kind: output, shape index: {2}]
  %14 = xla_tuple %s11, %s12, %s13
  %s15 = sld [smem:[#allocation0]]
  $region114: #{tpu_custom_call.1} parent=0
    _
  %s17 = ssub.s32 1, %s15
  %s18 = scalar_select 0, %s17, %s15
  $region1: #{tpu_custom_call.1} parent=0
    #allocation5 [shape = 'u8[32768]{0}', space=vmem, size = 0x8000, scoped, tag = 'input window, operand 0, single buffered']
    #allocation6 [shape = 's32[1]{0}', space=sflag, size = 0x4, scoped, tag = 'scoped memory for tpu_custom_call.1']
    #allocation7 [shape = 's32[1]{0}', space=sflag, size = 0x4, scoped, tag = 'scoped memory for tpu_custom_call.1']
    #allocation8 [shape = 'u8[8192]{0}', space=vmem, size = 0x2000, scoped, tag = 'input window, operand 1, single buffered']
    #allocation9 [shape = 's32[1]{0}', space=sflag, size = 0x4, scoped, tag = 'scoped memory for tpu_custom_call.1']
    #allocation10 [shape = 'u8[8192]{0}', space=vmem, size = 0x2000, scoped, tag = 'input window, operand 2, single buffered']
    #allocation11 [shape = 'u8[131072]{0}', space=vmem, size = 0x20000, scoped, tag = 'input window, operand 3, single buffered']
    #allocation12 [shape = 's32[1]{0}', space=sflag, size = 0x4, scoped, tag = 'scoped memory for tpu_custom_call.1']
    #allocation13 [shape = 'u8[131072]{0}', space=vmem, size = 0x20000, scoped, tag = 'input window, operand 4, single buffered']
    #allocation14 [shape = 'u8[2048]{0}', space=vmem, size = 0x800, scoped, tag = 'input window, operand 5, single buffered']
    #allocation15 [shape = 's32[1]{0}', space=sflag, size = 0x4, scoped, tag = 'scoped memory for tpu_custom_call.1']
    #allocation16 [shape = 'u8[131072]{0}', space=vmem, size = 0x20000, scoped, tag = 'input window, operand 6, single buffered']
    #allocation17 [shape = 'u8[131072]{0}', space=vmem, size = 0x20000, scoped, tag = 'input window, operand 7, single buffered']
    #allocation18 [shape = 's32[1]{0}', space=sflag, size = 0x4, scoped, tag = 'scoped memory for tpu_custom_call.1']
    #allocation19 [shape = 'u8[2048]{0}', space=vmem, size = 0x800, scoped, tag = 'input window, operand 8, single buffered']
    #allocation20 [shape = 'u8[32768]{0}', space=vmem, size = 0x8000, scoped, tag = 'input window, operand 9, single buffered']
    #allocation21 [shape = 's32[1]{0}', space=sflag, size = 0x4, scoped, tag = 'scoped memory for tpu_custom_call.1']
    #allocation22 [shape = 'u8[512]{0}', space=vmem, size = 0x400, scoped, tag = 'input window, operand 10, single buffered']
    #allocation23 [shape = 'u8[32768]{0}', space=vmem, size = 0x8000, scoped, tag = 'output window, operand 0, single buffered']
    #allocation24 [shape = 'u8[8192]{0}', space=vmem, size = 0x2000, scoped, tag = 'output window, operand 1, single buffered']
    #allocation25 [shape = 's32[1]{0}', space=sflag, size = 0x4, scoped, tag = 'scoped memory for tpu_custom_call.1']
    #allocation26 [shape = 'u8[8192]{0}', space=vmem, size = 0x2000, scoped, tag = 'output window, operand 2, single buffered']
    %19 = vsyncpa [#allocation6], 0
    %20 = vsyncpa [#allocation9], 0
    %21 = vsyncpa [#allocation12], 0
    %22 = vsyncpa [#allocation15], 0
    %23 = vsyncpa [#allocation18], 0
    %24 = vsyncpa [#allocation21], 0
    %25 = vsyncpa [#allocation7], 0
    %26 = vsyncpa [#allocation25], 0
    // Predicated region
    $region2: #{tpu_custom_call.1} parent=1 // pred_check
      _
    $region3: #{tpu_custom_call.1} parent=1 // pred_check_branch
      %28 = sbr.rel (0) target = $region5
    $region4: #{tpu_custom_call.1} parent=1 // pred_region
      %s30 = ssub.s32 1024, 1024
      %31 = vsyncadd [#allocation6], %s30
      %s32 = sshll.u32 [#allocation5], 4
      %s33 = int_to_ptr.vmem [resolvable:$true] %s32
      %38 = dma.hbm_to_vmem [thread:$0]  %s0, 1024, %s33, [#allocation6], 128, 128, 8
    $region5: #{tpu_custom_call.1} parent=1 // pred_fallthru
      _
    // Predicated region
    $region6: #{tpu_custom_call.1} parent=1 // pred_check
      _
    $region7: #{tpu_custom_call.1} parent=1 // pred_check_branch
      %40 = sbr.rel (0) target = $region9
    $region8: #{tpu_custom_call.1} parent=1 // pred_region
      %s42 = ssub.s32 256, 256
      %43 = vsyncadd [#allocation9], %s42
      %s44 = sshll.u32 [#allocation8], 4
      %s45 = int_to_ptr.vmem [resolvable:$true] %s44
      %50 = dma.hbm_to_vmem [thread:$0]  %s1, 256, %s45, [#allocation9], 128, 128, 8
    $region9: #{tpu_custom_call.1} parent=1 // pred_fallthru
      _
    // Predicated region
    $region10: #{tpu_custom_call.1} parent=1 // pred_check
      _
    $region11: #{tpu_custom_call.1} parent=1 // pred_check_branch
      %52 = sbr.rel (0) target = $region13
    $region12: #{tpu_custom_call.1} parent=1 // pred_region
      %s54 = ssub.s32 256, 256
      %55 = vsyncadd [#allocation9], %s54
      %s56 = sshll.u32 [#allocation10], 4
      %s57 = int_to_ptr.vmem [resolvable:$true] %s56
      %62 = dma.hbm_to_vmem [thread:$0]  %s2, 256, %s57, [#allocation9], 128, 128, 8
    $region13: #{tpu_custom_call.1} parent=1 // pred_fallthru
      _
    // Predicated region
    $region14: #{tpu_custom_call.1} parent=1 // pred_check
      _
    $region15: #{tpu_custom_call.1} parent=1 // pred_check_branch
      %64 = sbr.rel (0) target = $region17
    $region16: #{tpu_custom_call.1} parent=1 // pred_region
      %s66 = ssub.s32 4096, 4096
      %67 = vsyncadd [#allocation12], %s66
      %s68 = sshll.u32 [#allocation11], 4
      %s69 = int_to_ptr.vmem [resolvable:$true] %s68
      %74 = dma.hbm_to_vmem [thread:$0]  %s3, 4096, %s69, [#allocation12], 256, 256, 16
    $region17: #{tpu_custom_call.1} parent=1 // pred_fallthru
      _
    // Predicated region
    $region18: #{tpu_custom_call.1} parent=1 // pred_check
      _
    $region19: #{tpu_custom_call.1} parent=1 // pred_check_branch
      %76 = sbr.rel (0) target = $region21
    $region20: #{tpu_custom_call.1} parent=1 // pred_region
      %s78 = ssub.s32 4096, 4096
      %79 = vsyncadd [#allocation12], %s78
      %s80 = sshll.u32 [#allocation13], 4
      %s81 = int_to_ptr.vmem [resolvable:$true] %s80
      %86 = dma.hbm_to_vmem [thread:$0]  %s4, 4096, %s81, [#allocation12], 256, 256, 16
    $region21: #{tpu_custom_call.1} parent=1 // pred_fallthru
      _
    // Predicated region
    $region22: #{tpu_custom_call.1} parent=1 // pred_check
      _
    $region23: #{tpu_custom_call.1} parent=1 // pred_check_branch
      %88 = sbr.rel (0) target = $region25
    $region24: #{tpu_custom_call.1} parent=1 // pred_region
      %s90 = ssub.s32 64, 64
      %91 = vsyncadd [#allocation15], %s90
      %s93 = sshll.u32 [#allocation14], 4
      %s94 = int_to_ptr.vmem [resolvable:$true] %s93
      %96 = dma.hbm_to_vmem [thread:$0]  %s5, 64, %s94, [#allocation15]
    $region25: #{tpu_custom_call.1} parent=1 // pred_fallthru
      _
    // Predicated region
    $region26: #{tpu_custom_call.1} parent=1 // pred_check
      _
    $region27: #{tpu_custom_call.1} parent=1 // pred_check_branch
      %98 = sbr.rel (0) target = $region29
    $region28: #{tpu_custom_call.1} parent=1 // pred_region
      %s100 = ssub.s32 4096, 4096
      %101 = vsyncadd [#allocation15], %s100
      %s102 = sshll.u32 [#allocation16], 4
      %s103 = int_to_ptr.vmem [resolvable:$true] %s102
      %108 = dma.hbm_to_vmem [thread:$0]  %s6, 4096, %s103, [#allocation15], 256, 256, 16
    $region29: #{tpu_custom_call.1} parent=1 // pred_fallthru
      _
    // Predicated region
    $region30: #{tpu_custom_call.1} parent=1 // pred_check
      _
    $region31: #{tpu_custom_call.1} parent=1 // pred_check_branch
      %110 = sbr.rel (0) target = $region33
    $region32: #{tpu_custom_call.1} parent=1 // pred_region
      %s112 = ssub.s32 4096, 4096
      %113 = vsyncadd [#allocation18], %s112
      %s114 = sshll.u32 [#allocation17], 4
      %s115 = int_to_ptr.vmem [resolvable:$true] %s114
      %120 = dma.hbm_to_vmem [thread:$0]  %s7, 4096, %s115, [#allocation18], 256, 256, 16
    $region33: #{tpu_custom_call.1} parent=1 // pred_fallthru
      _
    // Predicated region
    $region34: #{tpu_custom_call.1} parent=1 // pred_check
      _
    $region35: #{tpu_custom_call.1} parent=1 // pred_check_branch
      %122 = sbr.rel (0) target = $region37
    $region36: #{tpu_custom_call.1} parent=1 // pred_region
      %s124 = ssub.s32 64, 64
      %125 = vsyncadd [#allocation18], %s124
      %s127 = sshll.u32 [#allocation19], 4
      %s128 = int_to_ptr.vmem [resolvable:$true] %s127
      %130 = dma.hbm_to_vmem [thread:$0]  %s8, 64, %s128, [#allocation18]
    $region37: #{tpu_custom_call.1} parent=1 // pred_fallthru
      _
    // Predicated region
    $region38: #{tpu_custom_call.1} parent=1 // pred_check
      _
    $region39: #{tpu_custom_call.1} parent=1 // pred_check_branch
      %132 = sbr.rel (0) target = $region41
    $region40: #{tpu_custom_call.1} parent=1 // pred_region
      %s134 = ssub.s32 1024, 1024
      %135 = vsyncadd [#allocation21], %s134
      %s136 = sshll.u32 [#allocation20], 4
      %s137 = int_to_ptr.vmem [resolvable:$true] %s136
      %142 = dma.hbm_to_vmem [thread:$0]  %s9, 1024, %s137, [#allocation21], 64, 64, 4
    $region41: #{tpu_custom_call.1} parent=1 // pred_fallthru
      _
    // Predicated region
    $region42: #{tpu_custom_call.1} parent=1 // pred_check
      _
    $region43: #{tpu_custom_call.1} parent=1 // pred_check_branch
      %144 = sbr.rel (0) target = $region45
    $region44: #{tpu_custom_call.1} parent=1 // pred_region
      %s146 = ssub.s32 16, 16
      %147 = vsyncadd [#allocation21], %s146
      %s149 = sshll.u32 [#allocation22], 4
      %s150 = int_to_ptr.vmem [resolvable:$true] %s149
      %152 = dma.hbm_to_vmem [thread:$0]  %s10, 16, %s150, [#allocation21]
    $region45: #{tpu_custom_call.1} parent=1 // pred_fallthru
      _
    // Predicated region
    $region46: #{tpu_custom_call.1} parent=1 // pred_check
      _
    $region47: #{tpu_custom_call.1} parent=1 // pred_check_branch
      %154 = sbr.rel (0) target = $region49
    $region48: #{tpu_custom_call.1} parent=1 // pred_region
      %155 = dma.done [#allocation6], 1024
    $region49: #{tpu_custom_call.1} parent=1 // pred_fallthru
      _
    // Predicated region
    $region50: #{tpu_custom_call.1} parent=1 // pred_check
      _
    $region51: #{tpu_custom_call.1} parent=1 // pred_check_branch
      %157 = sbr.rel (0) target = $region53
    $region52: #{tpu_custom_call.1} parent=1 // pred_region
      %158 = dma.done [#allocation9], 256
    $region53: #{tpu_custom_call.1} parent=1 // pred_fallthru
      _
    // Predicated region
    $region54: #{tpu_custom_call.1} parent=1 // pred_check
      _
    $region55: #{tpu_custom_call.1} parent=1 // pred_check_branch
      %160 = sbr.rel (0) target = $region57
    $region56: #{tpu_custom_call.1} parent=1 // pred_region
      %161 = dma.done [#allocation9], 256
    $region57: #{tpu_custom_call.1} parent=1 // pred_fallthru
      _
    // Predicated region
    $region58: #{tpu_custom_call.1} parent=1 // pred_check
      _
    $region59: #{tpu_custom_call.1} parent=1 // pred_check_branch
      %163 = sbr.rel (0) target = $region61
    $region60: #{tpu_custom_call.1} parent=1 // pred_region
      %164 = dma.done [#allocation12], 4096
    $region61: #{tpu_custom_call.1} parent=1 // pred_fallthru
      _
    // Predicated region
    $region62: #{tpu_custom_call.1} parent=1 // pred_check
      _
    $region63: #{tpu_custom_call.1} parent=1 // pred_check_branch
      %166 = sbr.rel (0) target = $region65
    $region64: #{tpu_custom_call.1} parent=1 // pred_region
      %167 = dma.done [#allocation12], 4096
    $region65: #{tpu_custom_call.1} parent=1 // pred_fallthru
      _
    // Predicated region
    $region66: #{tpu_custom_call.1} parent=1 // pred_check
      _
    $region67: #{tpu_custom_call.1} parent=1 // pred_check_branch
      %169 = sbr.rel (0) target = $region69
    $region68: #{tpu_custom_call.1} parent=1 // pred_region
      %170 = dma.done [#allocation15], 64
    $region69: #{tpu_custom_call.1} parent=1 // pred_fallthru
      _
    // Predicated region
    $region70: #{tpu_custom_call.1} parent=1 // pred_check
      _
    $region71: #{tpu_custom_call.1} parent=1 // pred_check_branch
      %172 = sbr.rel (0) target = $region73
    $region72: #{tpu_custom_call.1} parent=1 // pred_region
      %173 = dma.done [#allocation15], 4096
    $region73: #{tpu_custom_call.1} parent=1 // pred_fallthru
      _
    // Predicated region
    $region74: #{tpu_custom_call.1} parent=1 // pred_check
      _
    $region75: #{tpu_custom_call.1} parent=1 // pred_check_branch
      %175 = sbr.rel (0) target = $region77
    $region76: #{tpu_custom_call.1} parent=1 // pred_region
      %176 = dma.done [#allocation18], 4096
    $region77: #{tpu_custom_call.1} parent=1 // pred_fallthru
      _
    // Predicated region
    $region78: #{tpu_custom_call.1} parent=1 // pred_check
      _
    $region79: #{tpu_custom_call.1} parent=1 // pred_check_branch
      %178 = sbr.rel (0) target = $region81
    $region80: #{tpu_custom_call.1} parent=1 // pred_region
      %179 = dma.done [#allocation18], 64
    $region81: #{tpu_custom_call.1} parent=1 // pred_fallthru
      _
    // Predicated region
    $region82: #{tpu_custom_call.1} parent=1 // pred_check
      _
    $region83: #{tpu_custom_call.1} parent=1 // pred_check_branch
      %181 = sbr.rel (0) target = $region85
    $region84: #{tpu_custom_call.1} parent=1 // pred_region
      %182 = dma.done [#allocation21], 1024
    $region85: #{tpu_custom_call.1} parent=1 // pred_fallthru
      _
    // Predicated region
    $region86: #{tpu_custom_call.1} parent=1 // pred_check
      _
    $region87: #{tpu_custom_call.1} parent=1 // pred_check_branch
      %184 = sbr.rel (0) target = $region89
    $region88: #{tpu_custom_call.1} parent=1 // pred_region
      %185 = dma.done [#allocation21], 16
    $region89: #{tpu_custom_call.1} parent=1 // pred_fallthru
      _
    %v187 = vld [vmem:[#allocation5] sm:$0xff]
    %v188 = vld [vmem:[#allocation5 + $0x8] sm:$0xff]
    %v189 = vld [vmem:[#allocation5 + $0x10] sm:$0xff]
    %v190 = vld [vmem:[#allocation5 + $0x18] sm:$0xff]
    %v191 = vld [vmem:[#allocation5 + $0x20] sm:$0xff]
    %v192 = vld [vmem:[#allocation5 + $0x28] sm:$0xff]
    %v193 = vld [vmem:[#allocation5 + $0x30] sm:$0xff]
    %v194 = vld [vmem:[#allocation5 + $0x38] sm:$0xff]
    %v195 = vpack.c.bf16 %v188, %v187
    %v196 = vpack.c.bf16 %v190, %v189
    %v197 = vpack.c.bf16 %v192, %v191
    %v198 = vpack.c.bf16 %v194, %v193
    %v199 = vld [vmem:[#allocation11] sm:$0xff]
    %v200 = vld [vmem:[#allocation11 + $0x8] sm:$0xff]
    %v201 = vld [vmem:[#allocation11 + $0x10] sm:$0xff]
    %v202 = vld [vmem:[#allocation11 + $0x18] sm:$0xff]
    %v203 = vld [vmem:[#allocation11 + $0x20] sm:$0xff]
    %v204 = vld [vmem:[#allocation11 + $0x28] sm:$0xff]
    %v205 = vld [vmem:[#allocation11 + $0x30] sm:$0xff]
    %v206 = vld [vmem:[#allocation11 + $0x38] sm:$0xff]
    %v207 = vld [vmem:[#allocation11 + $0x40] sm:$0xff]
    %v208 = vld [vmem:[#allocation11 + $0x48] sm:$0xff]
    %v209 = vld [vmem:[#allocation11 + $0x50] sm:$0xff]
    %v210 = vld [vmem:[#allocation11 + $0x58] sm:$0xff]
    %v211 = vld [vmem:[#allocation11 + $0x60] sm:$0xff]
    %v212 = vld [vmem:[#allocation11 + $0x68] sm:$0xff]
    %v213 = vld [vmem:[#allocation11 + $0x70] sm:$0xff]
    %v214 = vld [vmem:[#allocation11 + $0x78] sm:$0xff]
    %v215 = vld [vmem:[#allocation11 + $0x80] sm:$0xff]
    %v216 = vld [vmem:[#allocation11 + $0x88] sm:$0xff]
    %v217 = vld [vmem:[#allocation11 + $0x90] sm:$0xff]
    %v218 = vld [vmem:[#allocation11 + $0x98] sm:$0xff]
    %v219 = vld [vmem:[#allocation11 + $0xa0] sm:$0xff]
    %v220 = vld [vmem:[#allocation11 + $0xa8] sm:$0xff]
    %v221 = vld [vmem:[#allocation11 + $0xb0] sm:$0xff]
    %v222 = vld [vmem:[#allocation11 + $0xb8] sm:$0xff]
    %v223 = vld [vmem:[#allocation11 + $0xc0] sm:$0xff]
    %v224 = vld [vmem:[#allocation11 + $0xc8] sm:$0xff]
    %v225 = vld [vmem:[#allocation11 + $0xd0] sm:$0xff]
    %v226 = vld [vmem:[#allocation11 + $0xd8] sm:$0xff]
    %v227 = vld [vmem:[#allocation11 + $0xe0] sm:$0xff]
    %v228 = vld [vmem:[#allocation11 + $0xe8] sm:$0xff]
    %v229 = vld [vmem:[#allocation11 + $0xf0] sm:$0xff]
    %v230 = vld [vmem:[#allocation11 + $0xf8] sm:$0xff]
    %v231 = vld [vmem:[#allocation13] sm:$0xff]
    %v232 = vld [vmem:[#allocation13 + $0x8] sm:$0xff]
    %v233 = vld [vmem:[#allocation13 + $0x10] sm:$0xff]
    %v234 = vld [vmem:[#allocation13 + $0x18] sm:$0xff]
    %v235 = vld [vmem:[#allocation13 + $0x20] sm:$0xff]
    %v236 = vld [vmem:[#allocation13 + $0x28] sm:$0xff]
    %v237 = vld [vmem:[#allocation13 + $0x30] sm:$0xff]
    %v238 = vld [vmem:[#allocation13 + $0x38] sm:$0xff]
    %v239 = vld [vmem:[#allocation13 + $0x40] sm:$0xff]
    %v240 = vld [vmem:[#allocation13 + $0x48] sm:$0xff]
    %v241 = vld [vmem:[#allocation13 + $0x50] sm:$0xff]
    %v242 = vld [vmem:[#allocation13 + $0x58] sm:$0xff]
    %v243 = vld [vmem:[#allocation13 + $0x60] sm:$0xff]
    %v244 = vld [vmem:[#allocation13 + $0x68] sm:$0xff]
    %v245 = vld [vmem:[#allocation13 + $0x70] sm:$0xff]
    %v246 = vld [vmem:[#allocation13 + $0x78] sm:$0xff]
    %v247 = vld [vmem:[#allocation13 + $0x80] sm:$0xff]
    %v248 = vld [vmem:[#allocation13 + $0x88] sm:$0xff]
    %v249 = vld [vmem:[#allocation13 + $0x90] sm:$0xff]
    %v250 = vld [vmem:[#allocation13 + $0x98] sm:$0xff]
    %v251 = vld [vmem:[#allocation13 + $0xa0] sm:$0xff]
    %v252 = vld [vmem:[#allocation13 + $0xa8] sm:$0xff]
    %v253 = vld [vmem:[#allocation13 + $0xb0] sm:$0xff]
    %v254 = vld [vmem:[#allocation13 + $0xb8] sm:$0xff]
    %v255 = vld [vmem:[#allocation13 + $0xc0] sm:$0xff]
    %v256 = vld [vmem:[#allocation13 + $0xc8] sm:$0xff]
    %v257 = vld [vmem:[#allocation13 + $0xd0] sm:$0xff]
    %v258 = vld [vmem:[#allocation13 + $0xd8] sm:$0xff]
    %v259 = vld [vmem:[#allocation13 + $0xe0] sm:$0xff]
    %v260 = vld [vmem:[#allocation13 + $0xe8] sm:$0xff]
    %v261 = vld [vmem:[#allocation13 + $0xf0] sm:$0xff]
    %v262 = vld [vmem:[#allocation13 + $0xf8] sm:$0xff]
    %v263 = vld [vmem:[#allocation14] sm:$0xf]
    %v265 = vlaneseq
    %v266 = vshrl.u32 %v265, 7
    %v267 = vsub.s32 0, %v266
    %v268 = vrot.slane %v263, %v267
    %v269 = vlaneseq
    %v270 = vshrl.u32 %v269, 7
    %v271 = vsub.s32 1, %v270
    %v272 = vrot.slane %v263, %v271
    %v273 = vlaneseq
    %v274 = vshrl.u32 %v273, 7
    %v275 = vsub.s32 2, %v274
    %v276 = vrot.slane %v263, %v275
    %v277 = vlaneseq
    %v278 = vshrl.u32 %v277, 7
    %v279 = vsub.s32 3, %v278
    %v280 = vrot.slane %v263, %v279
    %v317 = vunpack.c.l.b16 %v199
    %v318 = vunpack.c.h.b16 %v199
    %v319 = vunpack.c.l.b16 %v200
    %v320 = vunpack.c.h.b16 %v200
    %v321 = vunpack.c.l.b16 %v201
    %v322 = vunpack.c.h.b16 %v201
    %v323 = vunpack.c.l.b16 %v202
    %v324 = vunpack.c.h.b16 %v202
    %v325 = vunpack.c.l.b16 %v203
    %v326 = vunpack.c.h.b16 %v203
    %v327 = vunpack.c.l.b16 %v204
    %v328 = vunpack.c.h.b16 %v204
    %v329 = vunpack.c.l.b16 %v205
    %v330 = vunpack.c.h.b16 %v205
    %v331 = vunpack.c.l.b16 %v206
    %v332 = vunpack.c.h.b16 %v206
    %v333 = vunpack.c.l.b16 %v207
    %v334 = vunpack.c.h.b16 %v207
    %v335 = vunpack.c.l.b16 %v208
    %v336 = vunpack.c.h.b16 %v208
    %v337 = vunpack.c.l.b16 %v209
    %v338 = vunpack.c.h.b16 %v209
    %v339 = vunpack.c.l.b16 %v210
    %v340 = vunpack.c.h.b16 %v210
    %v341 = vunpack.c.l.b16 %v211
    %v342 = vunpack.c.h.b16 %v211
    %v343 = vunpack.c.l.b16 %v212
    %v344 = vunpack.c.h.b16 %v212
    %v345 = vunpack.c.l.b16 %v213
    %v346 = vunpack.c.h.b16 %v213
    %v347 = vunpack.c.l.b16 %v214
    %v348 = vunpack.c.h.b16 %v214
    %v349 = vunpack.c.l.b16 %v215
    %v350 = vunpack.c.h.b16 %v215
    %v351 = vunpack.c.l.b16 %v216
    %v352 = vunpack.c.h.b16 %v216
    %v353 = vunpack.c.l.b16 %v217
    %v354 = vunpack.c.h.b16 %v217
    %v355 = vunpack.c.l.b16 %v218
    %v356 = vunpack.c.h.b16 %v218
    %v357 = vunpack.c.l.b16 %v219
    %v358 = vunpack.c.h.b16 %v219
    %v359 = vunpack.c.l.b16 %v220
    %v360 = vunpack.c.h.b16 %v220
    %v361 = vunpack.c.l.b16 %v221
    %v362 = vunpack.c.h.b16 %v221
    %v363 = vunpack.c.l.b16 %v222
    %v364 = vunpack.c.h.b16 %v222
    %v365 = vunpack.c.l.b16 %v223
    %v366 = vunpack.c.h.b16 %v223
    %v367 = vunpack.c.l.b16 %v224
    %v368 = vunpack.c.h.b16 %v224
    %v369 = vunpack.c.l.b16 %v225
    %v370 = vunpack.c.h.b16 %v225
    %v371 = vunpack.c.l.b16 %v226
    %v372 = vunpack.c.h.b16 %v226
    %v373 = vunpack.c.l.b16 %v227
    %v374 = vunpack.c.h.b16 %v227
    %v375 = vunpack.c.l.b16 %v228
    %v376 = vunpack.c.h.b16 %v228
    %v377 = vunpack.c.l.b16 %v229
    %v378 = vunpack.c.h.b16 %v229
    %v379 = vunpack.c.l.b16 %v230
    %v380 = vunpack.c.h.b16 %v230
    %v381 = vpack.c.b16 %v321, %v317
    %v382 = vpack.c.b16 %v322, %v318
    %v383 = vpack.c.b16 %v323, %v319
    %v384 = vpack.c.b16 %v324, %v320
    %v385 = vpack.c.b16 %v329, %v325
    %v386 = vpack.c.b16 %v330, %v326
    %v387 = vpack.c.b16 %v331, %v327
    %v388 = vpack.c.b16 %v332, %v328
    %v389 = vpack.c.b16 %v337, %v333
    %v390 = vpack.c.b16 %v338, %v334
    %v391 = vpack.c.b16 %v339, %v335
    %v392 = vpack.c.b16 %v340, %v336
    %v393 = vpack.c.b16 %v345, %v341
    %v394 = vpack.c.b16 %v346, %v342
    %v395 = vpack.c.b16 %v347, %v343
    %v396 = vpack.c.b16 %v348, %v344
    %v397 = vpack.c.b16 %v353, %v349
    %v398 = vpack.c.b16 %v354, %v350
    %v399 = vpack.c.b16 %v355, %v351
    %v400 = vpack.c.b16 %v356, %v352
    %v401 = vpack.c.b16 %v361, %v357
    %v402 = vpack.c.b16 %v362, %v358
    %v403 = vpack.c.b16 %v363, %v359
    %v404 = vpack.c.b16 %v364, %v360
    %v405 = vpack.c.b16 %v369, %v365
    %v406 = vpack.c.b16 %v370, %v366
    %v407 = vpack.c.b16 %v371, %v367
    %v408 = vpack.c.b16 %v372, %v368
    %v409 = vpack.c.b16 %v377, %v373
    %v410 = vpack.c.b16 %v378, %v374
    %v411 = vpack.c.b16 %v379, %v375
    %v412 = vpack.c.b16 %v380, %v376
    %445 = vmatprep.subr.bf16.mxu0 %v382
    %446 = vmatpush1.bf16.msra.mxu0 %v381
    %447 = vmatprep.subr.bf16.mxu0 %v386
    %448 = vmatpush1.bf16.msra.mxu0 %v385
    %449 = vmatprep.subr.bf16.mxu0 %v390
    %450 = vmatpush1.bf16.msra.mxu0 %v389
    %451 = vmatprep.subr.bf16.mxu0 %v394
    %452 = vmatpush1.bf16.msra.mxu0 %v393
    %453 = vmatprep.subr.bf16.mxu0 %v398
    %454 = vmatpush1.bf16.msra.mxu0 %v397
    %455 = vmatprep.subr.bf16.mxu0 %v402
    %456 = vmatpush1.bf16.msra.mxu0 %v401
    %457 = vmatprep.subr.bf16.mxu0 %v406
    %458 = vmatpush1.bf16.msra.mxu0 %v405
    %459 = vmatprep.subr.bf16.mxu0 %v410
    %460 = vmatpush1.bf16.msra.mxu0 %v409
    %461 = vmatprep.subr.bf16.mxu0 0
    %462 = vmatpush1.bf16.msra.mxu0 0
    %463 = vmatprep.subr.bf16.mxu0 0
    %464 = vmatpush1.bf16.msra.mxu0 0
    %465 = vmatprep.subr.bf16.mxu0 0
    %466 = vmatpush1.bf16.msra.mxu0 0
    %467 = vmatprep.subr.bf16.mxu0 0
    %468 = vmatpush1.bf16.msra.mxu0 0
    %469 = vmatprep.subr.bf16.mxu0 0
    %470 = vmatpush1.bf16.msra.mxu0 0
    %471 = vmatprep.subr.bf16.mxu0 0
    %472 = vmatpush1.bf16.msra.mxu0 0
    %473 = vmatprep.subr.bf16.mxu0 0
    %474 = vmatpush1.bf16.msra.mxu0 0
    %475 = vmatprep.subr.bf16.mxu0 0
    %476 = vmatpush1.bf16.msra.mxu0 0
    %477 = vmatprep.mubr.bf16.mxu0 0
    %478 = vmatmul.mubr.bf16.gmra.mrb[0].mxu0 %v195
    %v479 = vpop.f32.mrb[0].mxu0
    %v480 = vadd.f32 %v268, %v479
    %v481 = vpop.f32.mrb[0].mxu0
    %v482 = vadd.f32 %v272, %v481
    %v483 = vpop.f32.mrb[0].mxu0
    %v484 = vadd.f32 %v268, %v483
    %v485 = vpop.f32.mrb[0].mxu0
    %v486 = vadd.f32 %v272, %v485
    %487 = vmatprep.mubr.bf16.mxu0 0
    %488 = vmatmul.mubr.bf16.gmra.mrb[0].mxu0 %v196
    %v489 = vpop.f32.mrb[0].mxu0
    %v490 = vadd.f32 %v268, %v489
    %v491 = vpop.f32.mrb[0].mxu0
    %v492 = vadd.f32 %v272, %v491
    %v493 = vpop.f32.mrb[0].mxu0
    %v494 = vadd.f32 %v268, %v493
    %v495 = vpop.f32.mrb[0].mxu0
    %v496 = vadd.f32 %v272, %v495
    %497 = vmatprep.mubr.bf16.mxu0 0
    %498 = vmatmul.mubr.bf16.gmra.mrb[0].mxu0 %v197
    %v499 = vpop.f32.mrb[0].mxu0
    %v500 = vadd.f32 %v268, %v499
    %v501 = vpop.f32.mrb[0].mxu0
    %v502 = vadd.f32 %v272, %v501
    %v503 = vpop.f32.mrb[0].mxu0
    %v504 = vadd.f32 %v268, %v503
    %v505 = vpop.f32.mrb[0].mxu0
    %v506 = vadd.f32 %v272, %v505
    %507 = vmatprep.mubr.bf16.mxu0 0
    %508 = vmatmul.mubr.bf16.gmra.mrb[0].mxu0 %v198
    %v509 = vpop.f32.mrb[0].mxu0
    %v510 = vadd.f32 %v268, %v509
    %v511 = vpop.f32.mrb[0].mxu0
    %v512 = vadd.f32 %v272, %v511
    %v513 = vpop.f32.mrb[0].mxu0
    %v514 = vadd.f32 %v268, %v513
    %v515 = vpop.f32.mrb[0].mxu0
    %v516 = vadd.f32 %v272, %v515
    %517 = vdwg.mxu0
    %518 = vmatprep.subr.bf16.mxu0 %v384
    %519 = vmatpush1.bf16.msra.mxu0 %v383
    %520 = vmatprep.subr.bf16.mxu0 %v388
    %521 = vmatpush1.bf16.msra.mxu0 %v387
    %522 = vmatprep.subr.bf16.mxu0 %v392
    %523 = vmatpush1.bf16.msra.mxu0 %v391
    %524 = vmatprep.subr.bf16.mxu0 %v396
    %525 = vmatpush1.bf16.msra.mxu0 %v395
    %526 = vmatprep.subr.bf16.mxu0 %v400
    %527 = vmatpush1.bf16.msra.mxu0 %v399
    %528 = vmatprep.subr.bf16.mxu0 %v404
    %529 = vmatpush1.bf16.msra.mxu0 %v403
    %530 = vmatprep.subr.bf16.mxu0 %v408
    %531 = vmatpush1.bf16.msra.mxu0 %v407
    %532 = vmatprep.subr.bf16.mxu0 %v412
    %533 = vmatpush1.bf16.msra.mxu0 %v411
    %534 = vmatprep.subr.bf16.mxu0 0
    %535 = vmatpush1.bf16.msra.mxu0 0
    %536 = vmatprep.subr.bf16.mxu0 0
    %537 = vmatpush1.bf16.msra.mxu0 0
    %538 = vmatprep.subr.bf16.mxu0 0
    %539 = vmatpush1.bf16.msra.mxu0 0
    %540 = vmatprep.subr.bf16.mxu0 0
    %541 = vmatpush1.bf16.msra.mxu0 0
    %542 = vmatprep.subr.bf16.mxu0 0
    %543 = vmatpush1.bf16.msra.mxu0 0
    %544 = vmatprep.subr.bf16.mxu0 0
    %545 = vmatpush1.bf16.msra.mxu0 0
    %546 = vmatprep.subr.bf16.mxu0 0
    %547 = vmatpush1.bf16.msra.mxu0 0
    %548 = vmatprep.subr.bf16.mxu0 0
    %549 = vmatpush1.bf16.msra.mxu0 0
    %550 = vmatprep.mubr.bf16.mxu0 0
    %551 = vmatmul.mubr.bf16.gmra.mrb[0].mxu0 %v195
    %v552 = vpop.f32.mrb[0].mxu0
    %v553 = vadd.f32 %v276, %v552
    %v554 = vpop.f32.mrb[0].mxu0
    %v555 = vadd.f32 %v280, %v554
    %v556 = vpop.f32.mrb[0].mxu0
    %v557 = vadd.f32 %v276, %v556
    %v558 = vpop.f32.mrb[0].mxu0
    %v559 = vadd.f32 %v280, %v558
    %560 = vmatprep.mubr.bf16.mxu0 0
    %561 = vmatmul.mubr.bf16.gmra.mrb[0].mxu0 %v196
    %v562 = vpop.f32.mrb[0].mxu0
    %v563 = vadd.f32 %v276, %v562
    %v564 = vpop.f32.mrb[0].mxu0
    %v565 = vadd.f32 %v280, %v564
    %v566 = vpop.f32.mrb[0].mxu0
    %v567 = vadd.f32 %v276, %v566
    %v568 = vpop.f32.mrb[0].mxu0
    %v569 = vadd.f32 %v280, %v568
    %570 = vmatprep.mubr.bf16.mxu0 0
    %571 = vmatmul.mubr.bf16.gmra.mrb[0].mxu0 %v197
    %v572 = vpop.f32.mrb[0].mxu0
    %v573 = vadd.f32 %v276, %v572
    %v574 = vpop.f32.mrb[0].mxu0
    %v575 = vadd.f32 %v280, %v574
    %v576 = vpop.f32.mrb[0].mxu0
    %v577 = vadd.f32 %v276, %v576
    %v578 = vpop.f32.mrb[0].mxu0
    %v579 = vadd.f32 %v280, %v578
    %580 = vmatprep.mubr.bf16.mxu0 0
    %581 = vmatmul.mubr.bf16.gmra.mrb[0].mxu0 %v198
    %v582 = vpop.f32.mrb[0].mxu0
    %v583 = vadd.f32 %v276, %v582
    %v584 = vpop.f32.mrb[0].mxu0
    %v585 = vadd.f32 %v280, %v584
    %v586 = vpop.f32.mrb[0].mxu0
    %v587 = vadd.f32 %v276, %v586
    %v588 = vpop.f32.mrb[0].mxu0
    %v589 = vadd.f32 %v280, %v588
    %590 = vdwg.mxu0
    %591 = vst [vmem:[#allocation2] sm:$0xff] %v480
    %592 = vst [vmem:[#allocation2 + $0x8] sm:$0xff] %v482
    %593 = vst [vmem:[#allocation2 + $0x10] sm:$0xff] %v553
    %594 = vst [vmem:[#allocation2 + $0x18] sm:$0xff] %v555
    %595 = vst [vmem:[#allocation2 + $0x20] sm:$0xff] %v484
    %596 = vst [vmem:[#allocation2 + $0x28] sm:$0xff] %v486
    %597 = vst [vmem:[#allocation2 + $0x30] sm:$0xff] %v557
    %598 = vst [vmem:[#allocation2 + $0x38] sm:$0xff] %v559
    %599 = vst [vmem:[#allocation2 + $0x40] sm:$0xff] %v490
    %600 = vst [vmem:[#allocation2 + $0x48] sm:$0xff] %v492
    %601 = vst [vmem:[#allocation2 + $0x50] sm:$0xff] %v563
    %602 = vst [vmem:[#allocation2 + $0x58] sm:$0xff] %v565
    %603 = vst [vmem:[#allocation2 + $0x60] sm:$0xff] %v494
    %604 = vst [vmem:[#allocation2 + $0x68] sm:$0xff] %v496
    %605 = vst [vmem:[#allocation2 + $0x70] sm:$0xff] %v567
    %606 = vst [vmem:[#allocation2 + $0x78] sm:$0xff] %v569
    %607 = vst [vmem:[#allocation2 + $0x80] sm:$0xff] %v500
    %608 = vst [vmem:[#allocation2 + $0x88] sm:$0xff] %v502
    %609 = vst [vmem:[#allocation2 + $0x90] sm:$0xff] %v573
    %610 = vst [vmem:[#allocation2 + $0x98] sm:$0xff] %v575
    %611 = vst [vmem:[#allocation2 + $0xa0] sm:$0xff] %v504
    %612 = vst [vmem:[#allocation2 + $0xa8] sm:$0xff] %v506
    %613 = vst [vmem:[#allocation2 + $0xb0] sm:$0xff] %v577
    %614 = vst [vmem:[#allocation2 + $0xb8] sm:$0xff] %v579
    %615 = vst [vmem:[#allocation2 + $0xc0] sm:$0xff] %v510
    %616 = vst [vmem:[#allocation2 + $0xc8] sm:$0xff] %v512
    %617 = vst [vmem:[#allocation2 + $0xd0] sm:$0xff] %v583
    %618 = vst [vmem:[#allocation2 + $0xd8] sm:$0xff] %v585
    %619 = vst [vmem:[#allocation2 + $0xe0] sm:$0xff] %v514
    %620 = vst [vmem:[#allocation2 + $0xe8] sm:$0xff] %v516
    %621 = vst [vmem:[#allocation2 + $0xf0] sm:$0xff] %v587
    %622 = vst [vmem:[#allocation2 + $0xf8] sm:$0xff] %v589
    %v623 = vld [vmem:[#allocation8] sm:$0xff]
    %v624 = vld [vmem:[#allocation10] sm:$0xff]
    %v625 = vld [vmem:[#allocation2] sm:$0xff]
    %v626 = vld [vmem:[#allocation2 + $0x8] sm:$0xff]
    %v627 = vld [vmem:[#allocation2 + $0x10] sm:$0xff]
    %v628 = vld [vmem:[#allocation2 + $0x18] sm:$0xff]
    %v629 = vpack.c.bf16 %v623, %v623
    %v662 = vunpack.c.l.b16 %v231
    %v663 = vunpack.c.h.b16 %v231
    %v664 = vunpack.c.l.b16 %v232
    %v665 = vunpack.c.h.b16 %v232
    %v666 = vunpack.c.l.b16 %v233
    %v667 = vunpack.c.h.b16 %v233
    %v668 = vunpack.c.l.b16 %v234
    %v669 = vunpack.c.h.b16 %v234
    %v670 = vunpack.c.l.b16 %v235
    %v671 = vunpack.c.h.b16 %v235
    %v672 = vunpack.c.l.b16 %v236
    %v673 = vunpack.c.h.b16 %v236
    %v674 = vunpack.c.l.b16 %v237
    %v675 = vunpack.c.h.b16 %v237
    %v676 = vunpack.c.l.b16 %v238
    %v677 = vunpack.c.h.b16 %v238
    %v678 = vunpack.c.l.b16 %v239
    %v679 = vunpack.c.h.b16 %v239
    %v680 = vunpack.c.l.b16 %v240
    %v681 = vunpack.c.h.b16 %v240
    %v682 = vunpack.c.l.b16 %v241
    %v683 = vunpack.c.h.b16 %v241
    %v684 = vunpack.c.l.b16 %v242
    %v685 = vunpack.c.h.b16 %v242
    %v686 = vunpack.c.l.b16 %v243
    %v687 = vunpack.c.h.b16 %v243
    %v688 = vunpack.c.l.b16 %v244
    %v689 = vunpack.c.h.b16 %v244
    %v690 = vunpack.c.l.b16 %v245
    %v691 = vunpack.c.h.b16 %v245
    %v692 = vunpack.c.l.b16 %v246
    %v693 = vunpack.c.h.b16 %v246
    %v694 = vunpack.c.l.b16 %v247
    %v695 = vunpack.c.h.b16 %v247
    %v696 = vunpack.c.l.b16 %v248
    %v697 = vunpack.c.h.b16 %v248
    %v698 = vunpack.c.l.b16 %v249
    %v699 = vunpack.c.h.b16 %v249
    %v700 = vunpack.c.l.b16 %v250
    %v701 = vunpack.c.h.b16 %v250
    %v702 = vunpack.c.l.b16 %v251
    %v703 = vunpack.c.h.b16 %v251
    %v704 = vunpack.c.l.b16 %v252
    %v705 = vunpack.c.h.b16 %v252
    %v706 = vunpack.c.l.b16 %v253
    %v707 = vunpack.c.h.b16 %v253
    %v708 = vunpack.c.l.b16 %v254
    %v709 = vunpack.c.h.b16 %v254
    %v710 = vunpack.c.l.b16 %v255
    %v711 = vunpack.c.h.b16 %v255
    %v712 = vunpack.c.l.b16 %v256
    %v713 = vunpack.c.h.b16 %v256
    %v714 = vunpack.c.l.b16 %v257
    %v715 = vunpack.c.h.b16 %v257
    %v716 = vunpack.c.l.b16 %v258
    %v717 = vunpack.c.h.b16 %v258
    %v718 = vunpack.c.l.b16 %v259
    %v719 = vunpack.c.h.b16 %v259
    %v720 = vunpack.c.l.b16 %v260
    %v721 = vunpack.c.h.b16 %v260
    %v722 = vunpack.c.l.b16 %v261
    %v723 = vunpack.c.h.b16 %v261
    %v724 = vunpack.c.l.b16 %v262
    %v725 = vunpack.c.h.b16 %v262
    %v726 = vpack.c.b16 %v666, %v662
    %v727 = vpack.c.b16 %v667, %v663
    %v728 = vpack.c.b16 %v668, %v664
    %v729 = vpack.c.b16 %v669, %v665
    %v730 = vpack.c.b16 %v674, %v670
    %v731 = vpack.c.b16 %v675, %v671
    %v732 = vpack.c.b16 %v676, %v672
    %v733 = vpack.c.b16 %v677, %v673
    %v734 = vpack.c.b16 %v682, %v678
    %v735 = vpack.c.b16 %v683, %v679
    %v736 = vpack.c.b16 %v684, %v680
    %v737 = vpack.c.b16 %v685, %v681
    %v738 = vpack.c.b16 %v690, %v686
    %v739 = vpack.c.b16 %v691, %v687
    %v740 = vpack.c.b16 %v692, %v688
    %v741 = vpack.c.b16 %v693, %v689
    %v742 = vpack.c.b16 %v698, %v694
    %v743 = vpack.c.b16 %v699, %v695
    %v744 = vpack.c.b16 %v700, %v696
    %v745 = vpack.c.b16 %v701, %v697
    %v746 = vpack.c.b16 %v706, %v702
    %v747 = vpack.c.b16 %v707, %v703
    %v748 = vpack.c.b16 %v708, %v704
    %v749 = vpack.c.b16 %v709, %v705
    %v750 = vpack.c.b16 %v714, %v710
    %v751 = vpack.c.b16 %v715, %v711
    %v752 = vpack.c.b16 %v716, %v712
    %v753 = vpack.c.b16 %v717, %v713
    %v754 = vpack.c.b16 %v722, %v718
    %v755 = vpack.c.b16 %v723, %v719
    %v756 = vpack.c.b16 %v724, %v720
    %v757 = vpack.c.b16 %v725, %v721
    %790 = vmatprep.subr.bf16.mxu0 %v727
    %791 = vmatpush1.bf16.msra.mxu0 %v726
    %792 = vmatprep.subr.bf16.mxu0 %v731
    %793 = vmatpush1.bf16.msra.mxu0 %v730
    %794 = vmatprep.subr.bf16.mxu0 %v735
    %795 = vmatpush1.bf16.msra.mxu0 %v734
    %796 = vmatprep.subr.bf16.mxu0 %v739
    %797 = vmatpush1.bf16.msra.mxu0 %v738
    %798 = vmatprep.subr.bf16.mxu0 %v743
    %799 = vmatpush1.bf16.msra.mxu0 %v742
    %800 = vmatprep.subr.bf16.mxu0 %v747
    %801 = vmatpush1.bf16.msra.mxu0 %v746
    %802 = vmatprep.subr.bf16.mxu0 %v751
    %803 = vmatpush1.bf16.msra.mxu0 %v750
    %804 = vmatprep.subr.bf16.mxu0 %v755
    %805 = vmatpush1.bf16.msra.mxu0 %v754
    %806 = vmatprep.subr.bf16.mxu0 0
    %807 = vmatpush1.bf16.msra.mxu0 0
    %808 = vmatprep.subr.bf16.mxu0 0
    %809 = vmatpush1.bf16.msra.mxu0 0
    %810 = vmatprep.subr.bf16.mxu0 0
    %811 = vmatpush1.bf16.msra.mxu0 0
    %812 = vmatprep.subr.bf16.mxu0 0
    %813 = vmatpush1.bf16.msra.mxu0 0
    %814 = vmatprep.subr.bf16.mxu0 0
    %815 = vmatpush1.bf16.msra.mxu0 0
    %816 = vmatprep.subr.bf16.mxu0 0
    %817 = vmatpush1.bf16.msra.mxu0 0
    %818 = vmatprep.subr.bf16.mxu0 0
    %819 = vmatpush1.bf16.msra.mxu0 0
    %820 = vmatprep.subr.bf16.mxu0 0
    %821 = vmatpush1.bf16.msra.mxu0 0
    %822 = vmatprep.mubr.bf16.mxu0 0
    %823 = vmatmul.mubr.bf16.gmra.mrb[0].mxu0 %v629
    %v824 = vpop.f32.mrb[0].mxu0
    %v825 = vadd.f32 0.0, %v824
    %v826 = vpop.f32.mrb[0].mxu0
    %v827 = vadd.f32 0.0, %v826
    %v828 = vpop.f32.mrb[0].mxu0
    %v829 = vpop.f32.mrb[0].mxu0
    %830 = vdwg.mxu0
    %831 = vmatprep.subr.bf16.mxu0 %v729
    %832 = vmatpush1.bf16.msra.mxu0 %v728
    %833 = vmatprep.subr.bf16.mxu0 %v733
    %834 = vmatpush1.bf16.msra.mxu0 %v732
    %835 = vmatprep.subr.bf16.mxu0 %v737
    %836 = vmatpush1.bf16.msra.mxu0 %v736
    %837 = vmatprep.subr.bf16.mxu0 %v741
    %838 = vmatpush1.bf16.msra.mxu0 %v740
    %839 = vmatprep.subr.bf16.mxu0 %v745
    %840 = vmatpush1.bf16.msra.mxu0 %v744
    %841 = vmatprep.subr.bf16.mxu0 %v749
    %842 = vmatpush1.bf16.msra.mxu0 %v748
    %843 = vmatprep.subr.bf16.mxu0 %v753
    %844 = vmatpush1.bf16.msra.mxu0 %v752
    %845 = vmatprep.subr.bf16.mxu0 %v757
    %846 = vmatpush1.bf16.msra.mxu0 %v756
    %847 = vmatprep.subr.bf16.mxu0 0
    %848 = vmatpush1.bf16.msra.mxu0 0
    %849 = vmatprep.subr.bf16.mxu0 0
    %850 = vmatpush1.bf16.msra.mxu0 0
    %851 = vmatprep.subr.bf16.mxu0 0
    %852 = vmatpush1.bf16.msra.mxu0 0
    %853 = vmatprep.subr.bf16.mxu0 0
    %854 = vmatpush1.bf16.msra.mxu0 0
    %855 = vmatprep.subr.bf16.mxu0 0
    %856 = vmatpush1.bf16.msra.mxu0 0
    %857 = vmatprep.subr.bf16.mxu0 0
    %858 = vmatpush1.bf16.msra.mxu0 0
    %859 = vmatprep.subr.bf16.mxu0 0
    %860 = vmatpush1.bf16.msra.mxu0 0
    %861 = vmatprep.subr.bf16.mxu0 0
    %862 = vmatpush1.bf16.msra.mxu0 0
    %863 = vmatprep.mubr.bf16.mxu0 0
    %864 = vmatmul.mubr.bf16.gmra.mrb[0].mxu0 %v629
    %v865 = vpop.f32.mrb[0].mxu0
    %v866 = vadd.f32 0.0, %v865
    %v867 = vpop.f32.mrb[0].mxu0
    %v868 = vadd.f32 0.0, %v867
    %v869 = vpop.f32.mrb[0].mxu0
    %v870 = vpop.f32.mrb[0].mxu0
    %871 = vdwg.mxu0
    %v872 = vadd.f32 %v625, %v825
    %v873 = vadd.f32 %v626, %v827
    %v874 = vadd.f32 %v627, %v866
    %v875 = vadd.f32 %v628, %v868
    %v876 = vxor.u32 %v872, 2147483648
    %v877 = vmul.f32 %v876, 1.442695
    %v878 = vpow.pop %v877
    %v879 = vadd.f32 %v878, 1.0
    %v880 = vrcp.pop %v879
    %v881 = vmul.f32 1.0, %v880
    %v882 = vxor.u32 %v873, 2147483648
    %v883 = vmul.f32 %v882, 1.442695
    %v884 = vpow.pop %v883
    %v885 = vadd.f32 %v884, 1.0
    %v886 = vrcp.pop %v885
    %v887 = vmul.f32 1.0, %v886
    %v888 = vtanh.pop %v874
    %v889 = vxor.u32 %v875, 2147483648
    %v890 = vmul.f32 %v889, 1.442695
    %v891 = vpow.pop %v890
    %v892 = vadd.f32 %v891, 1.0
    %v893 = vrcp.pop %v892
    %v894 = vmul.f32 1.0, %v893
    %v895 = vmul.f32 %v887, %v624
    %v896 = vmul.f32 %v881, %v888
    %v897 = vadd.f32 %v895, %v896
    %v898 = vtanh.pop %v897
    %v899 = vmul.f32 %v894, %v898
    %900 = vst [vmem:[#allocation3] sm:$0xff] %v899
    %s901 = scalar_lea.vmem [#allocation2], 32
    %v902 = vld [vmem:[%s901] sm:$0xff]
    %v903 = vld [vmem:[%s901 + $0x8] sm:$0xff]
    %v904 = vld [vmem:[%s901 + $0x10] sm:$0xff]
    %v905 = vld [vmem:[%s901 + $0x18] sm:$0xff]
    %v906 = vpack.c.bf16 %v899, %v899
    %907 = vmatprep.subr.bf16.mxu0 %v727
    %908 = vmatpush1.bf16.msra.mxu0 %v726
    %909 = vmatprep.subr.bf16.mxu0 %v731
    %910 = vmatpush1.bf16.msra.mxu0 %v730
    %911 = vmatprep.subr.bf16.mxu0 %v735
    %912 = vmatpush1.bf16.msra.mxu0 %v734
    %913 = vmatprep.subr.bf16.mxu0 %v739
    %914 = vmatpush1.bf16.msra.mxu0 %v738
    %915 = vmatprep.subr.bf16.mxu0 %v743
    %916 = vmatpush1.bf16.msra.mxu0 %v742
    %917 = vmatprep.subr.bf16.mxu0 %v747
    %918 = vmatpush1.bf16.msra.mxu0 %v746
    %919 = vmatprep.subr.bf16.mxu0 %v751
    %920 = vmatpush1.bf16.msra.mxu0 %v750
    %921 = vmatprep.subr.bf16.mxu0 %v755
    %922 = vmatpush1.bf16.msra.mxu0 %v754
    %923 = vmatprep.subr.bf16.mxu0 0
    %924 = vmatpush1.bf16.msra.mxu0 0
    %925 = vmatprep.subr.bf16.mxu0 0
    %926 = vmatpush1.bf16.msra.mxu0 0
    %927 = vmatprep.subr.bf16.mxu0 0
    %928 = vmatpush1.bf16.msra.mxu0 0
    %929 = vmatprep.subr.bf16.mxu0 0
    %930 = vmatpush1.bf16.msra.mxu0 0
    %931 = vmatprep.subr.bf16.mxu0 0
    %932 = vmatpush1.bf16.msra.mxu0 0
    %933 = vmatprep.subr.bf16.mxu0 0
    %934 = vmatpush1.bf16.msra.mxu0 0
    %935 = vmatprep.subr.bf16.mxu0 0
    %936 = vmatpush1.bf16.msra.mxu0 0
    %937 = vmatprep.subr.bf16.mxu0 0
    %938 = vmatpush1.bf16.msra.mxu0 0
    %939 = vmatprep.mubr.bf16.mxu0 0
    %940 = vmatmul.mubr.bf16.gmra.mrb[0].mxu0 %v906
    %v941 = vpop.f32.mrb[0].mxu0
    %v942 = vadd.f32 0.0, %v941
    %v943 = vpop.f32.mrb[0].mxu0
    %v944 = vadd.f32 0.0, %v943
    %v945 = vpop.f32.mrb[0].mxu0
    %v946 = vpop.f32.mrb[0].mxu0
    %947 = vdwg.mxu0
    %948 = vmatprep.subr.bf16.mxu0 %v729
    %949 = vmatpush1.bf16.msra.mxu0 %v728
    %950 = vmatprep.subr.bf16.mxu0 %v733
    %951 = vmatpush1.bf16.msra.mxu0 %v732
    %952 = vmatprep.subr.bf16.mxu0 %v737
    %953 = vmatpush1.bf16.msra.mxu0 %v736
    %954 = vmatprep.subr.bf16.mxu0 %v741
    %955 = vmatpush1.bf16.msra.mxu0 %v740
    %956 = vmatprep.subr.bf16.mxu0 %v745
    %957 = vmatpush1.bf16.msra.mxu0 %v744
    %958 = vmatprep.subr.bf16.mxu0 %v749
    %959 = vmatpush1.bf16.msra.mxu0 %v748
    %960 = vmatprep.subr.bf16.mxu0 %v753
    %961 = vmatpush1.bf16.msra.mxu0 %v752
    %962 = vmatprep.subr.bf16.mxu0 %v757
    %963 = vmatpush1.bf16.msra.mxu0 %v756
    %964 = vmatprep.subr.bf16.mxu0 0
    %965 = vmatpush1.bf16.msra.mxu0 0
    %966 = vmatprep.subr.bf16.mxu0 0
    %967 = vmatpush1.bf16.msra.mxu0 0
    %968 = vmatprep.subr.bf16.mxu0 0
    %969 = vmatpush1.bf16.msra.mxu0 0
    %970 = vmatprep.subr.bf16.mxu0 0
    %971 = vmatpush1.bf16.msra.mxu0 0
    %972 = vmatprep.subr.bf16.mxu0 0
    %973 = vmatpush1.bf16.msra.mxu0 0
    %974 = vmatprep.subr.bf16.mxu0 0
    %975 = vmatpush1.bf16.msra.mxu0 0
    %976 = vmatprep.subr.bf16.mxu0 0
    %977 = vmatpush1.bf16.msra.mxu0 0
    %978 = vmatprep.subr.bf16.mxu0 0
    %979 = vmatpush1.bf16.msra.mxu0 0
    %980 = vmatprep.mubr.bf16.mxu0 0
    %981 = vmatmul.mubr.bf16.gmra.mrb[0].mxu0 %v906
    %v982 = vpop.f32.mrb[0].mxu0
    %v983 = vadd.f32 0.0, %v982
    %v984 = vpop.f32.mrb[0].mxu0
    %v985 = vadd.f32 0.0, %v984
    %v986 = vpop.f32.mrb[0].mxu0
    %v987 = vpop.f32.mrb[0].mxu0
    %988 = vdwg.mxu0
    %v989 = vadd.f32 %v902, %v942
    %v990 = vadd.f32 %v903, %v944
    %v991 = vadd.f32 %v904, %v983
    %v992 = vadd.f32 %v905, %v985
    %v993 = vxor.u32 %v989, 2147483648
    %v994 = vmul.f32 %v993, 1.442695
    %v995 = vpow.pop %v994
    %v996 = vadd.f32 %v995, 1.0
    %v997 = vrcp.pop %v996
    %v998 = vmul.f32 1.0, %v997
    %v999 = vxor.u32 %v990, 2147483648
    %v1000 = vmul.f32 %v999, 1.442695
    %v1001 = vpow.pop %v1000
    %v1002 = vadd.f32 %v1001, 1.0
    %v1003 = vrcp.pop %v1002
    %v1004 = vmul.f32 1.0, %v1003
    %v1005 = vtanh.pop %v991
    %v1006 = vxor.u32 %v992, 2147483648
    %v1007 = vmul.f32 %v1006, 1.442695
    %v1008 = vpow.pop %v1007
    %v1009 = vadd.f32 %v1008, 1.0
    %v1010 = vrcp.pop %v1009
    %v1011 = vmul.f32 1.0, %v1010
    %v1012 = vmul.f32 %v1004, %v897
    %v1013 = vmul.f32 %v998, %v1005
    %v1014 = vadd.f32 %v1012, %v1013
    %v1015 = vtanh.pop %v1014
    %v1016 = vmul.f32 %v1011, %v1015
    %s1017 = scalar_lea.vmem [#allocation3], 8
    %1018 = vst [vmem:[%s1017] sm:$0xff] %v1016
    %s1019 = scalar_lea.vmem [#allocation2], 64
    %v1020 = vld [vmem:[%s1019] sm:$0xff]
    %v1021 = vld [vmem:[%s1019 + $0x8] sm:$0xff]
    %v1022 = vld [vmem:[%s1019 + $0x10] sm:$0xff]
    %v1023 = vld [vmem:[%s1019 + $0x18] sm:$0xff]
    %v1024 = vpack.c.bf16 %v1016, %v1016
    %1025 = vmatprep.subr.bf16.mxu0 %v727
    %1026 = vmatpush1.bf16.msra.mxu0 %v726
    %1027 = vmatprep.subr.bf16.mxu0 %v731
    %1028 = vmatpush1.bf16.msra.mxu0 %v730
    %1029 = vmatprep.subr.bf16.mxu0 %v735
    %1030 = vmatpush1.bf16.msra.mxu0 %v734
    %1031 = vmatprep.subr.bf16.mxu0 %v739
    %1032 = vmatpush1.bf16.msra.mxu0 %v738
    %1033 = vmatprep.subr.bf16.mxu0 %v743
    %1034 = vmatpush1.bf16.msra.mxu0 %v742
    %1035 = vmatprep.subr.bf16.mxu0 %v747
    %1036 = vmatpush1.bf16.msra.mxu0 %v746
    %1037 = vmatprep.subr.bf16.mxu0 %v751
    %1038 = vmatpush1.bf16.msra.mxu0 %v750
    %1039 = vmatprep.subr.bf16.mxu0 %v755
    %1040 = vmatpush1.bf16.msra.mxu0 %v754
    %1041 = vmatprep.subr.bf16.mxu0 0
    %1042 = vmatpush1.bf16.msra.mxu0 0
    %1043 = vmatprep.subr.bf16.mxu0 0
    %1044 = vmatpush1.bf16.msra.mxu0 0
    %1045 = vmatprep.subr.bf16.mxu0 0
    %1046 = vmatpush1.bf16.msra.mxu0 0
    %1047 = vmatprep.subr.bf16.mxu0 0
    %1048 = vmatpush1.bf16.msra.mxu0 0
    %1049 = vmatprep.subr.bf16.mxu0 0
    %1050 = vmatpush1.bf16.msra.mxu0 0
    %1051 = vmatprep.subr.bf16.mxu0 0
    %1052 = vmatpush1.bf16.msra.mxu0 0
    %1053 = vmatprep.subr.bf16.mxu0 0
    %1054 = vmatpush1.bf16.msra.mxu0 0
    %1055 = vmatprep.subr.bf16.mxu0 0
    %1056 = vmatpush1.bf16.msra.mxu0 0
    %1057 = vmatprep.mubr.bf16.mxu0 0
    %1058 = vmatmul.mubr.bf16.gmra.mrb[0].mxu0 %v1024
    %v1059 = vpop.f32.mrb[0].mxu0
    %v1060 = vadd.f32 0.0, %v1059
    %v1061 = vpop.f32.mrb[0].mxu0
    %v1062 = vadd.f32 0.0, %v1061
    %v1063 = vpop.f32.mrb[0].mxu0
    %v1064 = vpop.f32.mrb[0].mxu0
    %1065 = vdwg.mxu0
    %1066 = vmatprep.subr.bf16.mxu0 %v729
    %1067 = vmatpush1.bf16.msra.mxu0 %v728
    %1068 = vmatprep.subr.bf16.mxu0 %v733
    %1069 = vmatpush1.bf16.msra.mxu0 %v732
    %1070 = vmatprep.subr.bf16.mxu0 %v737
    %1071 = vmatpush1.bf16.msra.mxu0 %v736
    %1072 = vmatprep.subr.bf16.mxu0 %v741
    %1073 = vmatpush1.bf16.msra.mxu0 %v740
    %1074 = vmatprep.subr.bf16.mxu0 %v745
    %1075 = vmatpush1.bf16.msra.mxu0 %v744
    %1076 = vmatprep.subr.bf16.mxu0 %v749
    %1077 = vmatpush1.bf16.msra.mxu0 %v748
    %1078 = vmatprep.subr.bf16.mxu0 %v753
    %1079 = vmatpush1.bf16.msra.mxu0 %v752
    %1080 = vmatprep.subr.bf16.mxu0 %v757
    %1081 = vmatpush1.bf16.msra.mxu0 %v756
    %1082 = vmatprep.subr.bf16.mxu0 0
    %1083 = vmatpush1.bf16.msra.mxu0 0
    %1084 = vmatprep.subr.bf16.mxu0 0
    %1085 = vmatpush1.bf16.msra.mxu0 0
    %1086 = vmatprep.subr.bf16.mxu0 0
    %1087 = vmatpush1.bf16.msra.mxu0 0
    %1088 = vmatprep.subr.bf16.mxu0 0
    %1089 = vmatpush1.bf16.msra.mxu0 0
    %1090 = vmatprep.subr.bf16.mxu0 0
    %1091 = vmatpush1.bf16.msra.mxu0 0
    %1092 = vmatprep.subr.bf16.mxu0 0
    %1093 = vmatpush1.bf16.msra.mxu0 0
    %1094 = vmatprep.subr.bf16.mxu0 0
    %1095 = vmatpush1.bf16.msra.mxu0 0
    %1096 = vmatprep.subr.bf16.mxu0 0
    %1097 = vmatpush1.bf16.msra.mxu0 0
    %1098 = vmatprep.mubr.bf16.mxu0 0
    %1099 = vmatmul.mubr.bf16.gmra.mrb[0].mxu0 %v1024
    %v1100 = vpop.f32.mrb[0].mxu0
    %v1101 = vadd.f32 0.0, %v1100
    %v1102 = vpop.f32.mrb[0].mxu0
    %v1103 = vadd.f32 0.0, %v1102
    %v1104 = vpop.f32.mrb[0].mxu0
    %v1105 = vpop.f32.mrb[0].mxu0
    %1106 = vdwg.mxu0
    %v1107 = vadd.f32 %v1020, %v1060
    %v1108 = vadd.f32 %v1021, %v1062
    %v1109 = vadd.f32 %v1022, %v1101
    %v1110 = vadd.f32 %v1023, %v1103
    %v1111 = vxor.u32 %v1107, 2147483648
    %v1112 = vmul.f32 %v1111, 1.442695
    %v1113 = vpow.pop %v1112
    %v1114 = vadd.f32 %v1113, 1.0
    %v1115 = vrcp.pop %v1114
    %v1116 = vmul.f32 1.0, %v1115
    %v1117 = vxor.u32 %v1108, 2147483648
    %v1118 = vmul.f32 %v1117, 1.442695
    %v1119 = vpow.pop %v1118
    %v1120 = vadd.f32 %v1119, 1.0
    %v1121 = vrcp.pop %v1120
    %v1122 = vmul.f32 1.0, %v1121
    %v1123 = vtanh.pop %v1109
    %v1124 = vxor.u32 %v1110, 2147483648
    %v1125 = vmul.f32 %v1124, 1.442695
    %v1126 = vpow.pop %v1125
    %v1127 = vadd.f32 %v1126, 1.0
    %v1128 = vrcp.pop %v1127
    %v1129 = vmul.f32 1.0, %v1128
    %v1130 = vmul.f32 %v1122, %v1014
    %v1131 = vmul.f32 %v1116, %v1123
    %v1132 = vadd.f32 %v1130, %v1131
    %v1133 = vtanh.pop %v1132
    %v1134 = vmul.f32 %v1129, %v1133
    %s1135 = scalar_lea.vmem [#allocation3], 16
    %1136 = vst [vmem:[%s1135] sm:$0xff] %v1134
    %s1137 = scalar_lea.vmem [#allocation2], 96
    %v1138 = vld [vmem:[%s1137] sm:$0xff]
    %v1139 = vld [vmem:[%s1137 + $0x8] sm:$0xff]
    %v1140 = vld [vmem:[%s1137 + $0x10] sm:$0xff]
    %v1141 = vld [vmem:[%s1137 + $0x18] sm:$0xff]
    %v1142 = vpack.c.bf16 %v1134, %v1134
    %1143 = vmatprep.subr.bf16.mxu0 %v727
    %1144 = vmatpush1.bf16.msra.mxu0 %v726
    %1145 = vmatprep.subr.bf16.mxu0 %v731
    %1146 = vmatpush1.bf16.msra.mxu0 %v730
    %1147 = vmatprep.subr.bf16.mxu0 %v735
    %1148 = vmatpush1.bf16.msra.mxu0 %v734
    %1149 = vmatprep.subr.bf16.mxu0 %v739
    %1150 = vmatpush1.bf16.msra.mxu0 %v738
    %1151 = vmatprep.subr.bf16.mxu0 %v743
    %1152 = vmatpush1.bf16.msra.mxu0 %v742
    %1153 = vmatprep.subr.bf16.mxu0 %v747
    %1154 = vmatpush1.bf16.msra.mxu0 %v746
    %1155 = vmatprep.subr.bf16.mxu0 %v751
    %1156 = vmatpush1.bf16.msra.mxu0 %v750
    %1157 = vmatprep.subr.bf16.mxu0 %v755
    %1158 = vmatpush1.bf16.msra.mxu0 %v754
    %1159 = vmatprep.subr.bf16.mxu0 0
    %1160 = vmatpush1.bf16.msra.mxu0 0
    %1161 = vmatprep.subr.bf16.mxu0 0
    %1162 = vmatpush1.bf16.msra.mxu0 0
    %1163 = vmatprep.subr.bf16.mxu0 0
    %1164 = vmatpush1.bf16.msra.mxu0 0
    %1165 = vmatprep.subr.bf16.mxu0 0
    %1166 = vmatpush1.bf16.msra.mxu0 0
    %1167 = vmatprep.subr.bf16.mxu0 0
    %1168 = vmatpush1.bf16.msra.mxu0 0
    %1169 = vmatprep.subr.bf16.mxu0 0
    %1170 = vmatpush1.bf16.msra.mxu0 0
    %1171 = vmatprep.subr.bf16.mxu0 0
    %1172 = vmatpush1.bf16.msra.mxu0 0
    %1173 = vmatprep.subr.bf16.mxu0 0
    %1174 = vmatpush1.bf16.msra.mxu0 0
    %1175 = vmatprep.mubr.bf16.mxu0 0
    %1176 = vmatmul.mubr.bf16.gmra.mrb[0].mxu0 %v1142
    %v1177 = vpop.f32.mrb[0].mxu0
    %v1178 = vadd.f32 0.0, %v1177
    %v1179 = vpop.f32.mrb[0].mxu0
    %v1180 = vadd.f32 0.0, %v1179
    %v1181 = vpop.f32.mrb[0].mxu0
    %v1182 = vpop.f32.mrb[0].mxu0
    %1183 = vdwg.mxu0
    %1184 = vmatprep.subr.bf16.mxu0 %v729
    %1185 = vmatpush1.bf16.msra.mxu0 %v728
    %1186 = vmatprep.subr.bf16.mxu0 %v733
    %1187 = vmatpush1.bf16.msra.mxu0 %v732
    %1188 = vmatprep.subr.bf16.mxu0 %v737
    %1189 = vmatpush1.bf16.msra.mxu0 %v736
    %1190 = vmatprep.subr.bf16.mxu0 %v741
    %1191 = vmatpush1.bf16.msra.mxu0 %v740
    %1192 = vmatprep.subr.bf16.mxu0 %v745
    %1193 = vmatpush1.bf16.msra.mxu0 %v744
    %1194 = vmatprep.subr.bf16.mxu0 %v749
    %1195 = vmatpush1.bf16.msra.mxu0 %v748
    %1196 = vmatprep.subr.bf16.mxu0 %v753
    %1197 = vmatpush1.bf16.msra.mxu0 %v752
    %1198 = vmatprep.subr.bf16.mxu0 %v757
    %1199 = vmatpush1.bf16.msra.mxu0 %v756
    %1200 = vmatprep.subr.bf16.mxu0 0
    %1201 = vmatpush1.bf16.msra.mxu0 0
    %1202 = vmatprep.subr.bf16.mxu0 0
    %1203 = vmatpush1.bf16.msra.mxu0 0
    %1204 = vmatprep.subr.bf16.mxu0 0
    %1205 = vmatpush1.bf16.msra.mxu0 0
    %1206 = vmatprep.subr.bf16.mxu0 0
    %1207 = vmatpush1.bf16.msra.mxu0 0
    %1208 = vmatprep.subr.bf16.mxu0 0
    %1209 = vmatpush1.bf16.msra.mxu0 0
    %1210 = vmatprep.subr.bf16.mxu0 0
    %1211 = vmatpush1.bf16.msra.mxu0 0
    %1212 = vmatprep.subr.bf16.mxu0 0
    %1213 = vmatpush1.bf16.msra.mxu0 0
    %1214 = vmatprep.subr.bf16.mxu0 0
    %1215 = vmatpush1.bf16.msra.mxu0 0
    %1216 = vmatprep.mubr.bf16.mxu0 0
    %1217 = vmatmul.mubr.bf16.gmra.mrb[0].mxu0 %v1142
    %v1218 = vpop.f32.mrb[0].mxu0
    %v1219 = vadd.f32 0.0, %v1218
    %v1220 = vpop.f32.mrb[0].mxu0
    %v1221 = vadd.f32 0.0, %v1220
    %v1222 = vpop.f32.mrb[0].mxu0
    %v1223 = vpop.f32.mrb[0].mxu0
    %1224 = vdwg.mxu0
    %v1225 = vadd.f32 %v1138, %v1178
    %v1226 = vadd.f32 %v1139, %v1180
    %v1227 = vadd.f32 %v1140, %v1219
    %v1228 = vadd.f32 %v1141, %v1221
    %v1229 = vxor.u32 %v1225, 2147483648
    %v1230 = vmul.f32 %v1229, 1.442695
    %v1231 = vpow.pop %v1230
    %v1232 = vadd.f32 %v1231, 1.0
    %v1233 = vrcp.pop %v1232
    %v1234 = vmul.f32 1.0, %v1233
    %v1235 = vxor.u32 %v1226, 2147483648
    %v1236 = vmul.f32 %v1235, 1.442695
    %v1237 = vpow.pop %v1236
    %v1238 = vadd.f32 %v1237, 1.0
    %v1239 = vrcp.pop %v1238
    %v1240 = vmul.f32 1.0, %v1239
    %v1241 = vtanh.pop %v1227
    %v1242 = vxor.u32 %v1228, 2147483648
    %v1243 = vmul.f32 %v1242, 1.442695
    %v1244 = vpow.pop %v1243
    %v1245 = vadd.f32 %v1244, 1.0
    %v1246 = vrcp.pop %v1245
    %v1247 = vmul.f32 1.0, %v1246
    %v1248 = vmul.f32 %v1240, %v1132
    %v1249 = vmul.f32 %v1234, %v1241
    %v1250 = vadd.f32 %v1248, %v1249
    %v1251 = vtanh.pop %v1250
    %v1252 = vmul.f32 %v1247, %v1251
    %s1253 = scalar_lea.vmem [#allocation3], 24
    %1254 = vst [vmem:[%s1253] sm:$0xff] %v1252
    %s1255 = scalar_lea.vmem [#allocation2], 128
    %v1256 = vld [vmem:[%s1255] sm:$0xff]
    %v1257 = vld [vmem:[%s1255 + $0x8] sm:$0xff]
    %v1258 = vld [vmem:[%s1255 + $0x10] sm:$0xff]
    %v1259 = vld [vmem:[%s1255 + $0x18] sm:$0xff]
    %v1260 = vpack.c.bf16 %v1252, %v1252
    %1261 = vmatprep.subr.bf16.mxu0 %v727
    %1262 = vmatpush1.bf16.msra.mxu0 %v726
    %1263 = vmatprep.subr.bf16.mxu0 %v731
    %1264 = vmatpush1.bf16.msra.mxu0 %v730
    %1265 = vmatprep.subr.bf16.mxu0 %v735
    %1266 = vmatpush1.bf16.msra.mxu0 %v734
    %1267 = vmatprep.subr.bf16.mxu0 %v739
    %1268 = vmatpush1.bf16.msra.mxu0 %v738
    %1269 = vmatprep.subr.bf16.mxu0 %v743
    %1270 = vmatpush1.bf16.msra.mxu0 %v742
    %1271 = vmatprep.subr.bf16.mxu0 %v747
    %1272 = vmatpush1.bf16.msra.mxu0 %v746
    %1273 = vmatprep.subr.bf16.mxu0 %v751
    %1274 = vmatpush1.bf16.msra.mxu0 %v750
    %1275 = vmatprep.subr.bf16.mxu0 %v755
    %1276 = vmatpush1.bf16.msra.mxu0 %v754
    %1277 = vmatprep.subr.bf16.mxu0 0
    %1278 = vmatpush1.bf16.msra.mxu0 0
    %1279 = vmatprep.subr.bf16.mxu0 0
    %1280 = vmatpush1.bf16.msra.mxu0 0
    %1281 = vmatprep.subr.bf16.mxu0 0
    %1282 = vmatpush1.bf16.msra.mxu0 0
    %1283 = vmatprep.subr.bf16.mxu0 0
    %1284 = vmatpush1.bf16.msra.mxu0 0
    %1285 = vmatprep.subr.bf16.mxu0 0
    %1286 = vmatpush1.bf16.msra.mxu0 0
    %1287 = vmatprep.subr.bf16.mxu0 0
    %1288 = vmatpush1.bf16.msra.mxu0 0
    %1289 = vmatprep.subr.bf16.mxu0 0
    %1290 = vmatpush1.bf16.msra.mxu0 0
    %1291 = vmatprep.subr.bf16.mxu0 0
    %1292 = vmatpush1.bf16.msra.mxu0 0
    %1293 = vmatprep.mubr.bf16.mxu0 0
    %1294 = vmatmul.mubr.bf16.gmra.mrb[0].mxu0 %v1260
    %v1295 = vpop.f32.mrb[0].mxu0
    %v1296 = vadd.f32 0.0, %v1295
    %v1297 = vpop.f32.mrb[0].mxu0
    %v1298 = vadd.f32 0.0, %v1297
    %v1299 = vpop.f32.mrb[0].mxu0
    %v1300 = vpop.f32.mrb[0].mxu0
    %1301 = vdwg.mxu0
    %1302 = vmatprep.subr.bf16.mxu0 %v729
    %1303 = vmatpush1.bf16.msra.mxu0 %v728
    %1304 = vmatprep.subr.bf16.mxu0 %v733
    %1305 = vmatpush1.bf16.msra.mxu0 %v732
    %1306 = vmatprep.subr.bf16.mxu0 %v737
    %1307 = vmatpush1.bf16.msra.mxu0 %v736
    %1308 = vmatprep.subr.bf16.mxu0 %v741
    %1309 = vmatpush1.bf16.msra.mxu0 %v740
    %1310 = vmatprep.subr.bf16.mxu0 %v745
    %1311 = vmatpush1.bf16.msra.mxu0 %v744
    %1312 = vmatprep.subr.bf16.mxu0 %v749
    %1313 = vmatpush1.bf16.msra.mxu0 %v748
    %1314 = vmatprep.subr.bf16.mxu0 %v753
    %1315 = vmatpush1.bf16.msra.mxu0 %v752
    %1316 = vmatprep.subr.bf16.mxu0 %v757
    %1317 = vmatpush1.bf16.msra.mxu0 %v756
    %1318 = vmatprep.subr.bf16.mxu0 0
    %1319 = vmatpush1.bf16.msra.mxu0 0
    %1320 = vmatprep.subr.bf16.mxu0 0
    %1321 = vmatpush1.bf16.msra.mxu0 0
    %1322 = vmatprep.subr.bf16.mxu0 0
    %1323 = vmatpush1.bf16.msra.mxu0 0
    %1324 = vmatprep.subr.bf16.mxu0 0
    %1325 = vmatpush1.bf16.msra.mxu0 0
    %1326 = vmatprep.subr.bf16.mxu0 0
    %1327 = vmatpush1.bf16.msra.mxu0 0
    %1328 = vmatprep.subr.bf16.mxu0 0
    %1329 = vmatpush1.bf16.msra.mxu0 0
    %1330 = vmatprep.subr.bf16.mxu0 0
    %1331 = vmatpush1.bf16.msra.mxu0 0
    %1332 = vmatprep.subr.bf16.mxu0 0
    %1333 = vmatpush1.bf16.msra.mxu0 0
    %1334 = vmatprep.mubr.bf16.mxu0 0
    %1335 = vmatmul.mubr.bf16.gmra.mrb[0].mxu0 %v1260
    %v1336 = vpop.f32.mrb[0].mxu0
    %v1337 = vadd.f32 0.0, %v1336
    %v1338 = vpop.f32.mrb[0].mxu0
    %v1339 = vadd.f32 0.0, %v1338
    %v1340 = vpop.f32.mrb[0].mxu0
    %v1341 = vpop.f32.mrb[0].mxu0
    %1342 = vdwg.mxu0
    %v1343 = vadd.f32 %v1256, %v1296
    %v1344 = vadd.f32 %v1257, %v1298
    %v1345 = vadd.f32 %v1258, %v1337
    %v1346 = vadd.f32 %v1259, %v1339
    %v1347 = vxor.u32 %v1343, 2147483648
    %v1348 = vmul.f32 %v1347, 1.442695
    %v1349 = vpow.pop %v1348
    %v1350 = vadd.f32 %v1349, 1.0
    %v1351 = vrcp.pop %v1350
    %v1352 = vmul.f32 1.0, %v1351
    %v1353 = vxor.u32 %v1344, 2147483648
    %v1354 = vmul.f32 %v1353, 1.442695
    %v1355 = vpow.pop %v1354
    %v1356 = vadd.f32 %v1355, 1.0
    %v1357 = vrcp.pop %v1356
    %v1358 = vmul.f32 1.0, %v1357
    %v1359 = vtanh.pop %v1345
    %v1360 = vxor.u32 %v1346, 2147483648
    %v1361 = vmul.f32 %v1360, 1.442695
    %v1362 = vpow.pop %v1361
    %v1363 = vadd.f32 %v1362, 1.0
    %v1364 = vrcp.pop %v1363
    %v1365 = vmul.f32 1.0, %v1364
    %v1366 = vmul.f32 %v1358, %v1250
    %v1367 = vmul.f32 %v1352, %v1359
    %v1368 = vadd.f32 %v1366, %v1367
    %v1369 = vtanh.pop %v1368
    %v1370 = vmul.f32 %v1365, %v1369
    %s1371 = scalar_lea.vmem [#allocation3], 32
    %1372 = vst [vmem:[%s1371] sm:$0xff] %v1370
    %s1373 = scalar_lea.vmem [#allocation2], 160
    %v1374 = vld [vmem:[%s1373] sm:$0xff]
    %v1375 = vld [vmem:[%s1373 + $0x8] sm:$0xff]
    %v1376 = vld [vmem:[%s1373 + $0x10] sm:$0xff]
    %v1377 = vld [vmem:[%s1373 + $0x18] sm:$0xff]
    %v1378 = vpack.c.bf16 %v1370, %v1370
    %1379 = vmatprep.subr.bf16.mxu0 %v727
    %1380 = vmatpush1.bf16.msra.mxu0 %v726
    %1381 = vmatprep.subr.bf16.mxu0 %v731
    %1382 = vmatpush1.bf16.msra.mxu0 %v730
    %1383 = vmatprep.subr.bf16.mxu0 %v735
    %1384 = vmatpush1.bf16.msra.mxu0 %v734
    %1385 = vmatprep.subr.bf16.mxu0 %v739
    %1386 = vmatpush1.bf16.msra.mxu0 %v738
    %1387 = vmatprep.subr.bf16.mxu0 %v743
    %1388 = vmatpush1.bf16.msra.mxu0 %v742
    %1389 = vmatprep.subr.bf16.mxu0 %v747
    %1390 = vmatpush1.bf16.msra.mxu0 %v746
    %1391 = vmatprep.subr.bf16.mxu0 %v751
    %1392 = vmatpush1.bf16.msra.mxu0 %v750
    %1393 = vmatprep.subr.bf16.mxu0 %v755
    %1394 = vmatpush1.bf16.msra.mxu0 %v754
    %1395 = vmatprep.subr.bf16.mxu0 0
    %1396 = vmatpush1.bf16.msra.mxu0 0
    %1397 = vmatprep.subr.bf16.mxu0 0
    %1398 = vmatpush1.bf16.msra.mxu0 0
    %1399 = vmatprep.subr.bf16.mxu0 0
    %1400 = vmatpush1.bf16.msra.mxu0 0
    %1401 = vmatprep.subr.bf16.mxu0 0
    %1402 = vmatpush1.bf16.msra.mxu0 0
    %1403 = vmatprep.subr.bf16.mxu0 0
    %1404 = vmatpush1.bf16.msra.mxu0 0
    %1405 = vmatprep.subr.bf16.mxu0 0
    %1406 = vmatpush1.bf16.msra.mxu0 0
    %1407 = vmatprep.subr.bf16.mxu0 0
    %1408 = vmatpush1.bf16.msra.mxu0 0
    %1409 = vmatprep.subr.bf16.mxu0 0
    %1410 = vmatpush1.bf16.msra.mxu0 0
    %1411 = vmatprep.mubr.bf16.mxu0 0
    %1412 = vmatmul.mubr.bf16.gmra.mrb[0].mxu0 %v1378
    %v1413 = vpop.f32.mrb[0].mxu0
    %v1414 = vadd.f32 0.0, %v1413
    %v1415 = vpop.f32.mrb[0].mxu0
    %v1416 = vadd.f32 0.0, %v1415
    %v1417 = vpop.f32.mrb[0].mxu0
    %v1418 = vpop.f32.mrb[0].mxu0
    %1419 = vdwg.mxu0
    %1420 = vmatprep.subr.bf16.mxu0 %v729
    %1421 = vmatpush1.bf16.msra.mxu0 %v728
    %1422 = vmatprep.subr.bf16.mxu0 %v733
    %1423 = vmatpush1.bf16.msra.mxu0 %v732
    %1424 = vmatprep.subr.bf16.mxu0 %v737
    %1425 = vmatpush1.bf16.msra.mxu0 %v736
    %1426 = vmatprep.subr.bf16.mxu0 %v741
    %1427 = vmatpush1.bf16.msra.mxu0 %v740
    %1428 = vmatprep.subr.bf16.mxu0 %v745
    %1429 = vmatpush1.bf16.msra.mxu0 %v744
    %1430 = vmatprep.subr.bf16.mxu0 %v749
    %1431 = vmatpush1.bf16.msra.mxu0 %v748
    %1432 = vmatprep.subr.bf16.mxu0 %v753
    %1433 = vmatpush1.bf16.msra.mxu0 %v752
    %1434 = vmatprep.subr.bf16.mxu0 %v757
    %1435 = vmatpush1.bf16.msra.mxu0 %v756
    %1436 = vmatprep.subr.bf16.mxu0 0
    %1437 = vmatpush1.bf16.msra.mxu0 0
    %1438 = vmatprep.subr.bf16.mxu0 0
    %1439 = vmatpush1.bf16.msra.mxu0 0
    %1440 = vmatprep.subr.bf16.mxu0 0
    %1441 = vmatpush1.bf16.msra.mxu0 0
    %1442 = vmatprep.subr.bf16.mxu0 0
    %1443 = vmatpush1.bf16.msra.mxu0 0
    %1444 = vmatprep.subr.bf16.mxu0 0
    %1445 = vmatpush1.bf16.msra.mxu0 0
    %1446 = vmatprep.subr.bf16.mxu0 0
    %1447 = vmatpush1.bf16.msra.mxu0 0
    %1448 = vmatprep.subr.bf16.mxu0 0
    %1449 = vmatpush1.bf16.msra.mxu0 0
    %1450 = vmatprep.subr.bf16.mxu0 0
    %1451 = vmatpush1.bf16.msra.mxu0 0
    %1452 = vmatprep.mubr.bf16.mxu0 0
    %1453 = vmatmul.mubr.bf16.gmra.mrb[0].mxu0 %v1378
    %v1454 = vpop.f32.mrb[0].mxu0
    %v1455 = vadd.f32 0.0, %v1454
    %v1456 = vpop.f32.mrb[0].mxu0
    %v1457 = vadd.f32 0.0, %v1456
    %v1458 = vpop.f32.mrb[0].mxu0
    %v1459 = vpop.f32.mrb[0].mxu0
    %1460 = vdwg.mxu0
    %v1461 = vadd.f32 %v1374, %v1414
    %v1462 = vadd.f32 %v1375, %v1416
    %v1463 = vadd.f32 %v1376, %v1455
    %v1464 = vadd.f32 %v1377, %v1457
    %v1465 = vxor.u32 %v1461, 2147483648
    %v1466 = vmul.f32 %v1465, 1.442695
    %v1467 = vpow.pop %v1466
    %v1468 = vadd.f32 %v1467, 1.0
    %v1469 = vrcp.pop %v1468
    %v1470 = vmul.f32 1.0, %v1469
    %v1471 = vxor.u32 %v1462, 2147483648
    %v1472 = vmul.f32 %v1471, 1.442695
    %v1473 = vpow.pop %v1472
    %v1474 = vadd.f32 %v1473, 1.0
    %v1475 = vrcp.pop %v1474
    %v1476 = vmul.f32 1.0, %v1475
    %v1477 = vtanh.pop %v1463
    %v1478 = vxor.u32 %v1464, 2147483648
    %v1479 = vmul.f32 %v1478, 1.442695
    %v1480 = vpow.pop %v1479
    %v1481 = vadd.f32 %v1480, 1.0
    %v1482 = vrcp.pop %v1481
    %v1483 = vmul.f32 1.0, %v1482
    %v1484 = vmul.f32 %v1476, %v1368
    %v1485 = vmul.f32 %v1470, %v1477
    %v1486 = vadd.f32 %v1484, %v1485
    %v1487 = vtanh.pop %v1486
    %v1488 = vmul.f32 %v1483, %v1487
    %s1489 = scalar_lea.vmem [#allocation3], 40
    %1490 = vst [vmem:[%s1489] sm:$0xff] %v1488
    %s1491 = scalar_lea.vmem [#allocation2], 192
    %v1492 = vld [vmem:[%s1491] sm:$0xff]
    %v1493 = vld [vmem:[%s1491 + $0x8] sm:$0xff]
    %v1494 = vld [vmem:[%s1491 + $0x10] sm:$0xff]
    %v1495 = vld [vmem:[%s1491 + $0x18] sm:$0xff]
    %v1496 = vpack.c.bf16 %v1488, %v1488
    %1497 = vmatprep.subr.bf16.mxu0 %v727
    %1498 = vmatpush1.bf16.msra.mxu0 %v726
    %1499 = vmatprep.subr.bf16.mxu0 %v731
    %1500 = vmatpush1.bf16.msra.mxu0 %v730
    %1501 = vmatprep.subr.bf16.mxu0 %v735
    %1502 = vmatpush1.bf16.msra.mxu0 %v734
    %1503 = vmatprep.subr.bf16.mxu0 %v739
    %1504 = vmatpush1.bf16.msra.mxu0 %v738
    %1505 = vmatprep.subr.bf16.mxu0 %v743
    %1506 = vmatpush1.bf16.msra.mxu0 %v742
    %1507 = vmatprep.subr.bf16.mxu0 %v747
    %1508 = vmatpush1.bf16.msra.mxu0 %v746
    %1509 = vmatprep.subr.bf16.mxu0 %v751
    %1510 = vmatpush1.bf16.msra.mxu0 %v750
    %1511 = vmatprep.subr.bf16.mxu0 %v755
    %1512 = vmatpush1.bf16.msra.mxu0 %v754
    %1513 = vmatprep.subr.bf16.mxu0 0
    %1514 = vmatpush1.bf16.msra.mxu0 0
    %1515 = vmatprep.subr.bf16.mxu0 0
    %1516 = vmatpush1.bf16.msra.mxu0 0
    %1517 = vmatprep.subr.bf16.mxu0 0
    %1518 = vmatpush1.bf16.msra.mxu0 0
    %1519 = vmatprep.subr.bf16.mxu0 0
    %1520 = vmatpush1.bf16.msra.mxu0 0
    %1521 = vmatprep.subr.bf16.mxu0 0
    %1522 = vmatpush1.bf16.msra.mxu0 0
    %1523 = vmatprep.subr.bf16.mxu0 0
    %1524 = vmatpush1.bf16.msra.mxu0 0
    %1525 = vmatprep.subr.bf16.mxu0 0
    %1526 = vmatpush1.bf16.msra.mxu0 0
    %1527 = vmatprep.subr.bf16.mxu0 0
    %1528 = vmatpush1.bf16.msra.mxu0 0
    %1529 = vmatprep.mubr.bf16.mxu0 0
    %1530 = vmatmul.mubr.bf16.gmra.mrb[0].mxu0 %v1496
    %v1531 = vpop.f32.mrb[0].mxu0
    %v1532 = vadd.f32 0.0, %v1531
    %v1533 = vpop.f32.mrb[0].mxu0
    %v1534 = vadd.f32 0.0, %v1533
    %v1535 = vpop.f32.mrb[0].mxu0
    %v1536 = vpop.f32.mrb[0].mxu0
    %1537 = vdwg.mxu0
    %1538 = vmatprep.subr.bf16.mxu0 %v729
    %1539 = vmatpush1.bf16.msra.mxu0 %v728
    %1540 = vmatprep.subr.bf16.mxu0 %v733
    %1541 = vmatpush1.bf16.msra.mxu0 %v732
    %1542 = vmatprep.subr.bf16.mxu0 %v737
    %1543 = vmatpush1.bf16.msra.mxu0 %v736
    %1544 = vmatprep.subr.bf16.mxu0 %v741
    %1545 = vmatpush1.bf16.msra.mxu0 %v740
    %1546 = vmatprep.subr.bf16.mxu0 %v745
    %1547 = vmatpush1.bf16.msra.mxu0 %v744
    %1548 = vmatprep.subr.bf16.mxu0 %v749
    %1549 = vmatpush1.bf16.msra.mxu0 %v748
    %1550 = vmatprep.subr.bf16.mxu0 %v753
    %1551 = vmatpush1.bf16.msra.mxu0 %v752
    %1552 = vmatprep.subr.bf16.mxu0 %v757
    %1553 = vmatpush1.bf16.msra.mxu0 %v756
    %1554 = vmatprep.subr.bf16.mxu0 0
    %1555 = vmatpush1.bf16.msra.mxu0 0
    %1556 = vmatprep.subr.bf16.mxu0 0
    %1557 = vmatpush1.bf16.msra.mxu0 0
    %1558 = vmatprep.subr.bf16.mxu0 0
    %1559 = vmatpush1.bf16.msra.mxu0 0
    %1560 = vmatprep.subr.bf16.mxu0 0
    %1561 = vmatpush1.bf16.msra.mxu0 0
    %1562 = vmatprep.subr.bf16.mxu0 0
    %1563 = vmatpush1.bf16.msra.mxu0 0
    %1564 = vmatprep.subr.bf16.mxu0 0
    %1565 = vmatpush1.bf16.msra.mxu0 0
    %1566 = vmatprep.subr.bf16.mxu0 0
    %1567 = vmatpush1.bf16.msra.mxu0 0
    %1568 = vmatprep.subr.bf16.mxu0 0
    %1569 = vmatpush1.bf16.msra.mxu0 0
    %1570 = vmatprep.mubr.bf16.mxu0 0
    %1571 = vmatmul.mubr.bf16.gmra.mrb[0].mxu0 %v1496
    %v1572 = vpop.f32.mrb[0].mxu0
    %v1573 = vadd.f32 0.0, %v1572
    %v1574 = vpop.f32.mrb[0].mxu0
    %v1575 = vadd.f32 0.0, %v1574
    %v1576 = vpop.f32.mrb[0].mxu0
    %v1577 = vpop.f32.mrb[0].mxu0
    %1578 = vdwg.mxu0
    %v1579 = vadd.f32 %v1492, %v1532
    %v1580 = vadd.f32 %v1493, %v1534
    %v1581 = vadd.f32 %v1494, %v1573
    %v1582 = vadd.f32 %v1495, %v1575
    %v1583 = vxor.u32 %v1579, 2147483648
    %v1584 = vmul.f32 %v1583, 1.442695
    %v1585 = vpow.pop %v1584
    %v1586 = vadd.f32 %v1585, 1.0
    %v1587 = vrcp.pop %v1586
    %v1588 = vmul.f32 1.0, %v1587
    %v1589 = vxor.u32 %v1580, 2147483648
    %v1590 = vmul.f32 %v1589, 1.442695
    %v1591 = vpow.pop %v1590
    %v1592 = vadd.f32 %v1591, 1.0
    %v1593 = vrcp.pop %v1592
    %v1594 = vmul.f32 1.0, %v1593
    %v1595 = vtanh.pop %v1581
    %v1596 = vxor.u32 %v1582, 2147483648
    %v1597 = vmul.f32 %v1596, 1.442695
    %v1598 = vpow.pop %v1597
    %v1599 = vadd.f32 %v1598, 1.0
    %v1600 = vrcp.pop %v1599
    %v1601 = vmul.f32 1.0, %v1600
    %v1602 = vmul.f32 %v1594, %v1486
    %v1603 = vmul.f32 %v1588, %v1595
    %v1604 = vadd.f32 %v1602, %v1603
    %v1605 = vtanh.pop %v1604
    %v1606 = vmul.f32 %v1601, %v1605
    %s1607 = scalar_lea.vmem [#allocation3], 48
    %1608 = vst [vmem:[%s1607] sm:$0xff] %v1606
    %s1609 = scalar_lea.vmem [#allocation2], 224
    %v1610 = vld [vmem:[%s1609] sm:$0xff]
    %v1611 = vld [vmem:[%s1609 + $0x8] sm:$0xff]
    %v1612 = vld [vmem:[%s1609 + $0x10] sm:$0xff]
    %v1613 = vld [vmem:[%s1609 + $0x18] sm:$0xff]
    %v1614 = vpack.c.bf16 %v1606, %v1606
    %1615 = vmatprep.subr.bf16.mxu0 %v727
    %1616 = vmatpush1.bf16.msra.mxu0 %v726
    %1617 = vmatprep.subr.bf16.mxu0 %v731
    %1618 = vmatpush1.bf16.msra.mxu0 %v730
    %1619 = vmatprep.subr.bf16.mxu0 %v735
    %1620 = vmatpush1.bf16.msra.mxu0 %v734
    %1621 = vmatprep.subr.bf16.mxu0 %v739
    %1622 = vmatpush1.bf16.msra.mxu0 %v738
    %1623 = vmatprep.subr.bf16.mxu0 %v743
    %1624 = vmatpush1.bf16.msra.mxu0 %v742
    %1625 = vmatprep.subr.bf16.mxu0 %v747
    %1626 = vmatpush1.bf16.msra.mxu0 %v746
    %1627 = vmatprep.subr.bf16.mxu0 %v751
    %1628 = vmatpush1.bf16.msra.mxu0 %v750
    %1629 = vmatprep.subr.bf16.mxu0 %v755
    %1630 = vmatpush1.bf16.msra.mxu0 %v754
    %1631 = vmatprep.subr.bf16.mxu0 0
    %1632 = vmatpush1.bf16.msra.mxu0 0
    %1633 = vmatprep.subr.bf16.mxu0 0
    %1634 = vmatpush1.bf16.msra.mxu0 0
    %1635 = vmatprep.subr.bf16.mxu0 0
    %1636 = vmatpush1.bf16.msra.mxu0 0
    %1637 = vmatprep.subr.bf16.mxu0 0
    %1638 = vmatpush1.bf16.msra.mxu0 0
    %1639 = vmatprep.subr.bf16.mxu0 0
    %1640 = vmatpush1.bf16.msra.mxu0 0
    %1641 = vmatprep.subr.bf16.mxu0 0
    %1642 = vmatpush1.bf16.msra.mxu0 0
    %1643 = vmatprep.subr.bf16.mxu0 0
    %1644 = vmatpush1.bf16.msra.mxu0 0
    %1645 = vmatprep.subr.bf16.mxu0 0
    %1646 = vmatpush1.bf16.msra.mxu0 0
    %1647 = vmatprep.mubr.bf16.mxu0 0
    %1648 = vmatmul.mubr.bf16.gmra.mrb[0].mxu0 %v1614
    %v1649 = vpop.f32.mrb[0].mxu0
    %v1650 = vadd.f32 0.0, %v1649
    %v1651 = vpop.f32.mrb[0].mxu0
    %v1652 = vadd.f32 0.0, %v1651
    %v1653 = vpop.f32.mrb[0].mxu0
    %v1654 = vpop.f32.mrb[0].mxu0
    %1655 = vdwg.mxu0
    %1656 = vmatprep.subr.bf16.mxu0 %v729
    %1657 = vmatpush1.bf16.msra.mxu0 %v728
    %1658 = vmatprep.subr.bf16.mxu0 %v733
    %1659 = vmatpush1.bf16.msra.mxu0 %v732
    %1660 = vmatprep.subr.bf16.mxu0 %v737
    %1661 = vmatpush1.bf16.msra.mxu0 %v736
    %1662 = vmatprep.subr.bf16.mxu0 %v741
    %1663 = vmatpush1.bf16.msra.mxu0 %v740
    %1664 = vmatprep.subr.bf16.mxu0 %v745
    %1665 = vmatpush1.bf16.msra.mxu0 %v744
    %1666 = vmatprep.subr.bf16.mxu0 %v749
    %1667 = vmatpush1.bf16.msra.mxu0 %v748
    %1668 = vmatprep.subr.bf16.mxu0 %v753
    %1669 = vmatpush1.bf16.msra.mxu0 %v752
    %1670 = vmatprep.subr.bf16.mxu0 %v757
    %1671 = vmatpush1.bf16.msra.mxu0 %v756
    %1672 = vmatprep.subr.bf16.mxu0 0
    %1673 = vmatpush1.bf16.msra.mxu0 0
    %1674 = vmatprep.subr.bf16.mxu0 0
    %1675 = vmatpush1.bf16.msra.mxu0 0
    %1676 = vmatprep.subr.bf16.mxu0 0
    %1677 = vmatpush1.bf16.msra.mxu0 0
    %1678 = vmatprep.subr.bf16.mxu0 0
    %1679 = vmatpush1.bf16.msra.mxu0 0
    %1680 = vmatprep.subr.bf16.mxu0 0
    %1681 = vmatpush1.bf16.msra.mxu0 0
    %1682 = vmatprep.subr.bf16.mxu0 0
    %1683 = vmatpush1.bf16.msra.mxu0 0
    %1684 = vmatprep.subr.bf16.mxu0 0
    %1685 = vmatpush1.bf16.msra.mxu0 0
    %1686 = vmatprep.subr.bf16.mxu0 0
    %1687 = vmatpush1.bf16.msra.mxu0 0
    %1688 = vmatprep.mubr.bf16.mxu0 0
    %1689 = vmatmul.mubr.bf16.gmra.mrb[0].mxu0 %v1614
    %v1690 = vpop.f32.mrb[0].mxu0
    %v1691 = vadd.f32 0.0, %v1690
    %v1692 = vpop.f32.mrb[0].mxu0
    %v1693 = vadd.f32 0.0, %v1692
    %v1694 = vpop.f32.mrb[0].mxu0
    %v1695 = vpop.f32.mrb[0].mxu0
    %1696 = vdwg.mxu0
    %v1697 = vadd.f32 %v1610, %v1650
    %v1698 = vadd.f32 %v1611, %v1652
    %v1699 = vadd.f32 %v1612, %v1691
    %v1700 = vadd.f32 %v1613, %v1693
    %v1701 = vxor.u32 %v1697, 2147483648
    %v1702 = vmul.f32 %v1701, 1.442695
    %v1703 = vpow.pop %v1702
    %v1704 = vadd.f32 %v1703, 1.0
    %v1705 = vrcp.pop %v1704
    %v1706 = vmul.f32 1.0, %v1705
    %v1707 = vxor.u32 %v1698, 2147483648
    %v1708 = vmul.f32 %v1707, 1.442695
    %v1709 = vpow.pop %v1708
    %v1710 = vadd.f32 %v1709, 1.0
    %v1711 = vrcp.pop %v1710
    %v1712 = vmul.f32 1.0, %v1711
    %v1713 = vtanh.pop %v1699
    %v1714 = vxor.u32 %v1700, 2147483648
    %v1715 = vmul.f32 %v1714, 1.442695
    %v1716 = vpow.pop %v1715
    %v1717 = vadd.f32 %v1716, 1.0
    %v1718 = vrcp.pop %v1717
    %v1719 = vmul.f32 1.0, %v1718
    %v1720 = vmul.f32 %v1712, %v1604
    %v1721 = vmul.f32 %v1706, %v1713
    %v1722 = vadd.f32 %v1720, %v1721
    %v1723 = vtanh.pop %v1722
    %v1724 = vmul.f32 %v1719, %v1723
    %s1725 = scalar_lea.vmem [#allocation3], 56
    %1726 = vst [vmem:[%s1725] sm:$0xff] %v1724
    %1727 = vst [vmem:[#allocation24] sm:$0xff] %v1724
    %1728 = vst [vmem:[#allocation26] sm:$0xff] %v1722
    %v1729 = vld [vmem:[#allocation3] sm:$0xff]
    %v1730 = vld [vmem:[#allocation3 + $0x8] sm:$0xff]
    %v1731 = vld [vmem:[#allocation3 + $0x10] sm:$0xff]
    %v1732 = vld [vmem:[#allocation3 + $0x18] sm:$0xff]
    %v1733 = vld [vmem:[#allocation3 + $0x20] sm:$0xff]
    %v1734 = vld [vmem:[#allocation3 + $0x28] sm:$0xff]
    %v1735 = vld [vmem:[#allocation3 + $0x30] sm:$0xff]
    %v1736 = vld [vmem:[#allocation3 + $0x38] sm:$0xff]
    %v1737 = vpack.c.bf16 %v1730, %v1729
    %v1738 = vpack.c.bf16 %v1732, %v1731
    %v1739 = vpack.c.bf16 %v1734, %v1733
    %v1740 = vpack.c.bf16 %v1736, %v1735
    %v1741 = vld [vmem:[#allocation16] sm:$0xff]
    %v1742 = vld [vmem:[#allocation16 + $0x8] sm:$0xff]
    %v1743 = vld [vmem:[#allocation16 + $0x10] sm:$0xff]
    %v1744 = vld [vmem:[#allocation16 + $0x18] sm:$0xff]
    %v1745 = vld [vmem:[#allocation16 + $0x20] sm:$0xff]
    %v1746 = vld [vmem:[#allocation16 + $0x28] sm:$0xff]
    %v1747 = vld [vmem:[#allocation16 + $0x30] sm:$0xff]
    %v1748 = vld [vmem:[#allocation16 + $0x38] sm:$0xff]
    %v1749 = vld [vmem:[#allocation16 + $0x40] sm:$0xff]
    %v1750 = vld [vmem:[#allocation16 + $0x48] sm:$0xff]
    %v1751 = vld [vmem:[#allocation16 + $0x50] sm:$0xff]
    %v1752 = vld [vmem:[#allocation16 + $0x58] sm:$0xff]
    %v1753 = vld [vmem:[#allocation16 + $0x60] sm:$0xff]
    %v1754 = vld [vmem:[#allocation16 + $0x68] sm:$0xff]
    %v1755 = vld [vmem:[#allocation16 + $0x70] sm:$0xff]
    %v1756 = vld [vmem:[#allocation16 + $0x78] sm:$0xff]
    %v1757 = vld [vmem:[#allocation16 + $0x80] sm:$0xff]
    %v1758 = vld [vmem:[#allocation16 + $0x88] sm:$0xff]
    %v1759 = vld [vmem:[#allocation16 + $0x90] sm:$0xff]
    %v1760 = vld [vmem:[#allocation16 + $0x98] sm:$0xff]
    %v1761 = vld [vmem:[#allocation16 + $0xa0] sm:$0xff]
    %v1762 = vld [vmem:[#allocation16 + $0xa8] sm:$0xff]
    %v1763 = vld [vmem:[#allocation16 + $0xb0] sm:$0xff]
    %v1764 = vld [vmem:[#allocation16 + $0xb8] sm:$0xff]
    %v1765 = vld [vmem:[#allocation16 + $0xc0] sm:$0xff]
    %v1766 = vld [vmem:[#allocation16 + $0xc8] sm:$0xff]
    %v1767 = vld [vmem:[#allocation16 + $0xd0] sm:$0xff]
    %v1768 = vld [vmem:[#allocation16 + $0xd8] sm:$0xff]
    %v1769 = vld [vmem:[#allocation16 + $0xe0] sm:$0xff]
    %v1770 = vld [vmem:[#allocation16 + $0xe8] sm:$0xff]
    %v1771 = vld [vmem:[#allocation16 + $0xf0] sm:$0xff]
    %v1772 = vld [vmem:[#allocation16 + $0xf8] sm:$0xff]
    %v1773 = vld [vmem:[#allocation17] sm:$0xff]
    %v1774 = vld [vmem:[#allocation17 + $0x8] sm:$0xff]
    %v1775 = vld [vmem:[#allocation17 + $0x10] sm:$0xff]
    %v1776 = vld [vmem:[#allocation17 + $0x18] sm:$0xff]
    %v1777 = vld [vmem:[#allocation17 + $0x20] sm:$0xff]
    %v1778 = vld [vmem:[#allocation17 + $0x28] sm:$0xff]
    %v1779 = vld [vmem:[#allocation17 + $0x30] sm:$0xff]
    %v1780 = vld [vmem:[#allocation17 + $0x38] sm:$0xff]
    %v1781 = vld [vmem:[#allocation17 + $0x40] sm:$0xff]
    %v1782 = vld [vmem:[#allocation17 + $0x48] sm:$0xff]
    %v1783 = vld [vmem:[#allocation17 + $0x50] sm:$0xff]
    %v1784 = vld [vmem:[#allocation17 + $0x58] sm:$0xff]
    %v1785 = vld [vmem:[#allocation17 + $0x60] sm:$0xff]
    %v1786 = vld [vmem:[#allocation17 + $0x68] sm:$0xff]
    %v1787 = vld [vmem:[#allocation17 + $0x70] sm:$0xff]
    %v1788 = vld [vmem:[#allocation17 + $0x78] sm:$0xff]
    %v1789 = vld [vmem:[#allocation17 + $0x80] sm:$0xff]
    %v1790 = vld [vmem:[#allocation17 + $0x88] sm:$0xff]
    %v1791 = vld [vmem:[#allocation17 + $0x90] sm:$0xff]
    %v1792 = vld [vmem:[#allocation17 + $0x98] sm:$0xff]
    %v1793 = vld [vmem:[#allocation17 + $0xa0] sm:$0xff]
    %v1794 = vld [vmem:[#allocation17 + $0xa8] sm:$0xff]
    %v1795 = vld [vmem:[#allocation17 + $0xb0] sm:$0xff]
    %v1796 = vld [vmem:[#allocation17 + $0xb8] sm:$0xff]
    %v1797 = vld [vmem:[#allocation17 + $0xc0] sm:$0xff]
    %v1798 = vld [vmem:[#allocation17 + $0xc8] sm:$0xff]
    %v1799 = vld [vmem:[#allocation17 + $0xd0] sm:$0xff]
    %v1800 = vld [vmem:[#allocation17 + $0xd8] sm:$0xff]
    %v1801 = vld [vmem:[#allocation17 + $0xe0] sm:$0xff]
    %v1802 = vld [vmem:[#allocation17 + $0xe8] sm:$0xff]
    %v1803 = vld [vmem:[#allocation17 + $0xf0] sm:$0xff]
    %v1804 = vld [vmem:[#allocation17 + $0xf8] sm:$0xff]
    %v1805 = vld [vmem:[#allocation19] sm:$0xf]
    %v1807 = vlaneseq
    %v1808 = vshrl.u32 %v1807, 7
    %v1809 = vsub.s32 0, %v1808
    %v1810 = vrot.slane %v1805, %v1809
    %v1811 = vlaneseq
    %v1812 = vshrl.u32 %v1811, 7
    %v1813 = vsub.s32 1, %v1812
    %v1814 = vrot.slane %v1805, %v1813
    %v1815 = vlaneseq
    %v1816 = vshrl.u32 %v1815, 7
    %v1817 = vsub.s32 2, %v1816
    %v1818 = vrot.slane %v1805, %v1817
    %v1819 = vlaneseq
    %v1820 = vshrl.u32 %v1819, 7
    %v1821 = vsub.s32 3, %v1820
    %v1822 = vrot.slane %v1805, %v1821
    %v1859 = vunpack.c.l.b16 %v1741
    %v1860 = vunpack.c.h.b16 %v1741
    %v1861 = vunpack.c.l.b16 %v1742
    %v1862 = vunpack.c.h.b16 %v1742
    %v1863 = vunpack.c.l.b16 %v1743
    %v1864 = vunpack.c.h.b16 %v1743
    %v1865 = vunpack.c.l.b16 %v1744
    %v1866 = vunpack.c.h.b16 %v1744
    %v1867 = vunpack.c.l.b16 %v1745
    %v1868 = vunpack.c.h.b16 %v1745
    %v1869 = vunpack.c.l.b16 %v1746
    %v1870 = vunpack.c.h.b16 %v1746
    %v1871 = vunpack.c.l.b16 %v1747
    %v1872 = vunpack.c.h.b16 %v1747
    %v1873 = vunpack.c.l.b16 %v1748
    %v1874 = vunpack.c.h.b16 %v1748
    %v1875 = vunpack.c.l.b16 %v1749
    %v1876 = vunpack.c.h.b16 %v1749
    %v1877 = vunpack.c.l.b16 %v1750
    %v1878 = vunpack.c.h.b16 %v1750
    %v1879 = vunpack.c.l.b16 %v1751
    %v1880 = vunpack.c.h.b16 %v1751
    %v1881 = vunpack.c.l.b16 %v1752
    %v1882 = vunpack.c.h.b16 %v1752
    %v1883 = vunpack.c.l.b16 %v1753
    %v1884 = vunpack.c.h.b16 %v1753
    %v1885 = vunpack.c.l.b16 %v1754
    %v1886 = vunpack.c.h.b16 %v1754
    %v1887 = vunpack.c.l.b16 %v1755
    %v1888 = vunpack.c.h.b16 %v1755
    %v1889 = vunpack.c.l.b16 %v1756
    %v1890 = vunpack.c.h.b16 %v1756
    %v1891 = vunpack.c.l.b16 %v1757
    %v1892 = vunpack.c.h.b16 %v1757
    %v1893 = vunpack.c.l.b16 %v1758
    %v1894 = vunpack.c.h.b16 %v1758
    %v1895 = vunpack.c.l.b16 %v1759
    %v1896 = vunpack.c.h.b16 %v1759
    %v1897 = vunpack.c.l.b16 %v1760
    %v1898 = vunpack.c.h.b16 %v1760
    %v1899 = vunpack.c.l.b16 %v1761
    %v1900 = vunpack.c.h.b16 %v1761
    %v1901 = vunpack.c.l.b16 %v1762
    %v1902 = vunpack.c.h.b16 %v1762
    %v1903 = vunpack.c.l.b16 %v1763
    %v1904 = vunpack.c.h.b16 %v1763
    %v1905 = vunpack.c.l.b16 %v1764
    %v1906 = vunpack.c.h.b16 %v1764
    %v1907 = vunpack.c.l.b16 %v1765
    %v1908 = vunpack.c.h.b16 %v1765
    %v1909 = vunpack.c.l.b16 %v1766
    %v1910 = vunpack.c.h.b16 %v1766
    %v1911 = vunpack.c.l.b16 %v1767
    %v1912 = vunpack.c.h.b16 %v1767
    %v1913 = vunpack.c.l.b16 %v1768
    %v1914 = vunpack.c.h.b16 %v1768
    %v1915 = vunpack.c.l.b16 %v1769
    %v1916 = vunpack.c.h.b16 %v1769
    %v1917 = vunpack.c.l.b16 %v1770
    %v1918 = vunpack.c.h.b16 %v1770
    %v1919 = vunpack.c.l.b16 %v1771
    %v1920 = vunpack.c.h.b16 %v1771
    %v1921 = vunpack.c.l.b16 %v1772
    %v1922 = vunpack.c.h.b16 %v1772
    %v1923 = vpack.c.b16 %v1863, %v1859
    %v1924 = vpack.c.b16 %v1864, %v1860
    %v1925 = vpack.c.b16 %v1865, %v1861
    %v1926 = vpack.c.b16 %v1866, %v1862
    %v1927 = vpack.c.b16 %v1871, %v1867
    %v1928 = vpack.c.b16 %v1872, %v1868
    %v1929 = vpack.c.b16 %v1873, %v1869
    %v1930 = vpack.c.b16 %v1874, %v1870
    %v1931 = vpack.c.b16 %v1879, %v1875
    %v1932 = vpack.c.b16 %v1880, %v1876
    %v1933 = vpack.c.b16 %v1881, %v1877
    %v1934 = vpack.c.b16 %v1882, %v1878
    %v1935 = vpack.c.b16 %v1887, %v1883
    %v1936 = vpack.c.b16 %v1888, %v1884
    %v1937 = vpack.c.b16 %v1889, %v1885
    %v1938 = vpack.c.b16 %v1890, %v1886
    %v1939 = vpack.c.b16 %v1895, %v1891
    %v1940 = vpack.c.b16 %v1896, %v1892
    %v1941 = vpack.c.b16 %v1897, %v1893
    %v1942 = vpack.c.b16 %v1898, %v1894
    %v1943 = vpack.c.b16 %v1903, %v1899
    %v1944 = vpack.c.b16 %v1904, %v1900
    %v1945 = vpack.c.b16 %v1905, %v1901
    %v1946 = vpack.c.b16 %v1906, %v1902
    %v1947 = vpack.c.b16 %v1911, %v1907
    %v1948 = vpack.c.b16 %v1912, %v1908
    %v1949 = vpack.c.b16 %v1913, %v1909
    %v1950 = vpack.c.b16 %v1914, %v1910
    %v1951 = vpack.c.b16 %v1919, %v1915
    %v1952 = vpack.c.b16 %v1920, %v1916
    %v1953 = vpack.c.b16 %v1921, %v1917
    %v1954 = vpack.c.b16 %v1922, %v1918
    %1987 = vmatprep.subr.bf16.mxu0 %v1924
    %1988 = vmatpush1.bf16.msra.mxu0 %v1923
    %1989 = vmatprep.subr.bf16.mxu0 %v1928
    %1990 = vmatpush1.bf16.msra.mxu0 %v1927
    %1991 = vmatprep.subr.bf16.mxu0 %v1932
    %1992 = vmatpush1.bf16.msra.mxu0 %v1931
    %1993 = vmatprep.subr.bf16.mxu0 %v1936
    %1994 = vmatpush1.bf16.msra.mxu0 %v1935
    %1995 = vmatprep.subr.bf16.mxu0 %v1940
    %1996 = vmatpush1.bf16.msra.mxu0 %v1939
    %1997 = vmatprep.subr.bf16.mxu0 %v1944
    %1998 = vmatpush1.bf16.msra.mxu0 %v1943
    %1999 = vmatprep.subr.bf16.mxu0 %v1948
    %2000 = vmatpush1.bf16.msra.mxu0 %v1947
    %2001 = vmatprep.subr.bf16.mxu0 %v1952
    %2002 = vmatpush1.bf16.msra.mxu0 %v1951
    %2003 = vmatprep.subr.bf16.mxu0 0
    %2004 = vmatpush1.bf16.msra.mxu0 0
    %2005 = vmatprep.subr.bf16.mxu0 0
    %2006 = vmatpush1.bf16.msra.mxu0 0
    %2007 = vmatprep.subr.bf16.mxu0 0
    %2008 = vmatpush1.bf16.msra.mxu0 0
    %2009 = vmatprep.subr.bf16.mxu0 0
    %2010 = vmatpush1.bf16.msra.mxu0 0
    %2011 = vmatprep.subr.bf16.mxu0 0
    %2012 = vmatpush1.bf16.msra.mxu0 0
    %2013 = vmatprep.subr.bf16.mxu0 0
    %2014 = vmatpush1.bf16.msra.mxu0 0
    %2015 = vmatprep.subr.bf16.mxu0 0
    %2016 = vmatpush1.bf16.msra.mxu0 0
    %2017 = vmatprep.subr.bf16.mxu0 0
    %2018 = vmatpush1.bf16.msra.mxu0 0
    %2019 = vmatprep.mubr.bf16.mxu0 0
    %2020 = vmatmul.mubr.bf16.gmra.mrb[0].mxu0 %v1737
    %v2021 = vpop.f32.mrb[0].mxu0
    %v2022 = vadd.f32 %v1810, %v2021
    %v2023 = vpop.f32.mrb[0].mxu0
    %v2024 = vadd.f32 %v1814, %v2023
    %v2025 = vpop.f32.mrb[0].mxu0
    %v2026 = vadd.f32 %v1810, %v2025
    %v2027 = vpop.f32.mrb[0].mxu0
    %v2028 = vadd.f32 %v1814, %v2027
    %2029 = vmatprep.mubr.bf16.mxu0 0
    %2030 = vmatmul.mubr.bf16.gmra.mrb[0].mxu0 %v1738
    %v2031 = vpop.f32.mrb[0].mxu0
    %v2032 = vadd.f32 %v1810, %v2031
    %v2033 = vpop.f32.mrb[0].mxu0
    %v2034 = vadd.f32 %v1814, %v2033
    %v2035 = vpop.f32.mrb[0].mxu0
    %v2036 = vadd.f32 %v1810, %v2035
    %v2037 = vpop.f32.mrb[0].mxu0
    %v2038 = vadd.f32 %v1814, %v2037
    %2039 = vmatprep.mubr.bf16.mxu0 0
    %2040 = vmatmul.mubr.bf16.gmra.mrb[0].mxu0 %v1739
    %v2041 = vpop.f32.mrb[0].mxu0
    %v2042 = vadd.f32 %v1810, %v2041
    %v2043 = vpop.f32.mrb[0].mxu0
    %v2044 = vadd.f32 %v1814, %v2043
    %v2045 = vpop.f32.mrb[0].mxu0
    %v2046 = vadd.f32 %v1810, %v2045
    %v2047 = vpop.f32.mrb[0].mxu0
    %v2048 = vadd.f32 %v1814, %v2047
    %2049 = vmatprep.mubr.bf16.mxu0 0
    %2050 = vmatmul.mubr.bf16.gmra.mrb[0].mxu0 %v1740
    %v2051 = vpop.f32.mrb[0].mxu0
    %v2052 = vadd.f32 %v1810, %v2051
    %v2053 = vpop.f32.mrb[0].mxu0
    %v2054 = vadd.f32 %v1814, %v2053
    %v2055 = vpop.f32.mrb[0].mxu0
    %v2056 = vadd.f32 %v1810, %v2055
    %v2057 = vpop.f32.mrb[0].mxu0
    %v2058 = vadd.f32 %v1814, %v2057
    %2059 = vdwg.mxu0
    %2060 = vmatprep.subr.bf16.mxu0 %v1926
    %2061 = vmatpush1.bf16.msra.mxu0 %v1925
    %2062 = vmatprep.subr.bf16.mxu0 %v1930
    %2063 = vmatpush1.bf16.msra.mxu0 %v1929
    %2064 = vmatprep.subr.bf16.mxu0 %v1934
    %2065 = vmatpush1.bf16.msra.mxu0 %v1933
    %2066 = vmatprep.subr.bf16.mxu0 %v1938
    %2067 = vmatpush1.bf16.msra.mxu0 %v1937
    %2068 = vmatprep.subr.bf16.mxu0 %v1942
    %2069 = vmatpush1.bf16.msra.mxu0 %v1941
    %2070 = vmatprep.subr.bf16.mxu0 %v1946
    %2071 = vmatpush1.bf16.msra.mxu0 %v1945
    %2072 = vmatprep.subr.bf16.mxu0 %v1950
    %2073 = vmatpush1.bf16.msra.mxu0 %v1949
    %2074 = vmatprep.subr.bf16.mxu0 %v1954
    %2075 = vmatpush1.bf16.msra.mxu0 %v1953
    %2076 = vmatprep.subr.bf16.mxu0 0
    %2077 = vmatpush1.bf16.msra.mxu0 0
    %2078 = vmatprep.subr.bf16.mxu0 0
    %2079 = vmatpush1.bf16.msra.mxu0 0
    %2080 = vmatprep.subr.bf16.mxu0 0
    %2081 = vmatpush1.bf16.msra.mxu0 0
    %2082 = vmatprep.subr.bf16.mxu0 0
    %2083 = vmatpush1.bf16.msra.mxu0 0
    %2084 = vmatprep.subr.bf16.mxu0 0
    %2085 = vmatpush1.bf16.msra.mxu0 0
    %2086 = vmatprep.subr.bf16.mxu0 0
    %2087 = vmatpush1.bf16.msra.mxu0 0
    %2088 = vmatprep.subr.bf16.mxu0 0
    %2089 = vmatpush1.bf16.msra.mxu0 0
    %2090 = vmatprep.subr.bf16.mxu0 0
    %2091 = vmatpush1.bf16.msra.mxu0 0
    %2092 = vmatprep.mubr.bf16.mxu0 0
    %2093 = vmatmul.mubr.bf16.gmra.mrb[0].mxu0 %v1737
    %v2094 = vpop.f32.mrb[0].mxu0
    %v2095 = vadd.f32 %v1818, %v2094
    %v2096 = vpop.f32.mrb[0].mxu0
    %v2097 = vadd.f32 %v1822, %v2096
    %v2098 = vpop.f32.mrb[0].mxu0
    %v2099 = vadd.f32 %v1818, %v2098
    %v2100 = vpop.f32.mrb[0].mxu0
    %v2101 = vadd.f32 %v1822, %v2100
    %2102 = vmatprep.mubr.bf16.mxu0 0
    %2103 = vmatmul.mubr.bf16.gmra.mrb[0].mxu0 %v1738
    %v2104 = vpop.f32.mrb[0].mxu0
    %v2105 = vadd.f32 %v1818, %v2104
    %v2106 = vpop.f32.mrb[0].mxu0
    %v2107 = vadd.f32 %v1822, %v2106
    %v2108 = vpop.f32.mrb[0].mxu0
    %v2109 = vadd.f32 %v1818, %v2108
    %v2110 = vpop.f32.mrb[0].mxu0
    %v2111 = vadd.f32 %v1822, %v2110
    %2112 = vmatprep.mubr.bf16.mxu0 0
    %2113 = vmatmul.mubr.bf16.gmra.mrb[0].mxu0 %v1739
    %v2114 = vpop.f32.mrb[0].mxu0
    %v2115 = vadd.f32 %v1818, %v2114
    %v2116 = vpop.f32.mrb[0].mxu0
    %v2117 = vadd.f32 %v1822, %v2116
    %v2118 = vpop.f32.mrb[0].mxu0
    %v2119 = vadd.f32 %v1818, %v2118
    %v2120 = vpop.f32.mrb[0].mxu0
    %v2121 = vadd.f32 %v1822, %v2120
    %2122 = vmatprep.mubr.bf16.mxu0 0
    %2123 = vmatmul.mubr.bf16.gmra.mrb[0].mxu0 %v1740
    %v2124 = vpop.f32.mrb[0].mxu0
    %v2125 = vadd.f32 %v1818, %v2124
    %v2126 = vpop.f32.mrb[0].mxu0
    %v2127 = vadd.f32 %v1822, %v2126
    %v2128 = vpop.f32.mrb[0].mxu0
    %v2129 = vadd.f32 %v1818, %v2128
    %v2130 = vpop.f32.mrb[0].mxu0
    %v2131 = vadd.f32 %v1822, %v2130
    %2132 = vdwg.mxu0
    %2133 = vst [vmem:[#allocation2] sm:$0xff] %v2022
    %2134 = vst [vmem:[#allocation2 + $0x8] sm:$0xff] %v2024
    %2135 = vst [vmem:[#allocation2 + $0x10] sm:$0xff] %v2095
    %2136 = vst [vmem:[#allocation2 + $0x18] sm:$0xff] %v2097
    %2137 = vst [vmem:[#allocation2 + $0x20] sm:$0xff] %v2026
    %2138 = vst [vmem:[#allocation2 + $0x28] sm:$0xff] %v2028
    %2139 = vst [vmem:[#allocation2 + $0x30] sm:$0xff] %v2099
    %2140 = vst [vmem:[#allocation2 + $0x38] sm:$0xff] %v2101
    %2141 = vst [vmem:[#allocation2 + $0x40] sm:$0xff] %v2032
    %2142 = vst [vmem:[#allocation2 + $0x48] sm:$0xff] %v2034
    %2143 = vst [vmem:[#allocation2 + $0x50] sm:$0xff] %v2105
    %2144 = vst [vmem:[#allocation2 + $0x58] sm:$0xff] %v2107
    %2145 = vst [vmem:[#allocation2 + $0x60] sm:$0xff] %v2036
    %2146 = vst [vmem:[#allocation2 + $0x68] sm:$0xff] %v2038
    %2147 = vst [vmem:[#allocation2 + $0x70] sm:$0xff] %v2109
    %2148 = vst [vmem:[#allocation2 + $0x78] sm:$0xff] %v2111
    %2149 = vst [vmem:[#allocation2 + $0x80] sm:$0xff] %v2042
    %2150 = vst [vmem:[#allocation2 + $0x88] sm:$0xff] %v2044
    %2151 = vst [vmem:[#allocation2 + $0x90] sm:$0xff] %v2115
    %2152 = vst [vmem:[#allocation2 + $0x98] sm:$0xff] %v2117
    %2153 = vst [vmem:[#allocation2 + $0xa0] sm:$0xff] %v2046
    %2154 = vst [vmem:[#allocation2 + $0xa8] sm:$0xff] %v2048
    %2155 = vst [vmem:[#allocation2 + $0xb0] sm:$0xff] %v2119
    %2156 = vst [vmem:[#allocation2 + $0xb8] sm:$0xff] %v2121
    %2157 = vst [vmem:[#allocation2 + $0xc0] sm:$0xff] %v2052
    %2158 = vst [vmem:[#allocation2 + $0xc8] sm:$0xff] %v2054
    %2159 = vst [vmem:[#allocation2 + $0xd0] sm:$0xff] %v2125
    %2160 = vst [vmem:[#allocation2 + $0xd8] sm:$0xff] %v2127
    %2161 = vst [vmem:[#allocation2 + $0xe0] sm:$0xff] %v2056
    %2162 = vst [vmem:[#allocation2 + $0xe8] sm:$0xff] %v2058
    %2163 = vst [vmem:[#allocation2 + $0xf0] sm:$0xff] %v2129
    %2164 = vst [vmem:[#allocation2 + $0xf8] sm:$0xff] %v2131
    %s2165 = scalar_lea.vmem [#allocation8], 8
    %v2166 = vld [vmem:[%s2165] sm:$0xff]
    %s2167 = scalar_lea.vmem [#allocation10], 8
    %v2168 = vld [vmem:[%s2167] sm:$0xff]
    %v2169 = vld [vmem:[#allocation2] sm:$0xff]
    %v2170 = vld [vmem:[#allocation2 + $0x8] sm:$0xff]
    %v2171 = vld [vmem:[#allocation2 + $0x10] sm:$0xff]
    %v2172 = vld [vmem:[#allocation2 + $0x18] sm:$0xff]
    %v2173 = vpack.c.bf16 %v2166, %v2166
    %v2206 = vunpack.c.l.b16 %v1773
    %v2207 = vunpack.c.h.b16 %v1773
    %v2208 = vunpack.c.l.b16 %v1774
    %v2209 = vunpack.c.h.b16 %v1774
    %v2210 = vunpack.c.l.b16 %v1775
    %v2211 = vunpack.c.h.b16 %v1775
    %v2212 = vunpack.c.l.b16 %v1776
    %v2213 = vunpack.c.h.b16 %v1776
    %v2214 = vunpack.c.l.b16 %v1777
    %v2215 = vunpack.c.h.b16 %v1777
    %v2216 = vunpack.c.l.b16 %v1778
    %v2217 = vunpack.c.h.b16 %v1778
    %v2218 = vunpack.c.l.b16 %v1779
    %v2219 = vunpack.c.h.b16 %v1779
    %v2220 = vunpack.c.l.b16 %v1780
    %v2221 = vunpack.c.h.b16 %v1780
    %v2222 = vunpack.c.l.b16 %v1781
    %v2223 = vunpack.c.h.b16 %v1781
    %v2224 = vunpack.c.l.b16 %v1782
    %v2225 = vunpack.c.h.b16 %v1782
    %v2226 = vunpack.c.l.b16 %v1783
    %v2227 = vunpack.c.h.b16 %v1783
    %v2228 = vunpack.c.l.b16 %v1784
    %v2229 = vunpack.c.h.b16 %v1784
    %v2230 = vunpack.c.l.b16 %v1785
    %v2231 = vunpack.c.h.b16 %v1785
    %v2232 = vunpack.c.l.b16 %v1786
    %v2233 = vunpack.c.h.b16 %v1786
    %v2234 = vunpack.c.l.b16 %v1787
    %v2235 = vunpack.c.h.b16 %v1787
    %v2236 = vunpack.c.l.b16 %v1788
    %v2237 = vunpack.c.h.b16 %v1788
    %v2238 = vunpack.c.l.b16 %v1789
    %v2239 = vunpack.c.h.b16 %v1789
    %v2240 = vunpack.c.l.b16 %v1790
    %v2241 = vunpack.c.h.b16 %v1790
    %v2242 = vunpack.c.l.b16 %v1791
    %v2243 = vunpack.c.h.b16 %v1791
    %v2244 = vunpack.c.l.b16 %v1792
    %v2245 = vunpack.c.h.b16 %v1792
    %v2246 = vunpack.c.l.b16 %v1793
    %v2247 = vunpack.c.h.b16 %v1793
    %v2248 = vunpack.c.l.b16 %v1794
    %v2249 = vunpack.c.h.b16 %v1794
    %v2250 = vunpack.c.l.b16 %v1795
    %v2251 = vunpack.c.h.b16 %v1795
    %v2252 = vunpack.c.l.b16 %v1796
    %v2253 = vunpack.c.h.b16 %v1796
    %v2254 = vunpack.c.l.b16 %v1797
    %v2255 = vunpack.c.h.b16 %v1797
    %v2256 = vunpack.c.l.b16 %v1798
    %v2257 = vunpack.c.h.b16 %v1798
    %v2258 = vunpack.c.l.b16 %v1799
    %v2259 = vunpack.c.h.b16 %v1799
    %v2260 = vunpack.c.l.b16 %v1800
    %v2261 = vunpack.c.h.b16 %v1800
    %v2262 = vunpack.c.l.b16 %v1801
    %v2263 = vunpack.c.h.b16 %v1801
    %v2264 = vunpack.c.l.b16 %v1802
    %v2265 = vunpack.c.h.b16 %v1802
    %v2266 = vunpack.c.l.b16 %v1803
    %v2267 = vunpack.c.h.b16 %v1803
    %v2268 = vunpack.c.l.b16 %v1804
    %v2269 = vunpack.c.h.b16 %v1804
    %v2270 = vpack.c.b16 %v2210, %v2206
    %v2271 = vpack.c.b16 %v2211, %v2207
    %v2272 = vpack.c.b16 %v2212, %v2208
    %v2273 = vpack.c.b16 %v2213, %v2209
    %v2274 = vpack.c.b16 %v2218, %v2214
    %v2275 = vpack.c.b16 %v2219, %v2215
    %v2276 = vpack.c.b16 %v2220, %v2216
    %v2277 = vpack.c.b16 %v2221, %v2217
    %v2278 = vpack.c.b16 %v2226, %v2222
    %v2279 = vpack.c.b16 %v2227, %v2223
    %v2280 = vpack.c.b16 %v2228, %v2224
    %v2281 = vpack.c.b16 %v2229, %v2225
    %v2282 = vpack.c.b16 %v2234, %v2230
    %v2283 = vpack.c.b16 %v2235, %v2231
    %v2284 = vpack.c.b16 %v2236, %v2232
    %v2285 = vpack.c.b16 %v2237, %v2233
    %v2286 = vpack.c.b16 %v2242, %v2238
    %v2287 = vpack.c.b16 %v2243, %v2239
    %v2288 = vpack.c.b16 %v2244, %v2240
    %v2289 = vpack.c.b16 %v2245, %v2241
    %v2290 = vpack.c.b16 %v2250, %v2246
    %v2291 = vpack.c.b16 %v2251, %v2247
    %v2292 = vpack.c.b16 %v2252, %v2248
    %v2293 = vpack.c.b16 %v2253, %v2249
    %v2294 = vpack.c.b16 %v2258, %v2254
    %v2295 = vpack.c.b16 %v2259, %v2255
    %v2296 = vpack.c.b16 %v2260, %v2256
    %v2297 = vpack.c.b16 %v2261, %v2257
    %v2298 = vpack.c.b16 %v2266, %v2262
    %v2299 = vpack.c.b16 %v2267, %v2263
    %v2300 = vpack.c.b16 %v2268, %v2264
    %v2301 = vpack.c.b16 %v2269, %v2265
    %2334 = vmatprep.subr.bf16.mxu0 %v2271
    %2335 = vmatpush1.bf16.msra.mxu0 %v2270
    %2336 = vmatprep.subr.bf16.mxu0 %v2275
    %2337 = vmatpush1.bf16.msra.mxu0 %v2274
    %2338 = vmatprep.subr.bf16.mxu0 %v2279
    %2339 = vmatpush1.bf16.msra.mxu0 %v2278
    %2340 = vmatprep.subr.bf16.mxu0 %v2283
    %2341 = vmatpush1.bf16.msra.mxu0 %v2282
    %2342 = vmatprep.subr.bf16.mxu0 %v2287
    %2343 = vmatpush1.bf16.msra.mxu0 %v2286
    %2344 = vmatprep.subr.bf16.mxu0 %v2291
    %2345 = vmatpush1.bf16.msra.mxu0 %v2290
    %2346 = vmatprep.subr.bf16.mxu0 %v2295
    %2347 = vmatpush1.bf16.msra.mxu0 %v2294
    %2348 = vmatprep.subr.bf16.mxu0 %v2299
    %2349 = vmatpush1.bf16.msra.mxu0 %v2298
    %2350 = vmatprep.subr.bf16.mxu0 0
    %2351 = vmatpush1.bf16.msra.mxu0 0
    %2352 = vmatprep.subr.bf16.mxu0 0
    %2353 = vmatpush1.bf16.msra.mxu0 0
    %2354 = vmatprep.subr.bf16.mxu0 0
    %2355 = vmatpush1.bf16.msra.mxu0 0
    %2356 = vmatprep.subr.bf16.mxu0 0
    %2357 = vmatpush1.bf16.msra.mxu0 0
    %2358 = vmatprep.subr.bf16.mxu0 0
    %2359 = vmatpush1.bf16.msra.mxu0 0
    %2360 = vmatprep.subr.bf16.mxu0 0
    %2361 = vmatpush1.bf16.msra.mxu0 0
    %2362 = vmatprep.subr.bf16.mxu0 0
    %2363 = vmatpush1.bf16.msra.mxu0 0
    %2364 = vmatprep.subr.bf16.mxu0 0
    %2365 = vmatpush1.bf16.msra.mxu0 0
    %2366 = vmatprep.mubr.bf16.mxu0 0
    %2367 = vmatmul.mubr.bf16.gmra.mrb[0].mxu0 %v2173
    %v2368 = vpop.f32.mrb[0].mxu0
    %v2369 = vadd.f32 0.0, %v2368
    %v2370 = vpop.f32.mrb[0].mxu0
    %v2371 = vadd.f32 0.0, %v2370
    %v2372 = vpop.f32.mrb[0].mxu0
    %v2373 = vpop.f32.mrb[0].mxu0
    %2374 = vdwg.mxu0
    %2375 = vmatprep.subr.bf16.mxu0 %v2273
    %2376 = vmatpush1.bf16.msra.mxu0 %v2272
    %2377 = vmatprep.subr.bf16.mxu0 %v2277
    %2378 = vmatpush1.bf16.msra.mxu0 %v2276
    %2379 = vmatprep.subr.bf16.mxu0 %v2281
    %2380 = vmatpush1.bf16.msra.mxu0 %v2280
    %2381 = vmatprep.subr.bf16.mxu0 %v2285
    %2382 = vmatpush1.bf16.msra.mxu0 %v2284
    %2383 = vmatprep.subr.bf16.mxu0 %v2289
    %2384 = vmatpush1.bf16.msra.mxu0 %v2288
    %2385 = vmatprep.subr.bf16.mxu0 %v2293
    %2386 = vmatpush1.bf16.msra.mxu0 %v2292
    %2387 = vmatprep.subr.bf16.mxu0 %v2297
    %2388 = vmatpush1.bf16.msra.mxu0 %v2296
    %2389 = vmatprep.subr.bf16.mxu0 %v2301
    %2390 = vmatpush1.bf16.msra.mxu0 %v2300
    %2391 = vmatprep.subr.bf16.mxu0 0
    %2392 = vmatpush1.bf16.msra.mxu0 0
    %2393 = vmatprep.subr.bf16.mxu0 0
    %2394 = vmatpush1.bf16.msra.mxu0 0
    %2395 = vmatprep.subr.bf16.mxu0 0
    %2396 = vmatpush1.bf16.msra.mxu0 0
    %2397 = vmatprep.subr.bf16.mxu0 0
    %2398 = vmatpush1.bf16.msra.mxu0 0
    %2399 = vmatprep.subr.bf16.mxu0 0
    %2400 = vmatpush1.bf16.msra.mxu0 0
    %2401 = vmatprep.subr.bf16.mxu0 0
    %2402 = vmatpush1.bf16.msra.mxu0 0
    %2403 = vmatprep.subr.bf16.mxu0 0
    %2404 = vmatpush1.bf16.msra.mxu0 0
    %2405 = vmatprep.subr.bf16.mxu0 0
    %2406 = vmatpush1.bf16.msra.mxu0 0
    %2407 = vmatprep.mubr.bf16.mxu0 0
    %2408 = vmatmul.mubr.bf16.gmra.mrb[0].mxu0 %v2173
    %v2409 = vpop.f32.mrb[0].mxu0
    %v2410 = vadd.f32 0.0, %v2409
    %v2411 = vpop.f32.mrb[0].mxu0
    %v2412 = vadd.f32 0.0, %v2411
    %v2413 = vpop.f32.mrb[0].mxu0
    %v2414 = vpop.f32.mrb[0].mxu0
    %2415 = vdwg.mxu0
    %v2416 = vadd.f32 %v2169, %v2369
    %v2417 = vadd.f32 %v2170, %v2371
    %v2418 = vadd.f32 %v2171, %v2410
    %v2419 = vadd.f32 %v2172, %v2412
    %v2420 = vxor.u32 %v2416, 2147483648
    %v2421 = vmul.f32 %v2420, 1.442695
    %v2422 = vpow.pop %v2421
    %v2423 = vadd.f32 %v2422, 1.0
    %v2424 = vrcp.pop %v2423
    %v2425 = vmul.f32 1.0, %v2424
    %v2426 = vxor.u32 %v2417, 2147483648
    %v2427 = vmul.f32 %v2426, 1.442695
    %v2428 = vpow.pop %v2427
    %v2429 = vadd.f32 %v2428, 1.0
    %v2430 = vrcp.pop %v2429
    %v2431 = vmul.f32 1.0, %v2430
    %v2432 = vtanh.pop %v2418
    %v2433 = vxor.u32 %v2419, 2147483648
    %v2434 = vmul.f32 %v2433, 1.442695
    %v2435 = vpow.pop %v2434
    %v2436 = vadd.f32 %v2435, 1.0
    %v2437 = vrcp.pop %v2436
    %v2438 = vmul.f32 1.0, %v2437
    %v2439 = vmul.f32 %v2431, %v2168
    %v2440 = vmul.f32 %v2425, %v2432
    %v2441 = vadd.f32 %v2439, %v2440
    %v2442 = vtanh.pop %v2441
    %v2443 = vmul.f32 %v2438, %v2442
    %2444 = vst [vmem:[#allocation4] sm:$0xff] %v2443
    %v2445 = vld [vmem:[%s901] sm:$0xff]
    %v2446 = vld [vmem:[%s901 + $0x8] sm:$0xff]
    %v2447 = vld [vmem:[%s901 + $0x10] sm:$0xff]
    %v2448 = vld [vmem:[%s901 + $0x18] sm:$0xff]
    %v2449 = vpack.c.bf16 %v2443, %v2443
    %2450 = vmatprep.subr.bf16.mxu0 %v2271
    %2451 = vmatpush1.bf16.msra.mxu0 %v2270
    %2452 = vmatprep.subr.bf16.mxu0 %v2275
    %2453 = vmatpush1.bf16.msra.mxu0 %v2274
    %2454 = vmatprep.subr.bf16.mxu0 %v2279
    %2455 = vmatpush1.bf16.msra.mxu0 %v2278
    %2456 = vmatprep.subr.bf16.mxu0 %v2283
    %2457 = vmatpush1.bf16.msra.mxu0 %v2282
    %2458 = vmatprep.subr.bf16.mxu0 %v2287
    %2459 = vmatpush1.bf16.msra.mxu0 %v2286
    %2460 = vmatprep.subr.bf16.mxu0 %v2291
    %2461 = vmatpush1.bf16.msra.mxu0 %v2290
    %2462 = vmatprep.subr.bf16.mxu0 %v2295
    %2463 = vmatpush1.bf16.msra.mxu0 %v2294
    %2464 = vmatprep.subr.bf16.mxu0 %v2299
    %2465 = vmatpush1.bf16.msra.mxu0 %v2298
    %2466 = vmatprep.subr.bf16.mxu0 0
    %2467 = vmatpush1.bf16.msra.mxu0 0
    %2468 = vmatprep.subr.bf16.mxu0 0
    %2469 = vmatpush1.bf16.msra.mxu0 0
    %2470 = vmatprep.subr.bf16.mxu0 0
    %2471 = vmatpush1.bf16.msra.mxu0 0
    %2472 = vmatprep.subr.bf16.mxu0 0
    %2473 = vmatpush1.bf16.msra.mxu0 0
    %2474 = vmatprep.subr.bf16.mxu0 0
    %2475 = vmatpush1.bf16.msra.mxu0 0
    %2476 = vmatprep.subr.bf16.mxu0 0
    %2477 = vmatpush1.bf16.msra.mxu0 0
    %2478 = vmatprep.subr.bf16.mxu0 0
    %2479 = vmatpush1.bf16.msra.mxu0 0
    %2480 = vmatprep.subr.bf16.mxu0 0
    %2481 = vmatpush1.bf16.msra.mxu0 0
    %2482 = vmatprep.mubr.bf16.mxu0 0
    %2483 = vmatmul.mubr.bf16.gmra.mrb[0].mxu0 %v2449
    %v2484 = vpop.f32.mrb[0].mxu0
    %v2485 = vadd.f32 0.0, %v2484
    %v2486 = vpop.f32.mrb[0].mxu0
    %v2487 = vadd.f32 0.0, %v2486
    %v2488 = vpop.f32.mrb[0].mxu0
    %v2489 = vpop.f32.mrb[0].mxu0
    %2490 = vdwg.mxu0
    %2491 = vmatprep.subr.bf16.mxu0 %v2273
    %2492 = vmatpush1.bf16.msra.mxu0 %v2272
    %2493 = vmatprep.subr.bf16.mxu0 %v2277
    %2494 = vmatpush1.bf16.msra.mxu0 %v2276
    %2495 = vmatprep.subr.bf16.mxu0 %v2281
    %2496 = vmatpush1.bf16.msra.mxu0 %v2280
    %2497 = vmatprep.subr.bf16.mxu0 %v2285
    %2498 = vmatpush1.bf16.msra.mxu0 %v2284
    %2499 = vmatprep.subr.bf16.mxu0 %v2289
    %2500 = vmatpush1.bf16.msra.mxu0 %v2288
    %2501 = vmatprep.subr.bf16.mxu0 %v2293
    %2502 = vmatpush1.bf16.msra.mxu0 %v2292
    %2503 = vmatprep.subr.bf16.mxu0 %v2297
    %2504 = vmatpush1.bf16.msra.mxu0 %v2296
    %2505 = vmatprep.subr.bf16.mxu0 %v2301
    %2506 = vmatpush1.bf16.msra.mxu0 %v2300
    %2507 = vmatprep.subr.bf16.mxu0 0
    %2508 = vmatpush1.bf16.msra.mxu0 0
    %2509 = vmatprep.subr.bf16.mxu0 0
    %2510 = vmatpush1.bf16.msra.mxu0 0
    %2511 = vmatprep.subr.bf16.mxu0 0
    %2512 = vmatpush1.bf16.msra.mxu0 0
    %2513 = vmatprep.subr.bf16.mxu0 0
    %2514 = vmatpush1.bf16.msra.mxu0 0
    %2515 = vmatprep.subr.bf16.mxu0 0
    %2516 = vmatpush1.bf16.msra.mxu0 0
    %2517 = vmatprep.subr.bf16.mxu0 0
    %2518 = vmatpush1.bf16.msra.mxu0 0
    %2519 = vmatprep.subr.bf16.mxu0 0
    %2520 = vmatpush1.bf16.msra.mxu0 0
    %2521 = vmatprep.subr.bf16.mxu0 0
    %2522 = vmatpush1.bf16.msra.mxu0 0
    %2523 = vmatprep.mubr.bf16.mxu0 0
    %2524 = vmatmul.mubr.bf16.gmra.mrb[0].mxu0 %v2449
    %v2525 = vpop.f32.mrb[0].mxu0
    %v2526 = vadd.f32 0.0, %v2525
    %v2527 = vpop.f32.mrb[0].mxu0
    %v2528 = vadd.f32 0.0, %v2527
    %v2529 = vpop.f32.mrb[0].mxu0
    %v2530 = vpop.f32.mrb[0].mxu0
    %2531 = vdwg.mxu0
    %v2532 = vadd.f32 %v2445, %v2485
    %v2533 = vadd.f32 %v2446, %v2487
    %v2534 = vadd.f32 %v2447, %v2526
    %v2535 = vadd.f32 %v2448, %v2528
    %v2536 = vxor.u32 %v2532, 2147483648
    %v2537 = vmul.f32 %v2536, 1.442695
    %v2538 = vpow.pop %v2537
    %v2539 = vadd.f32 %v2538, 1.0
    %v2540 = vrcp.pop %v2539
    %v2541 = vmul.f32 1.0, %v2540
    %v2542 = vxor.u32 %v2533, 2147483648
    %v2543 = vmul.f32 %v2542, 1.442695
    %v2544 = vpow.pop %v2543
    %v2545 = vadd.f32 %v2544, 1.0
    %v2546 = vrcp.pop %v2545
    %v2547 = vmul.f32 1.0, %v2546
    %v2548 = vtanh.pop %v2534
    %v2549 = vxor.u32 %v2535, 2147483648
    %v2550 = vmul.f32 %v2549, 1.442695
    %v2551 = vpow.pop %v2550
    %v2552 = vadd.f32 %v2551, 1.0
    %v2553 = vrcp.pop %v2552
    %v2554 = vmul.f32 1.0, %v2553
    %v2555 = vmul.f32 %v2547, %v2441
    %v2556 = vmul.f32 %v2541, %v2548
    %v2557 = vadd.f32 %v2555, %v2556
    %v2558 = vtanh.pop %v2557
    %v2559 = vmul.f32 %v2554, %v2558
    %s2560 = scalar_lea.vmem [#allocation4], 8
    %2561 = vst [vmem:[%s2560] sm:$0xff] %v2559
    %v2562 = vld [vmem:[%s1019] sm:$0xff]
    %v2563 = vld [vmem:[%s1019 + $0x8] sm:$0xff]
    %v2564 = vld [vmem:[%s1019 + $0x10] sm:$0xff]
    %v2565 = vld [vmem:[%s1019 + $0x18] sm:$0xff]
    %v2566 = vpack.c.bf16 %v2559, %v2559
    %2567 = vmatprep.subr.bf16.mxu0 %v2271
    %2568 = vmatpush1.bf16.msra.mxu0 %v2270
    %2569 = vmatprep.subr.bf16.mxu0 %v2275
    %2570 = vmatpush1.bf16.msra.mxu0 %v2274
    %2571 = vmatprep.subr.bf16.mxu0 %v2279
    %2572 = vmatpush1.bf16.msra.mxu0 %v2278
    %2573 = vmatprep.subr.bf16.mxu0 %v2283
    %2574 = vmatpush1.bf16.msra.mxu0 %v2282
    %2575 = vmatprep.subr.bf16.mxu0 %v2287
    %2576 = vmatpush1.bf16.msra.mxu0 %v2286
    %2577 = vmatprep.subr.bf16.mxu0 %v2291
    %2578 = vmatpush1.bf16.msra.mxu0 %v2290
    %2579 = vmatprep.subr.bf16.mxu0 %v2295
    %2580 = vmatpush1.bf16.msra.mxu0 %v2294
    %2581 = vmatprep.subr.bf16.mxu0 %v2299
    %2582 = vmatpush1.bf16.msra.mxu0 %v2298
    %2583 = vmatprep.subr.bf16.mxu0 0
    %2584 = vmatpush1.bf16.msra.mxu0 0
    %2585 = vmatprep.subr.bf16.mxu0 0
    %2586 = vmatpush1.bf16.msra.mxu0 0
    %2587 = vmatprep.subr.bf16.mxu0 0
    %2588 = vmatpush1.bf16.msra.mxu0 0
    %2589 = vmatprep.subr.bf16.mxu0 0
    %2590 = vmatpush1.bf16.msra.mxu0 0
    %2591 = vmatprep.subr.bf16.mxu0 0
    %2592 = vmatpush1.bf16.msra.mxu0 0
    %2593 = vmatprep.subr.bf16.mxu0 0
    %2594 = vmatpush1.bf16.msra.mxu0 0
    %2595 = vmatprep.subr.bf16.mxu0 0
    %2596 = vmatpush1.bf16.msra.mxu0 0
    %2597 = vmatprep.subr.bf16.mxu0 0
    %2598 = vmatpush1.bf16.msra.mxu0 0
    %2599 = vmatprep.mubr.bf16.mxu0 0
    %2600 = vmatmul.mubr.bf16.gmra.mrb[0].mxu0 %v2566
    %v2601 = vpop.f32.mrb[0].mxu0
    %v2602 = vadd.f32 0.0, %v2601
    %v2603 = vpop.f32.mrb[0].mxu0
    %v2604 = vadd.f32 0.0, %v2603
    %v2605 = vpop.f32.mrb[0].mxu0
    %v2606 = vpop.f32.mrb[0].mxu0
    %2607 = vdwg.mxu0
    %2608 = vmatprep.subr.bf16.mxu0 %v2273
    %2609 = vmatpush1.bf16.msra.mxu0 %v2272
    %2610 = vmatprep.subr.bf16.mxu0 %v2277
    %2611 = vmatpush1.bf16.msra.mxu0 %v2276
    %2612 = vmatprep.subr.bf16.mxu0 %v2281
    %2613 = vmatpush1.bf16.msra.mxu0 %v2280
    %2614 = vmatprep.subr.bf16.mxu0 %v2285
    %2615 = vmatpush1.bf16.msra.mxu0 %v2284
    %2616 = vmatprep.subr.bf16.mxu0 %v2289
    %2617 = vmatpush1.bf16.msra.mxu0 %v2288
    %2618 = vmatprep.subr.bf16.mxu0 %v2293
    %2619 = vmatpush1.bf16.msra.mxu0 %v2292
    %2620 = vmatprep.subr.bf16.mxu0 %v2297
    %2621 = vmatpush1.bf16.msra.mxu0 %v2296
    %2622 = vmatprep.subr.bf16.mxu0 %v2301
    %2623 = vmatpush1.bf16.msra.mxu0 %v2300
    %2624 = vmatprep.subr.bf16.mxu0 0
    %2625 = vmatpush1.bf16.msra.mxu0 0
    %2626 = vmatprep.subr.bf16.mxu0 0
    %2627 = vmatpush1.bf16.msra.mxu0 0
    %2628 = vmatprep.subr.bf16.mxu0 0
    %2629 = vmatpush1.bf16.msra.mxu0 0
    %2630 = vmatprep.subr.bf16.mxu0 0
    %2631 = vmatpush1.bf16.msra.mxu0 0
    %2632 = vmatprep.subr.bf16.mxu0 0
    %2633 = vmatpush1.bf16.msra.mxu0 0
    %2634 = vmatprep.subr.bf16.mxu0 0
    %2635 = vmatpush1.bf16.msra.mxu0 0
    %2636 = vmatprep.subr.bf16.mxu0 0
    %2637 = vmatpush1.bf16.msra.mxu0 0
    %2638 = vmatprep.subr.bf16.mxu0 0
    %2639 = vmatpush1.bf16.msra.mxu0 0
    %2640 = vmatprep.mubr.bf16.mxu0 0
    %2641 = vmatmul.mubr.bf16.gmra.mrb[0].mxu0 %v2566
    %v2642 = vpop.f32.mrb[0].mxu0
    %v2643 = vadd.f32 0.0, %v2642
    %v2644 = vpop.f32.mrb[0].mxu0
    %v2645 = vadd.f32 0.0, %v2644
    %v2646 = vpop.f32.mrb[0].mxu0
    %v2647 = vpop.f32.mrb[0].mxu0
    %2648 = vdwg.mxu0
    %v2649 = vadd.f32 %v2562, %v2602
    %v2650 = vadd.f32 %v2563, %v2604
    %v2651 = vadd.f32 %v2564, %v2643
    %v2652 = vadd.f32 %v2565, %v2645
    %v2653 = vxor.u32 %v2649, 2147483648
    %v2654 = vmul.f32 %v2653, 1.442695
    %v2655 = vpow.pop %v2654
    %v2656 = vadd.f32 %v2655, 1.0
    %v2657 = vrcp.pop %v2656
    %v2658 = vmul.f32 1.0, %v2657
    %v2659 = vxor.u32 %v2650, 2147483648
    %v2660 = vmul.f32 %v2659, 1.442695
    %v2661 = vpow.pop %v2660
    %v2662 = vadd.f32 %v2661, 1.0
    %v2663 = vrcp.pop %v2662
    %v2664 = vmul.f32 1.0, %v2663
    %v2665 = vtanh.pop %v2651
    %v2666 = vxor.u32 %v2652, 2147483648
    %v2667 = vmul.f32 %v2666, 1.442695
    %v2668 = vpow.pop %v2667
    %v2669 = vadd.f32 %v2668, 1.0
    %v2670 = vrcp.pop %v2669
    %v2671 = vmul.f32 1.0, %v2670
    %v2672 = vmul.f32 %v2664, %v2557
    %v2673 = vmul.f32 %v2658, %v2665
    %v2674 = vadd.f32 %v2672, %v2673
    %v2675 = vtanh.pop %v2674
    %v2676 = vmul.f32 %v2671, %v2675
    %s2677 = scalar_lea.vmem [#allocation4], 16
    %2678 = vst [vmem:[%s2677] sm:$0xff] %v2676
    %v2679 = vld [vmem:[%s1137] sm:$0xff]
    %v2680 = vld [vmem:[%s1137 + $0x8] sm:$0xff]
    %v2681 = vld [vmem:[%s1137 + $0x10] sm:$0xff]
    %v2682 = vld [vmem:[%s1137 + $0x18] sm:$0xff]
    %v2683 = vpack.c.bf16 %v2676, %v2676
    %2684 = vmatprep.subr.bf16.mxu0 %v2271
    %2685 = vmatpush1.bf16.msra.mxu0 %v2270
    %2686 = vmatprep.subr.bf16.mxu0 %v2275
    %2687 = vmatpush1.bf16.msra.mxu0 %v2274
    %2688 = vmatprep.subr.bf16.mxu0 %v2279
    %2689 = vmatpush1.bf16.msra.mxu0 %v2278
    %2690 = vmatprep.subr.bf16.mxu0 %v2283
    %2691 = vmatpush1.bf16.msra.mxu0 %v2282
    %2692 = vmatprep.subr.bf16.mxu0 %v2287
    %2693 = vmatpush1.bf16.msra.mxu0 %v2286
    %2694 = vmatprep.subr.bf16.mxu0 %v2291
    %2695 = vmatpush1.bf16.msra.mxu0 %v2290
    %2696 = vmatprep.subr.bf16.mxu0 %v2295
    %2697 = vmatpush1.bf16.msra.mxu0 %v2294
    %2698 = vmatprep.subr.bf16.mxu0 %v2299
    %2699 = vmatpush1.bf16.msra.mxu0 %v2298
    %2700 = vmatprep.subr.bf16.mxu0 0
    %2701 = vmatpush1.bf16.msra.mxu0 0
    %2702 = vmatprep.subr.bf16.mxu0 0
    %2703 = vmatpush1.bf16.msra.mxu0 0
    %2704 = vmatprep.subr.bf16.mxu0 0
    %2705 = vmatpush1.bf16.msra.mxu0 0
    %2706 = vmatprep.subr.bf16.mxu0 0
    %2707 = vmatpush1.bf16.msra.mxu0 0
    %2708 = vmatprep.subr.bf16.mxu0 0
    %2709 = vmatpush1.bf16.msra.mxu0 0
    %2710 = vmatprep.subr.bf16.mxu0 0
    %2711 = vmatpush1.bf16.msra.mxu0 0
    %2712 = vmatprep.subr.bf16.mxu0 0
    %2713 = vmatpush1.bf16.msra.mxu0 0
    %2714 = vmatprep.subr.bf16.mxu0 0
    %2715 = vmatpush1.bf16.msra.mxu0 0
    %2716 = vmatprep.mubr.bf16.mxu0 0
    %2717 = vmatmul.mubr.bf16.gmra.mrb[0].mxu0 %v2683
    %v2718 = vpop.f32.mrb[0].mxu0
    %v2719 = vadd.f32 0.0, %v2718
    %v2720 = vpop.f32.mrb[0].mxu0
    %v2721 = vadd.f32 0.0, %v2720
    %v2722 = vpop.f32.mrb[0].mxu0
    %v2723 = vpop.f32.mrb[0].mxu0
    %2724 = vdwg.mxu0
    %2725 = vmatprep.subr.bf16.mxu0 %v2273
    %2726 = vmatpush1.bf16.msra.mxu0 %v2272
    %2727 = vmatprep.subr.bf16.mxu0 %v2277
    %2728 = vmatpush1.bf16.msra.mxu0 %v2276
    %2729 = vmatprep.subr.bf16.mxu0 %v2281
    %2730 = vmatpush1.bf16.msra.mxu0 %v2280
    %2731 = vmatprep.subr.bf16.mxu0 %v2285
    %2732 = vmatpush1.bf16.msra.mxu0 %v2284
    %2733 = vmatprep.subr.bf16.mxu0 %v2289
    %2734 = vmatpush1.bf16.msra.mxu0 %v2288
    %2735 = vmatprep.subr.bf16.mxu0 %v2293
    %2736 = vmatpush1.bf16.msra.mxu0 %v2292
    %2737 = vmatprep.subr.bf16.mxu0 %v2297
    %2738 = vmatpush1.bf16.msra.mxu0 %v2296
    %2739 = vmatprep.subr.bf16.mxu0 %v2301
    %2740 = vmatpush1.bf16.msra.mxu0 %v2300
    %2741 = vmatprep.subr.bf16.mxu0 0
    %2742 = vmatpush1.bf16.msra.mxu0 0
    %2743 = vmatprep.subr.bf16.mxu0 0
    %2744 = vmatpush1.bf16.msra.mxu0 0
    %2745 = vmatprep.subr.bf16.mxu0 0
    %2746 = vmatpush1.bf16.msra.mxu0 0
    %2747 = vmatprep.subr.bf16.mxu0 0
    %2748 = vmatpush1.bf16.msra.mxu0 0
    %2749 = vmatprep.subr.bf16.mxu0 0
    %2750 = vmatpush1.bf16.msra.mxu0 0
    %2751 = vmatprep.subr.bf16.mxu0 0
    %2752 = vmatpush1.bf16.msra.mxu0 0
    %2753 = vmatprep.subr.bf16.mxu0 0
    %2754 = vmatpush1.bf16.msra.mxu0 0
    %2755 = vmatprep.subr.bf16.mxu0 0
    %2756 = vmatpush1.bf16.msra.mxu0 0
    %2757 = vmatprep.mubr.bf16.mxu0 0
    %2758 = vmatmul.mubr.bf16.gmra.mrb[0].mxu0 %v2683
    %v2759 = vpop.f32.mrb[0].mxu0
    %v2760 = vadd.f32 0.0, %v2759
    %v2761 = vpop.f32.mrb[0].mxu0
    %v2762 = vadd.f32 0.0, %v2761
    %v2763 = vpop.f32.mrb[0].mxu0
    %v2764 = vpop.f32.mrb[0].mxu0
    %2765 = vdwg.mxu0
    %v2766 = vadd.f32 %v2679, %v2719
    %v2767 = vadd.f32 %v2680, %v2721
    %v2768 = vadd.f32 %v2681, %v2760
    %v2769 = vadd.f32 %v2682, %v2762
    %v2770 = vxor.u32 %v2766, 2147483648
    %v2771 = vmul.f32 %v2770, 1.442695
    %v2772 = vpow.pop %v2771
    %v2773 = vadd.f32 %v2772, 1.0
    %v2774 = vrcp.pop %v2773
    %v2775 = vmul.f32 1.0, %v2774
    %v2776 = vxor.u32 %v2767, 2147483648
    %v2777 = vmul.f32 %v2776, 1.442695
    %v2778 = vpow.pop %v2777
    %v2779 = vadd.f32 %v2778, 1.0
    %v2780 = vrcp.pop %v2779
    %v2781 = vmul.f32 1.0, %v2780
    %v2782 = vtanh.pop %v2768
    %v2783 = vxor.u32 %v2769, 2147483648
    %v2784 = vmul.f32 %v2783, 1.442695
    %v2785 = vpow.pop %v2784
    %v2786 = vadd.f32 %v2785, 1.0
    %v2787 = vrcp.pop %v2786
    %v2788 = vmul.f32 1.0, %v2787
    %v2789 = vmul.f32 %v2781, %v2674
    %v2790 = vmul.f32 %v2775, %v2782
    %v2791 = vadd.f32 %v2789, %v2790
    %v2792 = vtanh.pop %v2791
    %v2793 = vmul.f32 %v2788, %v2792
    %s2794 = scalar_lea.vmem [#allocation4], 24
    %2795 = vst [vmem:[%s2794] sm:$0xff] %v2793
    %v2796 = vld [vmem:[%s1255] sm:$0xff]
    %v2797 = vld [vmem:[%s1255 + $0x8] sm:$0xff]
    %v2798 = vld [vmem:[%s1255 + $0x10] sm:$0xff]
    %v2799 = vld [vmem:[%s1255 + $0x18] sm:$0xff]
    %v2800 = vpack.c.bf16 %v2793, %v2793
    %2801 = vmatprep.subr.bf16.mxu0 %v2271
    %2802 = vmatpush1.bf16.msra.mxu0 %v2270
    %2803 = vmatprep.subr.bf16.mxu0 %v2275
    %2804 = vmatpush1.bf16.msra.mxu0 %v2274
    %2805 = vmatprep.subr.bf16.mxu0 %v2279
    %2806 = vmatpush1.bf16.msra.mxu0 %v2278
    %2807 = vmatprep.subr.bf16.mxu0 %v2283
    %2808 = vmatpush1.bf16.msra.mxu0 %v2282
    %2809 = vmatprep.subr.bf16.mxu0 %v2287
    %2810 = vmatpush1.bf16.msra.mxu0 %v2286
    %2811 = vmatprep.subr.bf16.mxu0 %v2291
    %2812 = vmatpush1.bf16.msra.mxu0 %v2290
    %2813 = vmatprep.subr.bf16.mxu0 %v2295
    %2814 = vmatpush1.bf16.msra.mxu0 %v2294
    %2815 = vmatprep.subr.bf16.mxu0 %v2299
    %2816 = vmatpush1.bf16.msra.mxu0 %v2298
    %2817 = vmatprep.subr.bf16.mxu0 0
    %2818 = vmatpush1.bf16.msra.mxu0 0
    %2819 = vmatprep.subr.bf16.mxu0 0
    %2820 = vmatpush1.bf16.msra.mxu0 0
    %2821 = vmatprep.subr.bf16.mxu0 0
    %2822 = vmatpush1.bf16.msra.mxu0 0
    %2823 = vmatprep.subr.bf16.mxu0 0
    %2824 = vmatpush1.bf16.msra.mxu0 0
    %2825 = vmatprep.subr.bf16.mxu0 0
    %2826 = vmatpush1.bf16.msra.mxu0 0
    %2827 = vmatprep.subr.bf16.mxu0 0
    %2828 = vmatpush1.bf16.msra.mxu0 0
    %2829 = vmatprep.subr.bf16.mxu0 0
    %2830 = vmatpush1.bf16.msra.mxu0 0
    %2831 = vmatprep.subr.bf16.mxu0 0
    %2832 = vmatpush1.bf16.msra.mxu0 0
    %2833 = vmatprep.mubr.bf16.mxu0 0
    %2834 = vmatmul.mubr.bf16.gmra.mrb[0].mxu0 %v2800
    %v2835 = vpop.f32.mrb[0].mxu0
    %v2836 = vadd.f32 0.0, %v2835
    %v2837 = vpop.f32.mrb[0].mxu0
    %v2838 = vadd.f32 0.0, %v2837
    %v2839 = vpop.f32.mrb[0].mxu0
    %v2840 = vpop.f32.mrb[0].mxu0
    %2841 = vdwg.mxu0
    %2842 = vmatprep.subr.bf16.mxu0 %v2273
    %2843 = vmatpush1.bf16.msra.mxu0 %v2272
    %2844 = vmatprep.subr.bf16.mxu0 %v2277
    %2845 = vmatpush1.bf16.msra.mxu0 %v2276
    %2846 = vmatprep.subr.bf16.mxu0 %v2281
    %2847 = vmatpush1.bf16.msra.mxu0 %v2280
    %2848 = vmatprep.subr.bf16.mxu0 %v2285
    %2849 = vmatpush1.bf16.msra.mxu0 %v2284
    %2850 = vmatprep.subr.bf16.mxu0 %v2289
    %2851 = vmatpush1.bf16.msra.mxu0 %v2288
    %2852 = vmatprep.subr.bf16.mxu0 %v2293
    %2853 = vmatpush1.bf16.msra.mxu0 %v2292
    %2854 = vmatprep.subr.bf16.mxu0 %v2297
    %2855 = vmatpush1.bf16.msra.mxu0 %v2296
    %2856 = vmatprep.subr.bf16.mxu0 %v2301
    %2857 = vmatpush1.bf16.msra.mxu0 %v2300
    %2858 = vmatprep.subr.bf16.mxu0 0
    %2859 = vmatpush1.bf16.msra.mxu0 0
    %2860 = vmatprep.subr.bf16.mxu0 0
    %2861 = vmatpush1.bf16.msra.mxu0 0
    %2862 = vmatprep.subr.bf16.mxu0 0
    %2863 = vmatpush1.bf16.msra.mxu0 0
    %2864 = vmatprep.subr.bf16.mxu0 0
    %2865 = vmatpush1.bf16.msra.mxu0 0
    %2866 = vmatprep.subr.bf16.mxu0 0
    %2867 = vmatpush1.bf16.msra.mxu0 0
    %2868 = vmatprep.subr.bf16.mxu0 0
    %2869 = vmatpush1.bf16.msra.mxu0 0
    %2870 = vmatprep.subr.bf16.mxu0 0
    %2871 = vmatpush1.bf16.msra.mxu0 0
    %2872 = vmatprep.subr.bf16.mxu0 0
    %2873 = vmatpush1.bf16.msra.mxu0 0
    %2874 = vmatprep.mubr.bf16.mxu0 0
    %2875 = vmatmul.mubr.bf16.gmra.mrb[0].mxu0 %v2800
    %v2876 = vpop.f32.mrb[0].mxu0
    %v2877 = vadd.f32 0.0, %v2876
    %v2878 = vpop.f32.mrb[0].mxu0
    %v2879 = vadd.f32 0.0, %v2878
    %v2880 = vpop.f32.mrb[0].mxu0
    %v2881 = vpop.f32.mrb[0].mxu0
    %2882 = vdwg.mxu0
    %v2883 = vadd.f32 %v2796, %v2836
    %v2884 = vadd.f32 %v2797, %v2838
    %v2885 = vadd.f32 %v2798, %v2877
    %v2886 = vadd.f32 %v2799, %v2879
    %v2887 = vxor.u32 %v2883, 2147483648
    %v2888 = vmul.f32 %v2887, 1.442695
    %v2889 = vpow.pop %v2888
    %v2890 = vadd.f32 %v2889, 1.0
    %v2891 = vrcp.pop %v2890
    %v2892 = vmul.f32 1.0, %v2891
    %v2893 = vxor.u32 %v2884, 2147483648
    %v2894 = vmul.f32 %v2893, 1.442695
    %v2895 = vpow.pop %v2894
    %v2896 = vadd.f32 %v2895, 1.0
    %v2897 = vrcp.pop %v2896
    %v2898 = vmul.f32 1.0, %v2897
    %v2899 = vtanh.pop %v2885
    %v2900 = vxor.u32 %v2886, 2147483648
    %v2901 = vmul.f32 %v2900, 1.442695
    %v2902 = vpow.pop %v2901
    %v2903 = vadd.f32 %v2902, 1.0
    %v2904 = vrcp.pop %v2903
    %v2905 = vmul.f32 1.0, %v2904
    %v2906 = vmul.f32 %v2898, %v2791
    %v2907 = vmul.f32 %v2892, %v2899
    %v2908 = vadd.f32 %v2906, %v2907
    %v2909 = vtanh.pop %v2908
    %v2910 = vmul.f32 %v2905, %v2909
    %s2911 = scalar_lea.vmem [#allocation4], 32
    %2912 = vst [vmem:[%s2911] sm:$0xff] %v2910
    %v2913 = vld [vmem:[%s1373] sm:$0xff]
    %v2914 = vld [vmem:[%s1373 + $0x8] sm:$0xff]
    %v2915 = vld [vmem:[%s1373 + $0x10] sm:$0xff]
    %v2916 = vld [vmem:[%s1373 + $0x18] sm:$0xff]
    %v2917 = vpack.c.bf16 %v2910, %v2910
    %2918 = vmatprep.subr.bf16.mxu0 %v2271
    %2919 = vmatpush1.bf16.msra.mxu0 %v2270
    %2920 = vmatprep.subr.bf16.mxu0 %v2275
    %2921 = vmatpush1.bf16.msra.mxu0 %v2274
    %2922 = vmatprep.subr.bf16.mxu0 %v2279
    %2923 = vmatpush1.bf16.msra.mxu0 %v2278
    %2924 = vmatprep.subr.bf16.mxu0 %v2283
    %2925 = vmatpush1.bf16.msra.mxu0 %v2282
    %2926 = vmatprep.subr.bf16.mxu0 %v2287
    %2927 = vmatpush1.bf16.msra.mxu0 %v2286
    %2928 = vmatprep.subr.bf16.mxu0 %v2291
    %2929 = vmatpush1.bf16.msra.mxu0 %v2290
    %2930 = vmatprep.subr.bf16.mxu0 %v2295
    %2931 = vmatpush1.bf16.msra.mxu0 %v2294
    %2932 = vmatprep.subr.bf16.mxu0 %v2299
    %2933 = vmatpush1.bf16.msra.mxu0 %v2298
    %2934 = vmatprep.subr.bf16.mxu0 0
    %2935 = vmatpush1.bf16.msra.mxu0 0
    %2936 = vmatprep.subr.bf16.mxu0 0
    %2937 = vmatpush1.bf16.msra.mxu0 0
    %2938 = vmatprep.subr.bf16.mxu0 0
    %2939 = vmatpush1.bf16.msra.mxu0 0
    %2940 = vmatprep.subr.bf16.mxu0 0
    %2941 = vmatpush1.bf16.msra.mxu0 0
    %2942 = vmatprep.subr.bf16.mxu0 0
    %2943 = vmatpush1.bf16.msra.mxu0 0
    %2944 = vmatprep.subr.bf16.mxu0 0
    %2945 = vmatpush1.bf16.msra.mxu0 0
    %2946 = vmatprep.subr.bf16.mxu0 0
    %2947 = vmatpush1.bf16.msra.mxu0 0
    %2948 = vmatprep.subr.bf16.mxu0 0
    %2949 = vmatpush1.bf16.msra.mxu0 0
    %2950 = vmatprep.mubr.bf16.mxu0 0
    %2951 = vmatmul.mubr.bf16.gmra.mrb[0].mxu0 %v2917
    %v2952 = vpop.f32.mrb[0].mxu0
    %v2953 = vadd.f32 0.0, %v2952
    %v2954 = vpop.f32.mrb[0].mxu0
    %v2955 = vadd.f32 0.0, %v2954
    %v2956 = vpop.f32.mrb[0].mxu0
    %v2957 = vpop.f32.mrb[0].mxu0
    %2958 = vdwg.mxu0
    %2959 = vmatprep.subr.bf16.mxu0 %v2273
    %2960 = vmatpush1.bf16.msra.mxu0 %v2272
    %2961 = vmatprep.subr.bf16.mxu0 %v2277
    %2962 = vmatpush1.bf16.msra.mxu0 %v2276
    %2963 = vmatprep.subr.bf16.mxu0 %v2281
    %2964 = vmatpush1.bf16.msra.mxu0 %v2280
    %2965 = vmatprep.subr.bf16.mxu0 %v2285
    %2966 = vmatpush1.bf16.msra.mxu0 %v2284
    %2967 = vmatprep.subr.bf16.mxu0 %v2289
    %2968 = vmatpush1.bf16.msra.mxu0 %v2288
    %2969 = vmatprep.subr.bf16.mxu0 %v2293
    %2970 = vmatpush1.bf16.msra.mxu0 %v2292
    %2971 = vmatprep.subr.bf16.mxu0 %v2297
    %2972 = vmatpush1.bf16.msra.mxu0 %v2296
    %2973 = vmatprep.subr.bf16.mxu0 %v2301
    %2974 = vmatpush1.bf16.msra.mxu0 %v2300
    %2975 = vmatprep.subr.bf16.mxu0 0
    %2976 = vmatpush1.bf16.msra.mxu0 0
    %2977 = vmatprep.subr.bf16.mxu0 0
    %2978 = vmatpush1.bf16.msra.mxu0 0
    %2979 = vmatprep.subr.bf16.mxu0 0
    %2980 = vmatpush1.bf16.msra.mxu0 0
    %2981 = vmatprep.subr.bf16.mxu0 0
    %2982 = vmatpush1.bf16.msra.mxu0 0
    %2983 = vmatprep.subr.bf16.mxu0 0
    %2984 = vmatpush1.bf16.msra.mxu0 0
    %2985 = vmatprep.subr.bf16.mxu0 0
    %2986 = vmatpush1.bf16.msra.mxu0 0
    %2987 = vmatprep.subr.bf16.mxu0 0
    %2988 = vmatpush1.bf16.msra.mxu0 0
    %2989 = vmatprep.subr.bf16.mxu0 0
    %2990 = vmatpush1.bf16.msra.mxu0 0
    %2991 = vmatprep.mubr.bf16.mxu0 0
    %2992 = vmatmul.mubr.bf16.gmra.mrb[0].mxu0 %v2917
    %v2993 = vpop.f32.mrb[0].mxu0
    %v2994 = vadd.f32 0.0, %v2993
    %v2995 = vpop.f32.mrb[0].mxu0
    %v2996 = vadd.f32 0.0, %v2995
    %v2997 = vpop.f32.mrb[0].mxu0
    %v2998 = vpop.f32.mrb[0].mxu0
    %2999 = vdwg.mxu0
    %v3000 = vadd.f32 %v2913, %v2953
    %v3001 = vadd.f32 %v2914, %v2955
    %v3002 = vadd.f32 %v2915, %v2994
    %v3003 = vadd.f32 %v2916, %v2996
    %v3004 = vxor.u32 %v3000, 2147483648
    %v3005 = vmul.f32 %v3004, 1.442695
    %v3006 = vpow.pop %v3005
    %v3007 = vadd.f32 %v3006, 1.0
    %v3008 = vrcp.pop %v3007
    %v3009 = vmul.f32 1.0, %v3008
    %v3010 = vxor.u32 %v3001, 2147483648
    %v3011 = vmul.f32 %v3010, 1.442695
    %v3012 = vpow.pop %v3011
    %v3013 = vadd.f32 %v3012, 1.0
    %v3014 = vrcp.pop %v3013
    %v3015 = vmul.f32 1.0, %v3014
    %v3016 = vtanh.pop %v3002
    %v3017 = vxor.u32 %v3003, 2147483648
    %v3018 = vmul.f32 %v3017, 1.442695
    %v3019 = vpow.pop %v3018
    %v3020 = vadd.f32 %v3019, 1.0
    %v3021 = vrcp.pop %v3020
    %v3022 = vmul.f32 1.0, %v3021
    %v3023 = vmul.f32 %v3015, %v2908
    %v3024 = vmul.f32 %v3009, %v3016
    %v3025 = vadd.f32 %v3023, %v3024
    %v3026 = vtanh.pop %v3025
    %v3027 = vmul.f32 %v3022, %v3026
    %s3028 = scalar_lea.vmem [#allocation4], 40
    %3029 = vst [vmem:[%s3028] sm:$0xff] %v3027
    %v3030 = vld [vmem:[%s1491] sm:$0xff]
    %v3031 = vld [vmem:[%s1491 + $0x8] sm:$0xff]
    %v3032 = vld [vmem:[%s1491 + $0x10] sm:$0xff]
    %v3033 = vld [vmem:[%s1491 + $0x18] sm:$0xff]
    %v3034 = vpack.c.bf16 %v3027, %v3027
    %3035 = vmatprep.subr.bf16.mxu0 %v2271
    %3036 = vmatpush1.bf16.msra.mxu0 %v2270
    %3037 = vmatprep.subr.bf16.mxu0 %v2275
    %3038 = vmatpush1.bf16.msra.mxu0 %v2274
    %3039 = vmatprep.subr.bf16.mxu0 %v2279
    %3040 = vmatpush1.bf16.msra.mxu0 %v2278
    %3041 = vmatprep.subr.bf16.mxu0 %v2283
    %3042 = vmatpush1.bf16.msra.mxu0 %v2282
    %3043 = vmatprep.subr.bf16.mxu0 %v2287
    %3044 = vmatpush1.bf16.msra.mxu0 %v2286
    %3045 = vmatprep.subr.bf16.mxu0 %v2291
    %3046 = vmatpush1.bf16.msra.mxu0 %v2290
    %3047 = vmatprep.subr.bf16.mxu0 %v2295
    %3048 = vmatpush1.bf16.msra.mxu0 %v2294
    %3049 = vmatprep.subr.bf16.mxu0 %v2299
    %3050 = vmatpush1.bf16.msra.mxu0 %v2298
    %3051 = vmatprep.subr.bf16.mxu0 0
    %3052 = vmatpush1.bf16.msra.mxu0 0
    %3053 = vmatprep.subr.bf16.mxu0 0
    %3054 = vmatpush1.bf16.msra.mxu0 0
    %3055 = vmatprep.subr.bf16.mxu0 0
    %3056 = vmatpush1.bf16.msra.mxu0 0
    %3057 = vmatprep.subr.bf16.mxu0 0
    %3058 = vmatpush1.bf16.msra.mxu0 0
    %3059 = vmatprep.subr.bf16.mxu0 0
    %3060 = vmatpush1.bf16.msra.mxu0 0
    %3061 = vmatprep.subr.bf16.mxu0 0
    %3062 = vmatpush1.bf16.msra.mxu0 0
    %3063 = vmatprep.subr.bf16.mxu0 0
    %3064 = vmatpush1.bf16.msra.mxu0 0
    %3065 = vmatprep.subr.bf16.mxu0 0
    %3066 = vmatpush1.bf16.msra.mxu0 0
    %3067 = vmatprep.mubr.bf16.mxu0 0
    %3068 = vmatmul.mubr.bf16.gmra.mrb[0].mxu0 %v3034
    %v3069 = vpop.f32.mrb[0].mxu0
    %v3070 = vadd.f32 0.0, %v3069
    %v3071 = vpop.f32.mrb[0].mxu0
    %v3072 = vadd.f32 0.0, %v3071
    %v3073 = vpop.f32.mrb[0].mxu0
    %v3074 = vpop.f32.mrb[0].mxu0
    %3075 = vdwg.mxu0
    %3076 = vmatprep.subr.bf16.mxu0 %v2273
    %3077 = vmatpush1.bf16.msra.mxu0 %v2272
    %3078 = vmatprep.subr.bf16.mxu0 %v2277
    %3079 = vmatpush1.bf16.msra.mxu0 %v2276
    %3080 = vmatprep.subr.bf16.mxu0 %v2281
    %3081 = vmatpush1.bf16.msra.mxu0 %v2280
    %3082 = vmatprep.subr.bf16.mxu0 %v2285
    %3083 = vmatpush1.bf16.msra.mxu0 %v2284
    %3084 = vmatprep.subr.bf16.mxu0 %v2289
    %3085 = vmatpush1.bf16.msra.mxu0 %v2288
    %3086 = vmatprep.subr.bf16.mxu0 %v2293
    %3087 = vmatpush1.bf16.msra.mxu0 %v2292
    %3088 = vmatprep.subr.bf16.mxu0 %v2297
    %3089 = vmatpush1.bf16.msra.mxu0 %v2296
    %3090 = vmatprep.subr.bf16.mxu0 %v2301
    %3091 = vmatpush1.bf16.msra.mxu0 %v2300
    %3092 = vmatprep.subr.bf16.mxu0 0
    %3093 = vmatpush1.bf16.msra.mxu0 0
    %3094 = vmatprep.subr.bf16.mxu0 0
    %3095 = vmatpush1.bf16.msra.mxu0 0
    %3096 = vmatprep.subr.bf16.mxu0 0
    %3097 = vmatpush1.bf16.msra.mxu0 0
    %3098 = vmatprep.subr.bf16.mxu0 0
    %3099 = vmatpush1.bf16.msra.mxu0 0
    %3100 = vmatprep.subr.bf16.mxu0 0
    %3101 = vmatpush1.bf16.msra.mxu0 0
    %3102 = vmatprep.subr.bf16.mxu0 0
    %3103 = vmatpush1.bf16.msra.mxu0 0
    %3104 = vmatprep.subr.bf16.mxu0 0
    %3105 = vmatpush1.bf16.msra.mxu0 0
    %3106 = vmatprep.subr.bf16.mxu0 0
    %3107 = vmatpush1.bf16.msra.mxu0 0
    %3108 = vmatprep.mubr.bf16.mxu0 0
    %3109 = vmatmul.mubr.bf16.gmra.mrb[0].mxu0 %v3034
    %v3110 = vpop.f32.mrb[0].mxu0
    %v3111 = vadd.f32 0.0, %v3110
    %v3112 = vpop.f32.mrb[0].mxu0
    %v3113 = vadd.f32 0.0, %v3112
    %v3114 = vpop.f32.mrb[0].mxu0
    %v3115 = vpop.f32.mrb[0].mxu0
    %3116 = vdwg.mxu0
    %v3117 = vadd.f32 %v3030, %v3070
    %v3118 = vadd.f32 %v3031, %v3072
    %v3119 = vadd.f32 %v3032, %v3111
    %v3120 = vadd.f32 %v3033, %v3113
    %v3121 = vxor.u32 %v3117, 2147483648
    %v3122 = vmul.f32 %v3121, 1.442695
    %v3123 = vpow.pop %v3122
    %v3124 = vadd.f32 %v3123, 1.0
    %v3125 = vrcp.pop %v3124
    %v3126 = vmul.f32 1.0, %v3125
    %v3127 = vxor.u32 %v3118, 2147483648
    %v3128 = vmul.f32 %v3127, 1.442695
    %v3129 = vpow.pop %v3128
    %v3130 = vadd.f32 %v3129, 1.0
    %v3131 = vrcp.pop %v3130
    %v3132 = vmul.f32 1.0, %v3131
    %v3133 = vtanh.pop %v3119
    %v3134 = vxor.u32 %v3120, 2147483648
    %v3135 = vmul.f32 %v3134, 1.442695
    %v3136 = vpow.pop %v3135
    %v3137 = vadd.f32 %v3136, 1.0
    %v3138 = vrcp.pop %v3137
    %v3139 = vmul.f32 1.0, %v3138
    %v3140 = vmul.f32 %v3132, %v3025
    %v3141 = vmul.f32 %v3126, %v3133
    %v3142 = vadd.f32 %v3140, %v3141
    %v3143 = vtanh.pop %v3142
    %v3144 = vmul.f32 %v3139, %v3143
    %s3145 = scalar_lea.vmem [#allocation4], 48
    %3146 = vst [vmem:[%s3145] sm:$0xff] %v3144
    %v3147 = vld [vmem:[%s1609] sm:$0xff]
    %v3148 = vld [vmem:[%s1609 + $0x8] sm:$0xff]
    %v3149 = vld [vmem:[%s1609 + $0x10] sm:$0xff]
    %v3150 = vld [vmem:[%s1609 + $0x18] sm:$0xff]
    %v3151 = vpack.c.bf16 %v3144, %v3144
    %3152 = vmatprep.subr.bf16.mxu0 %v2271
    %3153 = vmatpush1.bf16.msra.mxu0 %v2270
    %3154 = vmatprep.subr.bf16.mxu0 %v2275
    %3155 = vmatpush1.bf16.msra.mxu0 %v2274
    %3156 = vmatprep.subr.bf16.mxu0 %v2279
    %3157 = vmatpush1.bf16.msra.mxu0 %v2278
    %3158 = vmatprep.subr.bf16.mxu0 %v2283
    %3159 = vmatpush1.bf16.msra.mxu0 %v2282
    %3160 = vmatprep.subr.bf16.mxu0 %v2287
    %3161 = vmatpush1.bf16.msra.mxu0 %v2286
    %3162 = vmatprep.subr.bf16.mxu0 %v2291
    %3163 = vmatpush1.bf16.msra.mxu0 %v2290
    %3164 = vmatprep.subr.bf16.mxu0 %v2295
    %3165 = vmatpush1.bf16.msra.mxu0 %v2294
    %3166 = vmatprep.subr.bf16.mxu0 %v2299
    %3167 = vmatpush1.bf16.msra.mxu0 %v2298
    %3168 = vmatprep.subr.bf16.mxu0 0
    %3169 = vmatpush1.bf16.msra.mxu0 0
    %3170 = vmatprep.subr.bf16.mxu0 0
    %3171 = vmatpush1.bf16.msra.mxu0 0
    %3172 = vmatprep.subr.bf16.mxu0 0
    %3173 = vmatpush1.bf16.msra.mxu0 0
    %3174 = vmatprep.subr.bf16.mxu0 0
    %3175 = vmatpush1.bf16.msra.mxu0 0
    %3176 = vmatprep.subr.bf16.mxu0 0
    %3177 = vmatpush1.bf16.msra.mxu0 0
    %3178 = vmatprep.subr.bf16.mxu0 0
    %3179 = vmatpush1.bf16.msra.mxu0 0
    %3180 = vmatprep.subr.bf16.mxu0 0
    %3181 = vmatpush1.bf16.msra.mxu0 0
    %3182 = vmatprep.subr.bf16.mxu0 0
    %3183 = vmatpush1.bf16.msra.mxu0 0
    %3184 = vmatprep.mubr.bf16.mxu0 0
    %3185 = vmatmul.mubr.bf16.gmra.mrb[0].mxu0 %v3151
    %v3186 = vpop.f32.mrb[0].mxu0
    %v3187 = vadd.f32 0.0, %v3186
    %v3188 = vpop.f32.mrb[0].mxu0
    %v3189 = vadd.f32 0.0, %v3188
    %v3190 = vpop.f32.mrb[0].mxu0
    %v3191 = vpop.f32.mrb[0].mxu0
    %3192 = vdwg.mxu0
    %3193 = vmatprep.subr.bf16.mxu0 %v2273
    %3194 = vmatpush1.bf16.msra.mxu0 %v2272
    %3195 = vmatprep.subr.bf16.mxu0 %v2277
    %3196 = vmatpush1.bf16.msra.mxu0 %v2276
    %3197 = vmatprep.subr.bf16.mxu0 %v2281
    %3198 = vmatpush1.bf16.msra.mxu0 %v2280
    %3199 = vmatprep.subr.bf16.mxu0 %v2285
    %3200 = vmatpush1.bf16.msra.mxu0 %v2284
    %3201 = vmatprep.subr.bf16.mxu0 %v2289
    %3202 = vmatpush1.bf16.msra.mxu0 %v2288
    %3203 = vmatprep.subr.bf16.mxu0 %v2293
    %3204 = vmatpush1.bf16.msra.mxu0 %v2292
    %3205 = vmatprep.subr.bf16.mxu0 %v2297
    %3206 = vmatpush1.bf16.msra.mxu0 %v2296
    %3207 = vmatprep.subr.bf16.mxu0 %v2301
    %3208 = vmatpush1.bf16.msra.mxu0 %v2300
    %3209 = vmatprep.subr.bf16.mxu0 0
    %3210 = vmatpush1.bf16.msra.mxu0 0
    %3211 = vmatprep.subr.bf16.mxu0 0
    %3212 = vmatpush1.bf16.msra.mxu0 0
    %3213 = vmatprep.subr.bf16.mxu0 0
    %3214 = vmatpush1.bf16.msra.mxu0 0
    %3215 = vmatprep.subr.bf16.mxu0 0
    %3216 = vmatpush1.bf16.msra.mxu0 0
    %3217 = vmatprep.subr.bf16.mxu0 0
    %3218 = vmatpush1.bf16.msra.mxu0 0
    %3219 = vmatprep.subr.bf16.mxu0 0
    %3220 = vmatpush1.bf16.msra.mxu0 0
    %3221 = vmatprep.subr.bf16.mxu0 0
    %3222 = vmatpush1.bf16.msra.mxu0 0
    %3223 = vmatprep.subr.bf16.mxu0 0
    %3224 = vmatpush1.bf16.msra.mxu0 0
    %3225 = vmatprep.mubr.bf16.mxu0 0
    %3226 = vmatmul.mubr.bf16.gmra.mrb[0].mxu0 %v3151
    %v3227 = vpop.f32.mrb[0].mxu0
    %v3228 = vadd.f32 0.0, %v3227
    %v3229 = vpop.f32.mrb[0].mxu0
    %v3230 = vadd.f32 0.0, %v3229
    %v3231 = vpop.f32.mrb[0].mxu0
    %v3232 = vpop.f32.mrb[0].mxu0
    %3233 = vdwg.mxu0
    %v3234 = vadd.f32 %v3147, %v3187
    %v3235 = vadd.f32 %v3148, %v3189
    %v3236 = vadd.f32 %v3149, %v3228
    %v3237 = vadd.f32 %v3150, %v3230
    %v3238 = vxor.u32 %v3234, 2147483648
    %v3239 = vmul.f32 %v3238, 1.442695
    %v3240 = vpow.pop %v3239
    %v3241 = vadd.f32 %v3240, 1.0
    %v3242 = vrcp.pop %v3241
    %v3243 = vmul.f32 1.0, %v3242
    %v3244 = vxor.u32 %v3235, 2147483648
    %v3245 = vmul.f32 %v3244, 1.442695
    %v3246 = vpow.pop %v3245
    %v3247 = vadd.f32 %v3246, 1.0
    %v3248 = vrcp.pop %v3247
    %v3249 = vmul.f32 1.0, %v3248
    %v3250 = vtanh.pop %v3236
    %v3251 = vxor.u32 %v3237, 2147483648
    %v3252 = vmul.f32 %v3251, 1.442695
    %v3253 = vpow.pop %v3252
    %v3254 = vadd.f32 %v3253, 1.0
    %v3255 = vrcp.pop %v3254
    %v3256 = vmul.f32 1.0, %v3255
    %v3257 = vmul.f32 %v3249, %v3142
    %v3258 = vmul.f32 %v3243, %v3250
    %v3259 = vadd.f32 %v3257, %v3258
    %v3260 = vtanh.pop %v3259
    %v3261 = vmul.f32 %v3256, %v3260
    %s3262 = scalar_lea.vmem [#allocation4], 56
    %3263 = vst [vmem:[%s3262] sm:$0xff] %v3261
    %s3264 = scalar_lea.vmem [#allocation24], 8
    %3265 = vst [vmem:[%s3264] sm:$0xff] %v3261
    %s3266 = scalar_lea.vmem [#allocation26], 8
    %3267 = vst [vmem:[%s3266] sm:$0xff] %v3259
    %v3268 = vld [vmem:[#allocation4] sm:$0xff]
    %v3269 = vld [vmem:[#allocation4 + $0x8] sm:$0xff]
    %v3270 = vld [vmem:[#allocation4 + $0x10] sm:$0xff]
    %v3271 = vld [vmem:[#allocation4 + $0x18] sm:$0xff]
    %v3272 = vld [vmem:[#allocation4 + $0x20] sm:$0xff]
    %v3273 = vld [vmem:[#allocation4 + $0x28] sm:$0xff]
    %v3274 = vld [vmem:[#allocation4 + $0x30] sm:$0xff]
    %v3275 = vld [vmem:[#allocation4 + $0x38] sm:$0xff]
    %v3276 = vpack.c.bf16 %v3269, %v3268
    %v3277 = vpack.c.bf16 %v3271, %v3270
    %v3278 = vpack.c.bf16 %v3273, %v3272
    %v3279 = vpack.c.bf16 %v3275, %v3274
    %v3280 = vld [vmem:[#allocation20] sm:$0xf]
    %v3281 = vld [vmem:[#allocation20 + $0x4] sm:$0xf]
    %v3282 = vld [vmem:[#allocation20 + $0x8] sm:$0xf]
    %v3283 = vld [vmem:[#allocation20 + $0xc] sm:$0xf]
    %v3284 = vld [vmem:[#allocation20 + $0x10] sm:$0xf]
    %v3285 = vld [vmem:[#allocation20 + $0x14] sm:$0xf]
    %v3286 = vld [vmem:[#allocation20 + $0x18] sm:$0xf]
    %v3287 = vld [vmem:[#allocation20 + $0x1c] sm:$0xf]
    %v3288 = vld [vmem:[#allocation20 + $0x20] sm:$0xf]
    %v3289 = vld [vmem:[#allocation20 + $0x24] sm:$0xf]
    %v3290 = vld [vmem:[#allocation20 + $0x28] sm:$0xf]
    %v3291 = vld [vmem:[#allocation20 + $0x2c] sm:$0xf]
    %v3292 = vld [vmem:[#allocation20 + $0x30] sm:$0xf]
    %v3293 = vld [vmem:[#allocation20 + $0x34] sm:$0xf]
    %v3294 = vld [vmem:[#allocation20 + $0x38] sm:$0xf]
    %v3295 = vld [vmem:[#allocation20 + $0x3c] sm:$0xf]
    %v3296 = vld [vmem:[#allocation22] sm:$0x1]
    %v3298 = vlaneseq
    %v3299 = vshrl.u32 %v3298, 7
    %v3300 = vsub.s32 0, %v3299
    %v3301 = vrot.slane %v3296, %v3300
    %v3319 = vunpack.c.l.b16 %v3280
    %v3320 = vunpack.c.l.b16 %v3281
    %v3321 = vunpack.c.l.b16 %v3282
    %v3322 = vunpack.c.l.b16 %v3283
    %v3323 = vunpack.c.l.b16 %v3284
    %v3324 = vunpack.c.l.b16 %v3285
    %v3325 = vunpack.c.l.b16 %v3286
    %v3326 = vunpack.c.l.b16 %v3287
    %v3327 = vunpack.c.l.b16 %v3288
    %v3328 = vunpack.c.l.b16 %v3289
    %v3329 = vunpack.c.l.b16 %v3290
    %v3330 = vunpack.c.l.b16 %v3291
    %v3331 = vunpack.c.l.b16 %v3292
    %v3332 = vunpack.c.l.b16 %v3293
    %v3333 = vunpack.c.l.b16 %v3294
    %v3334 = vunpack.c.l.b16 %v3295
    %v3335 = vpack.c.b16 %v3320, %v3319
    %v3336 = vpack.c.b16 %v3322, %v3321
    %v3337 = vpack.c.b16 %v3324, %v3323
    %v3338 = vpack.c.b16 %v3326, %v3325
    %v3339 = vpack.c.b16 %v3328, %v3327
    %v3340 = vpack.c.b16 %v3330, %v3329
    %v3341 = vpack.c.b16 %v3332, %v3331
    %v3342 = vpack.c.b16 %v3334, %v3333
    %3351 = vmatprep.subr.bf16.mxu0 0
    %3352 = vmatpush1.bf16.msra.mxu0 %v3335
    %3353 = vmatprep.subr.bf16.mxu0 0
    %3354 = vmatpush1.bf16.msra.mxu0 %v3336
    %3355 = vmatprep.subr.bf16.mxu0 0
    %3356 = vmatpush1.bf16.msra.mxu0 %v3337
    %3357 = vmatprep.subr.bf16.mxu0 0
    %3358 = vmatpush1.bf16.msra.mxu0 %v3338
    %3359 = vmatprep.subr.bf16.mxu0 0
    %3360 = vmatpush1.bf16.msra.mxu0 %v3339
    %3361 = vmatprep.subr.bf16.mxu0 0
    %3362 = vmatpush1.bf16.msra.mxu0 %v3340
    %3363 = vmatprep.subr.bf16.mxu0 0
    %3364 = vmatpush1.bf16.msra.mxu0 %v3341
    %3365 = vmatprep.subr.bf16.mxu0 0
    %3366 = vmatpush1.bf16.msra.mxu0 %v3342
    %3367 = vmatprep.subr.bf16.mxu0 0
    %3368 = vmatpush1.bf16.msra.mxu0 0
    %3369 = vmatprep.subr.bf16.mxu0 0
    %3370 = vmatpush1.bf16.msra.mxu0 0
    %3371 = vmatprep.subr.bf16.mxu0 0
    %3372 = vmatpush1.bf16.msra.mxu0 0
    %3373 = vmatprep.subr.bf16.mxu0 0
    %3374 = vmatpush1.bf16.msra.mxu0 0
    %3375 = vmatprep.subr.bf16.mxu0 0
    %3376 = vmatpush1.bf16.msra.mxu0 0
    %3377 = vmatprep.subr.bf16.mxu0 0
    %3378 = vmatpush1.bf16.msra.mxu0 0
    %3379 = vmatprep.subr.bf16.mxu0 0
    %3380 = vmatpush1.bf16.msra.mxu0 0
    %3381 = vmatprep.subr.bf16.mxu0 0
    %3382 = vmatpush1.bf16.msra.mxu0 0
    %3383 = vmatprep.mubr.bf16.mxu0 0
    %3384 = vmatmul.mubr.bf16.gmra.mrb[0].mxu0 %v3276
    %v3385 = vpop.f32.mrb[0].mxu0
    %v3386 = vadd.f32 %v3301, %v3385
    %v3387 = vpop.f32.mrb[0].mxu0
    %v3388 = vpop.f32.mrb[0].mxu0
    %v3389 = vadd.f32 %v3301, %v3388
    %v3390 = vpop.f32.mrb[0].mxu0
    %3391 = vmatprep.mubr.bf16.mxu0 0
    %3392 = vmatmul.mubr.bf16.gmra.mrb[0].mxu0 %v3277
    %v3393 = vpop.f32.mrb[0].mxu0
    %v3394 = vadd.f32 %v3301, %v3393
    %v3395 = vpop.f32.mrb[0].mxu0
    %v3396 = vpop.f32.mrb[0].mxu0
    %v3397 = vadd.f32 %v3301, %v3396
    %v3398 = vpop.f32.mrb[0].mxu0
    %3399 = vmatprep.mubr.bf16.mxu0 0
    %3400 = vmatmul.mubr.bf16.gmra.mrb[0].mxu0 %v3278
    %v3401 = vpop.f32.mrb[0].mxu0
    %v3402 = vadd.f32 %v3301, %v3401
    %v3403 = vpop.f32.mrb[0].mxu0
    %v3404 = vpop.f32.mrb[0].mxu0
    %v3405 = vadd.f32 %v3301, %v3404
    %v3406 = vpop.f32.mrb[0].mxu0
    %3407 = vmatprep.mubr.bf16.mxu0 0
    %3408 = vmatmul.mubr.bf16.gmra.mrb[0].mxu0 %v3279
    %v3409 = vpop.f32.mrb[0].mxu0
    %v3410 = vadd.f32 %v3301, %v3409
    %v3411 = vpop.f32.mrb[0].mxu0
    %v3412 = vpop.f32.mrb[0].mxu0
    %v3413 = vadd.f32 %v3301, %v3412
    %v3414 = vpop.f32.mrb[0].mxu0
    %3415 = vdwg.mxu0
    %3416 = vst [vmem:[#allocation23] sm:$0xff] %v3386
    %3417 = vst [vmem:[#allocation23 + $0x8] sm:$0xff] %v3389
    %3418 = vst [vmem:[#allocation23 + $0x10] sm:$0xff] %v3394
    %3419 = vst [vmem:[#allocation23 + $0x18] sm:$0xff] %v3397
    %3420 = vst [vmem:[#allocation23 + $0x20] sm:$0xff] %v3402
    %3421 = vst [vmem:[#allocation23 + $0x28] sm:$0xff] %v3405
    %3422 = vst [vmem:[#allocation23 + $0x30] sm:$0xff] %v3410
    %3423 = vst [vmem:[#allocation23 + $0x38] sm:$0xff] %v3413
    // Predicated region
    $region90: #{tpu_custom_call.1} parent=1 // pred_check
      _
    $region91: #{tpu_custom_call.1} parent=1 // pred_check_branch
      %3425 = sbr.rel (0) target = $region93
    $region92: #{tpu_custom_call.1} parent=1 // pred_region
      %s3427 = ssub.s32 1024, 1024
      %3428 = vsyncadd [#allocation7], %s3427
      %s3429 = sshll.u32 [#allocation23], 4
      %s3430 = int_to_ptr.vmem [resolvable:$true] %s3429
      %3435 = dma.vmem_to_hbm [thread:$0]  %s3430, 1024, %s11, [#allocation7], 128, 128, 8
    $region93: #{tpu_custom_call.1} parent=1 // pred_fallthru
      _
    // Predicated region
    $region94: #{tpu_custom_call.1} parent=1 // pred_check
      _
    $region95: #{tpu_custom_call.1} parent=1 // pred_check_branch
      %3437 = sbr.rel (0) target = $region97
    $region96: #{tpu_custom_call.1} parent=1 // pred_region
      %s3439 = ssub.s32 256, 256
      %3440 = vsyncadd [#allocation25], %s3439
      %s3441 = sshll.u32 [#allocation24], 4
      %s3442 = int_to_ptr.vmem [resolvable:$true] %s3441
      %3447 = dma.vmem_to_hbm [thread:$0]  %s3442, 256, %s12, [#allocation25], 128, 128, 8
    $region97: #{tpu_custom_call.1} parent=1 // pred_fallthru
      _
    // Predicated region
    $region98: #{tpu_custom_call.1} parent=1 // pred_check
      _
    $region99: #{tpu_custom_call.1} parent=1 // pred_check_branch
      %3449 = sbr.rel (0) target = $region101
    $region100: #{tpu_custom_call.1} parent=1 // pred_region
      %s3451 = ssub.s32 256, 256
      %3452 = vsyncadd [#allocation25], %s3451
      %s3453 = sshll.u32 [#allocation26], 4
      %s3454 = int_to_ptr.vmem [resolvable:$true] %s3453
      %3459 = dma.vmem_to_hbm [thread:$0]  %s3454, 256, %s13, [#allocation25], 128, 128, 8
    $region101: #{tpu_custom_call.1} parent=1 // pred_fallthru
      _
    // Predicated region
    $region102: #{tpu_custom_call.1} parent=1 // pred_check
      _
    $region103: #{tpu_custom_call.1} parent=1 // pred_check_branch
      %3461 = sbr.rel (0) target = $region105
    $region104: #{tpu_custom_call.1} parent=1 // pred_region
      %3462 = dma.done [#allocation7], 1024
    $region105: #{tpu_custom_call.1} parent=1 // pred_fallthru
      _
    // Predicated region
    $region106: #{tpu_custom_call.1} parent=1 // pred_check
      _
    $region107: #{tpu_custom_call.1} parent=1 // pred_check_branch
      %3464 = sbr.rel (0) target = $region109
    $region108: #{tpu_custom_call.1} parent=1 // pred_region
      %3465 = dma.done [#allocation25], 256
    $region109: #{tpu_custom_call.1} parent=1 // pred_fallthru
      _
    // Predicated region
    $region110: #{tpu_custom_call.1} parent=1 // pred_check
      _
    $region111: #{tpu_custom_call.1} parent=1 // pred_check_branch
      %3467 = sbr.rel (0) target = $region113
    $region112: #{tpu_custom_call.1} parent=1 // pred_region
      %3468 = dma.done [#allocation25], 256
    $region113: #{tpu_custom_call.1} parent=1 // pred_fallthru
      _
    %3469 = vsyncpa [#allocation6], 1
    %3470 = vsyncpa [#allocation9], 1
    %3471 = vsyncpa [#allocation12], 1
    %3472 = vsyncpa [#allocation15], 1
    %3473 = vsyncpa [#allocation18], 1
    %3474 = vsyncpa [#allocation21], 1
    %3475 = vsyncpa [#allocation7], 1
    %3476 = vsyncpa [#allocation25], 1

</llo_original>
